<compile_context>
chip_gen: v5e
topology: v5e:2x2
jax: 0.10.0
libtpu: 0.0.40
codegen_flags: <defaults>
</compile_context>

<pallas_src>
import math

import jax
import jax.numpy as jnp
from jax.experimental import pallas as pl
from jax.experimental.pallas import tpu as pltpu

# ---- module hyper-parameters (scaled down from 768/6/8 for a small demo) ----
EMBED_DIM = 32
NUM_HEADS = 4
HEAD_DIM = EMBED_DIM // NUM_HEADS
MLP_RATIO = 4.0
FF_DIM = int(EMBED_DIM * MLP_RATIO)
DEPTH = 2
EPS = 1e-5                      # nn.LayerNorm default
VEC_ROWS, VEC_LANES = 8, 128    # lane-dense packed bias / LayerNorm table


def pack_params(params):
    """Pack per-layer PyTorch-layout params into 3 depth-stacked arrays.

    wm (depth, E, 12E): pre-transposed (in, out) matrices, columns:
        [0:3E)   self-attn W_qkv   (query columns pre-scaled by 1/sqrt(Dh))
        [3E:4E)  self-attn W_out
        [4E:5E)  cross-attn W_q    (pre-scaled)
        [5E:7E)  cross-attn W_kv
        [7E:8E)  cross-attn W_out
        [8E:12E) FFN W1
    w2 (depth, F, E): FFN second matrix, pre-transposed.
    vtab (depth, 8, 128): all bias / LayerNorm vectors, lane dense:
        row0: SA b_qkv (3E)      row1: [SA b_o | CA b_q | CA b_o | FFN b2]
        row2: CA b_kv (2E)       row3: FFN b1 (F)
        row4: [g1 | be1 | g2 | be2]   row5: [g3 | be3]   rows 6-7: zero pad
    (At production scale store these as bf16 to halve VMEM/HBM footprint.)
    """
    E, F, Dh = EMBED_DIM, FF_DIM, HEAD_DIM
    assert 3 * E <= VEC_LANES and F <= VEC_LANES
    scale = 1.0 / math.sqrt(Dh)

    def row(*segs):
        v = jnp.concatenate(segs)
        return jnp.pad(v, (0, VEC_LANES - v.shape[0]))

    wm_l, w2_l, vt_l = [], [], []
    for p in params:
        sa_w, sa_b = p["sa_in_w"], p["sa_in_b"]      # (3E, E), (3E,)
        ca_w, ca_b = p["ca_in_w"], p["ca_in_b"]
        wm = jnp.concatenate([
            (sa_w[0:E] * scale).T, sa_w[E:2 * E].T, sa_w[2 * E:3 * E].T,  # SA qkv
            p["sa_out_w"].T,                                              # SA out
            (ca_w[0:E] * scale).T,                                        # CA q
            ca_w[E:2 * E].T, ca_w[2 * E:3 * E].T,                         # CA kv
            p["ca_out_w"].T,                                              # CA out
            p["w1"].T,                                                    # FFN W1
        ], axis=1)                                   # (E, 12E)
        w2 = p["w2"].T                               # (F, E)
        vt = jnp.stack([
            row(sa_b[0:E] * scale, sa_b[E:2 * E], sa_b[2 * E:3 * E]),
            row(p["sa_out_b"], ca_b[0:E] * scale, p["ca_out_b"], p["b2"]),
            row(ca_b[E:2 * E], ca_b[2 * E:3 * E]),
            row(p["b1"]),
            row(p["g1"], p["be1"], p["g2"], p["be2"]),
            row(p["g3"], p["be3"]),
            jnp.zeros((VEC_LANES,), jnp.float32),
            jnp.zeros((VEC_LANES,), jnp.float32),
        ], axis=0)                                   # (8, 128)
        wm_l.append(wm); w2_l.append(w2); vt_l.append(vt)
    return jnp.stack(wm_l), jnp.stack(w2_l), jnp.stack(vt_l)


def _cost_estimate(B, S, M, E, F, H, depth):
    sa = 2 * S * (3 * E) * E + 2 * (2 * S * S * E) + 2 * S * E * E
    ca = 2 * S * E * E + 2 * M * (2 * E) * E + 2 * (2 * S * M * E) + 2 * S * E * E
    ffn = 2 * S * E * F + 2 * S * F * E
    flops = B * depth * (sa + ca + ffn)
    transc = B * depth * (H * S * S + H * S * M)
    # weights are grid-resident: counted once, not per batch block
    weight_bytes = depth * (E * 12 * E + F * E + VEC_ROWS * VEC_LANES) * 4
    act_bytes = (2 * B * S * E + B * M * E) * 4
    return pl.CostEstimate(flops=flops, transcendentals=transc,
                           bytes_accessed=act_bytes + weight_bytes)


def transformer_decoder(x, memory, packed, *, block_batch=None,
                        approx_softmax=True, vmem_limit_bytes=None):
    """Full DEPTH-layer decoder forward in a single pallas_call."""
    wm, w2, vtab = packed
    B, S, E = x.shape
    _, M, _ = memory.shape
    depth = wm.shape[0]
    F, H, D = FF_DIM, NUM_HEADS, HEAD_DIM

    # batch elements per grid step: aim for >=256 rows per matmul, must divide B
    if block_batch is None:
        target = max(1, 256 // S)
        bt = 1
        for c in range(1, B + 1):
            if B % c == 0 and c <= target:
                bt = c
    else:
        bt = block_batch
    assert B % bt == 0
    rq, rk = bt * S, bt * M                 # query / memory rows per grid step

    def kernel(x_ref, mem_ref, wm_ref, w2_ref, vt_ref, out_ref, carry_ref):
        d = pl.program_id(1)

        wmat = wm_ref[d]                    # (E, 12E) matrix slab for layer d
        wff2 = w2_ref[d]                    # (F, E)
        vtab_d = vt_ref[d]                  # (8, 128) packed vectors

        def vec(r, c, w):                   # (1, w) slice of the vector table
            return vtab_d[r:r + 1, c:c + w]

        # layer input: HBM block at d == 0, VMEM carry afterwards (pure select:
        # no store->reload round trip on the first layer of each batch block).
        x_in = x_ref[...].astype(jnp.float32)            # (rq, E)
        xa = jnp.where(d == 0, x_in, carry_ref[...])
        mem = mem_ref[...].astype(jnp.float32)           # (rk, E)

        def layer_norm(y, g, b):
            mu = jnp.mean(y, axis=-1, keepdims=True)
            var = jnp.mean((y - mu) ** 2, axis=-1, keepdims=True)
            return (y - mu) * jax.lax.rsqrt(var + EPS) * g + b

        def attention(q_src, q_off, kv_src, k_off, v_off, wo, bo, s_q, s_kv):
            """MHA on already-projected rows (query pre-scaled by 1/sqrt(Dh)).
            Score tiles for every (batch, head) are stacked along sublanes for
            one wide softmax; the output projection is accumulated per head."""
            tiles = []
            for b in range(bt):
                r0q, r0k = b * s_q, b * s_kv
                for h in range(H):
                    qh = q_src[r0q:r0q + s_q, q_off + h * D:q_off + (h + 1) * D]
                    kh = kv_src[r0k:r0k + s_kv, k_off + h * D:k_off + (h + 1) * D]
                    tiles.append(jax.lax.dot_general(
                        qh, kh, (((1,), (1,)), ((), ())),
                        preferred_element_type=jnp.float32))
            s = jnp.concatenate(tiles, axis=0)           # (bt*H*s_q, s_kv)
            s = s - jnp.max(s, axis=-1, keepdims=True)
            p = jnp.exp(s)
            denom = jnp.sum(p, axis=-1, keepdims=True)
            if approx_softmax:
                p = p * pl.reciprocal(denom, approx=True)
            else:
                p = p / denom
            outs = []
            for b in range(bt):
                r0k = b * s_kv
                acc = jnp.zeros((s_q, E), jnp.float32)
                for h in range(H):
                    ph = p[(b * H + h) * s_q:(b * H + h + 1) * s_q]
                    vh = kv_src[r0k:r0k + s_kv, v_off + h * D:v_off + (h + 1) * D]
                    pv = jnp.dot(ph, vh, preferred_element_type=jnp.float32)
                    acc = acc + jnp.dot(pv, wo[h * D:(h + 1) * D, :],
                                        preferred_element_type=jnp.float32)
                outs.append(acc)
            return jnp.concatenate(outs, axis=0) + bo

        # --- self-attention (fused QKV projection) + residual + norm1 ---
        qkv = jnp.dot(xa, wmat[:, 0:3 * E],
                      preferred_element_type=jnp.float32) + vec(0, 0, 3 * E)
        sa = attention(qkv, 0, qkv, E, 2 * E,
                       wmat[:, 3 * E:4 * E], vec(1, 0, E), S, S)
        xa = layer_norm(xa + sa, vec(4, 0, E), vec(4, E, E))

        # --- cross-attention (fused KV projection of memory) + norm2 ---
        q_ca = jnp.dot(xa, wmat[:, 4 * E:5 * E],
                       preferred_element_type=jnp.float32) + vec(1, E, E)
        kv_ca = jnp.dot(mem, wmat[:, 5 * E:7 * E],
                        preferred_element_type=jnp.float32) + vec(2, 0, 2 * E)
        ca = attention(q_ca, 0, kv_ca, 0, E,
                       wmat[:, 7 * E:8 * E], vec(1, 2 * E, E), S, M)
        xa = layer_norm(xa + ca, vec(4, 2 * E, E), vec(4, 3 * E, E))

        # --- feed-forward (linear -> ReLU -> linear) + residual + norm3 ---
        h1 = jnp.dot(xa, wmat[:, 8 * E:12 * E],
                     preferred_element_type=jnp.float32) + vec(3, 0, F)
        h1 = jnp.maximum(h1, 0.0)
        ff = jnp.dot(h1, wff2, preferred_element_type=jnp.float32) + vec(1, 3 * E, E)
        xa = layer_norm(xa + ff, vec(5, 0, E), vec(5, E, E))

        carry_ref[...] = xa                  # layer-to-layer carry

        @pl.when(d == pl.num_programs(1) - 1)
        def _():
            out_ref[...] = xa.astype(out_ref.dtype)

    grid_spec = pltpu.PrefetchScalarGridSpec(
        num_scalar_prefetch=0,
        grid=(B // bt, depth),
        in_specs=[
            pl.BlockSpec((rq, E), lambda i, d: (i, 0)),               # x rows
            pl.BlockSpec((rk, E), lambda i, d: (i, 0)),               # memory rows
            # weights: full-depth blocks, constant index -> DMA'd once, resident
            pl.BlockSpec((depth, E, 12 * E), lambda i, d: (0, 0, 0)),
            pl.BlockSpec((depth, F, E), lambda i, d: (0, 0, 0)),
            pl.BlockSpec((depth, VEC_ROWS, VEC_LANES), lambda i, d: (0, 0, 0)),
        ],
        out_specs=pl.BlockSpec((rq, E), lambda i, d: (i, 0)),
        scratch_shapes=[pltpu.VMEM((rq, E), jnp.float32)],
    )

    compiler_kwargs = dict(dimension_semantics=("parallel", "arbitrary"))
    # NOTE: at production scale raise vmem_limit_bytes; on v7x consider
    # pltpu.CORE_PARALLEL for the batch axis if one TensorCore sits idle.
    if vmem_limit_bytes is not None:
        compiler_kwargs["vmem_limit_bytes"] = vmem_limit_bytes

    out_flat = pl.pallas_call(
        kernel,
        out_shape=jax.ShapeDtypeStruct((B * S, E), x.dtype),
        grid_spec=grid_spec,
        compiler_params=pltpu.CompilerParams(**compiler_kwargs),
        cost_estimate=_cost_estimate(B, S, M, E, F, NUM_HEADS, depth),
    )(x.reshape(B * S, E), memory.reshape(B * M, E), wm, w2, vtab)
    return out_flat.reshape(B, S, E)


def reference_decoder(x, memory, params):
    """Pure-JAX forward identical to PyTorch nn.TransformerDecoder (eval mode)."""
    E, H, Dh = EMBED_DIM, NUM_HEADS, HEAD_DIM
    scale = 1.0 / math.sqrt(Dh)
    PH = jax.lax.Precision.HIGHEST

    def ln(y, g, b):
        mu = jnp.mean(y, axis=-1, keepdims=True)
        var = jnp.mean((y - mu) ** 2, axis=-1, keepdims=True)
        return (y - mu) * jax.lax.rsqrt(var + EPS) * g + b

    def mha(q_in, kv_in, w_in, b_in, w_out, b_out):
        q = jnp.dot(q_in, w_in[0:E].T, precision=PH) + b_in[0:E]
        k = jnp.dot(kv_in, w_in[E:2 * E].T, precision=PH) + b_in[E:2 * E]
        v = jnp.dot(kv_in, w_in[2 * E:3 * E].T, precision=PH) + b_in[2 * E:3 * E]
        Bq, Sq, _ = q.shape
        Skv = k.shape[1]
        q = q.reshape(Bq, Sq, H, Dh).transpose(0, 2, 1, 3)
        k = k.reshape(Bq, Skv, H, Dh).transpose(0, 2, 1, 3)
        v = v.reshape(Bq, Skv, H, Dh).transpose(0, 2, 1, 3)
        s = jnp.einsum("bhqd,bhkd->bhqk", q, k, precision=PH) * scale
        p = jax.nn.softmax(s, axis=-1)
        o = jnp.einsum("bhqk,bhkd->bhqd", p, v, precision=PH)
        o = o.transpose(0, 2, 1, 3).reshape(Bq, Sq, E)
        return jnp.dot(o, w_out.T, precision=PH) + b_out

    for p in params:
        x = ln(x + mha(x, x, p["sa_in_w"], p["sa_in_b"],
                       p["sa_out_w"], p["sa_out_b"]), p["g1"], p["be1"])
        x = ln(x + mha(x, memory, p["ca_in_w"], p["ca_in_b"],
                       p["ca_out_w"], p["ca_out_b"]), p["g2"], p["be2"])
        h = jnp.maximum(jnp.dot(x, p["w1"].T, precision=PH) + p["b1"], 0.0)
        ff = jnp.dot(h, p["w2"].T, precision=PH) + p["b2"]
        x = ln(x + ff, p["g3"], p["be3"])
    return x


def init_params(key, depth=DEPTH):
    """Per-layer params in PyTorch nn.TransformerDecoderLayer layout."""
    E, F = EMBED_DIM, FF_DIM
    params = []
    for _ in range(depth):
        key, *ks = jax.random.split(key, 11)

        def rnd(k, shape, scale=0.05):
            return (scale * jax.random.normal(k, shape)).astype(jnp.float32)

        params.append({
            "sa_in_w":  rnd(ks[0], (3 * E, E)),
            "sa_in_b":  rnd(ks[1], (3 * E,), 0.01),
            "sa_out_w": rnd(ks[2], (E, E)),
            "sa_out_b": jnp.zeros((E,), jnp.float32),
            "ca_in_w":  rnd(ks[3], (3 * E, E)),
            "ca_in_b":  rnd(ks[4], (3 * E,), 0.01),
            "ca_out_w": rnd(ks[5], (E, E)),
            "ca_out_b": jnp.zeros((E,), jnp.float32),
            "w1":       rnd(ks[6], (F, E)),
            "b1":       rnd(ks[7], (F,), 0.01),
            "w2":       rnd(ks[8], (E, F)),
            "b2":       rnd(ks[9], (E,), 0.01),
            "g1":  jnp.ones((E,), jnp.float32),
            "be1": jnp.zeros((E,), jnp.float32),
            "g2":  jnp.ones((E,), jnp.float32),
            "be2": jnp.zeros((E,), jnp.float32),
            "g3":  jnp.ones((E,), jnp.float32),
            "be3": jnp.zeros((E,), jnp.float32),
        })
    return params


if __name__ == "__main__":
    B, S, M = 2, 8, 16  # batch, target seq len, memory seq len
    key = jax.random.PRNGKey(0)
    k_x, k_m, k_p = jax.random.split(key, 3)

    x = jax.random.normal(k_x, (B, S, EMBED_DIM), jnp.float32)
    memory = jax.random.normal(k_m, (B, M, EMBED_DIM), jnp.float32)
    params = init_params(k_p)
    packed = pack_params(params)

    # exact-softmax run, validated against the pure-JAX reference
    out_exact = transformer_decoder(x, memory, packed, approx_softmax=False)
    ref = reference_decoder(x, memory, params)
    jax.block_until_ready(out_exact)
    jax.block_until_ready(ref)
    assert out_exact.shape == (B, S, EMBED_DIM)
    err = float(jnp.max(jnp.abs(out_exact - ref)))
    assert err < 1e-2, f"kernel/reference mismatch: max abs err = {err}"

    # fast path: approximate-reciprocal softmax normalization (EUP slot)
    out = transformer_decoder(x, memory, packed)
    jax.block_until_ready(out)
    assert out.shape == (B, S, EMBED_DIM)
    assert bool(jnp.all(jnp.isfinite(out)))
    print("KERNEL_OK")
</pallas_src>

<mosaic_0001>
module attributes {stable_mosaic.version = 11 : i64} {
  func.func @kernel(%arg0: i32, %arg1: i32, %arg2: memref<16x32xf32, #tpu.memory_space<vmem>>, %arg3: memref<32x32xf32, #tpu.memory_space<vmem>>, %arg4: memref<2x32x384xf32, #tpu.memory_space<vmem>>, %arg5: memref<2x128x32xf32, #tpu.memory_space<vmem>>, %arg6: memref<2x8x128xf32, #tpu.memory_space<vmem>>, %arg7: memref<16x32xf32, #tpu.memory_space<vmem>>, %arg8: memref<16x32xf32, #tpu.memory_space<vmem>>) attributes {dimension_semantics = [#tpu.dimension_semantics<parallel>, #tpu.dimension_semantics<arbitrary>], iteration_bounds = array<i64: 1, 2>, scalar_prefetch = 0 : i64, scratch_operands = 1 : i64, tpu.core_type = #tpu.core_type<tc>, window_params = [{transform_indices = @transform_0, window_bounds = array<i64: 16, 32>}, {transform_indices = @transform_1, window_bounds = array<i64: 32, 32>}, {pipeline_mode = #tpu.pipeline_mode<synchronous>, transform_indices = @transform_2, window_bounds = array<i64: 2, 32, 384>}, {pipeline_mode = #tpu.pipeline_mode<synchronous>, transform_indices = @transform_3, window_bounds = array<i64: 2, 128, 32>}, {pipeline_mode = #tpu.pipeline_mode<synchronous>, transform_indices = @transform_4, window_bounds = array<i64: 2, 8, 128>}, {transform_indices = @transform_5, window_bounds = array<i64: 16, 32>}]} {
    %0 = arith.index_cast %arg1 : i32 to index
    %c0 = arith.constant 0 : index
    %c0_0 = arith.constant 0 : index
    %1 = vector.load %arg4[%0, %c0, %c0_0] : memref<2x32x384xf32, #tpu.memory_space<vmem>>, vector<1x32x384xf32>
    %2 = vector.shape_cast %1 : vector<1x32x384xf32> to vector<32x384xf32>
    %3 = arith.index_cast %arg1 : i32 to index
    %c0_1 = arith.constant 0 : index
    %c0_2 = arith.constant 0 : index
    %4 = vector.load %arg5[%3, %c0_1, %c0_2] : memref<2x128x32xf32, #tpu.memory_space<vmem>>, vector<1x128x32xf32>
    %5 = vector.shape_cast %4 : vector<1x128x32xf32> to vector<128x32xf32>
    %6 = arith.index_cast %arg1 : i32 to index
    %c0_3 = arith.constant 0 : index
    %c0_4 = arith.constant 0 : index
    %7 = vector.load %arg6[%6, %c0_3, %c0_4] : memref<2x8x128xf32, #tpu.memory_space<vmem>>, vector<1x8x128xf32>
    %8 = vector.shape_cast %7 : vector<1x8x128xf32> to vector<8x128xf32>
    %c0_5 = arith.constant 0 : index
    %c0_6 = arith.constant 0 : index
    %9 = vector.load %arg2[%c0_5, %c0_6] : memref<16x32xf32, #tpu.memory_space<vmem>>, vector<16x32xf32>
    %c0_i32 = arith.constant 0 : i32
    %10 = arith.cmpi eq, %arg1, %c0_i32 : i32
    %c0_7 = arith.constant 0 : index
    %c0_8 = arith.constant 0 : index
    %11 = vector.load %arg8[%c0_7, %c0_8] : memref<16x32xf32, #tpu.memory_space<vmem>>, vector<16x32xf32>
    %12 = arith.select %10, %9, %11 : vector<16x32xf32>
    %c0_9 = arith.constant 0 : index
    %c0_10 = arith.constant 0 : index
    %13 = vector.load %arg3[%c0_9, %c0_10] : memref<32x32xf32, #tpu.memory_space<vmem>>, vector<32x32xf32>
    %14 = vector.extract_strided_slice %2 {offsets = [0, 0], sizes = [32, 96], strides = [1, 1]} : vector<32x384xf32> to vector<32x96xf32>
    %cst = arith.constant dense<0.000000e+00> : vector<16x96xf32>
    %15 = tpu.matmul %12, %14, %cst {dimension_numbers = #tpu.dot_dimension_numbers<[1], [0], [0], [1], [0, 0, 1, 1], [], []>} : vector<16x32xf32>, vector<32x96xf32>, vector<16x96xf32> -> vector<16x96xf32>
    %16 = vector.extract_strided_slice %8 {offsets = [0, 0], sizes = [1, 96], strides = [1, 1]} : vector<8x128xf32> to vector<1x96xf32>
    %17 = vector.broadcast %16 : vector<1x96xf32> to vector<16x96xf32>
    %18 = arith.addf %15, %17 : vector<16x96xf32>
    %19 = vector.extract_strided_slice %2 {offsets = [0, 96], sizes = [32, 32], strides = [1, 1]} : vector<32x384xf32> to vector<32x32xf32>
    %20 = vector.extract_strided_slice %8 {offsets = [1, 0], sizes = [1, 32], strides = [1, 1]} : vector<8x128xf32> to vector<1x32xf32>
    %21 = vector.extract_strided_slice %18 {offsets = [0, 0], sizes = [8, 8], strides = [1, 1]} : vector<16x96xf32> to vector<8x8xf32>
    %22 = vector.extract_strided_slice %18 {offsets = [0, 32], sizes = [8, 8], strides = [1, 1]} : vector<16x96xf32> to vector<8x8xf32>
    %cst_11 = arith.constant dense<0.000000e+00> : vector<8x8xf32>
    %23 = tpu.matmul %21, %22, %cst_11 {dimension_numbers = #tpu.dot_dimension_numbers<[1], [1], [0], [0], [0, 0, 1, 0], [], []>} : vector<8x8xf32>, vector<8x8xf32>, vector<8x8xf32> -> vector<8x8xf32>
    %24 = vector.extract_strided_slice %18 {offsets = [0, 8], sizes = [8, 8], strides = [1, 1]} : vector<16x96xf32> to vector<8x8xf32>
    %25 = vector.extract_strided_slice %18 {offsets = [0, 40], sizes = [8, 8], strides = [1, 1]} : vector<16x96xf32> to vector<8x8xf32>
    %cst_12 = arith.constant dense<0.000000e+00> : vector<8x8xf32>
    %26 = tpu.matmul %24, %25, %cst_12 {dimension_numbers = #tpu.dot_dimension_numbers<[1], [1], [0], [0], [0, 0, 1, 0], [], []>} : vector<8x8xf32>, vector<8x8xf32>, vector<8x8xf32> -> vector<8x8xf32>
    %27 = vector.extract_strided_slice %18 {offsets = [0, 16], sizes = [8, 8], strides = [1, 1]} : vector<16x96xf32> to vector<8x8xf32>
    %28 = vector.extract_strided_slice %18 {offsets = [0, 48], sizes = [8, 8], strides = [1, 1]} : vector<16x96xf32> to vector<8x8xf32>
    %cst_13 = arith.constant dense<0.000000e+00> : vector<8x8xf32>
    %29 = tpu.matmul %27, %28, %cst_13 {dimension_numbers = #tpu.dot_dimension_numbers<[1], [1], [0], [0], [0, 0, 1, 0], [], []>} : vector<8x8xf32>, vector<8x8xf32>, vector<8x8xf32> -> vector<8x8xf32>
    %30 = vector.extract_strided_slice %18 {offsets = [0, 24], sizes = [8, 8], strides = [1, 1]} : vector<16x96xf32> to vector<8x8xf32>
    %31 = vector.extract_strided_slice %18 {offsets = [0, 56], sizes = [8, 8], strides = [1, 1]} : vector<16x96xf32> to vector<8x8xf32>
    %cst_14 = arith.constant dense<0.000000e+00> : vector<8x8xf32>
    %32 = tpu.matmul %30, %31, %cst_14 {dimension_numbers = #tpu.dot_dimension_numbers<[1], [1], [0], [0], [0, 0, 1, 0], [], []>} : vector<8x8xf32>, vector<8x8xf32>, vector<8x8xf32> -> vector<8x8xf32>
    %33 = vector.extract_strided_slice %18 {offsets = [8, 0], sizes = [8, 8], strides = [1, 1]} : vector<16x96xf32> to vector<8x8xf32>
    %34 = vector.extract_strided_slice %18 {offsets = [8, 32], sizes = [8, 8], strides = [1, 1]} : vector<16x96xf32> to vector<8x8xf32>
    %cst_15 = arith.constant dense<0.000000e+00> : vector<8x8xf32>
    %35 = tpu.matmul %33, %34, %cst_15 {dimension_numbers = #tpu.dot_dimension_numbers<[1], [1], [0], [0], [0, 0, 1, 0], [], []>} : vector<8x8xf32>, vector<8x8xf32>, vector<8x8xf32> -> vector<8x8xf32>
    %36 = vector.extract_strided_slice %18 {offsets = [8, 8], sizes = [8, 8], strides = [1, 1]} : vector<16x96xf32> to vector<8x8xf32>
    %37 = vector.extract_strided_slice %18 {offsets = [8, 40], sizes = [8, 8], strides = [1, 1]} : vector<16x96xf32> to vector<8x8xf32>
    %cst_16 = arith.constant dense<0.000000e+00> : vector<8x8xf32>
    %38 = tpu.matmul %36, %37, %cst_16 {dimension_numbers = #tpu.dot_dimension_numbers<[1], [1], [0], [0], [0, 0, 1, 0], [], []>} : vector<8x8xf32>, vector<8x8xf32>, vector<8x8xf32> -> vector<8x8xf32>
    %39 = vector.extract_strided_slice %18 {offsets = [8, 16], sizes = [8, 8], strides = [1, 1]} : vector<16x96xf32> to vector<8x8xf32>
    %40 = vector.extract_strided_slice %18 {offsets = [8, 48], sizes = [8, 8], strides = [1, 1]} : vector<16x96xf32> to vector<8x8xf32>
    %cst_17 = arith.constant dense<0.000000e+00> : vector<8x8xf32>
    %41 = tpu.matmul %39, %40, %cst_17 {dimension_numbers = #tpu.dot_dimension_numbers<[1], [1], [0], [0], [0, 0, 1, 0], [], []>} : vector<8x8xf32>, vector<8x8xf32>, vector<8x8xf32> -> vector<8x8xf32>
    %42 = vector.extract_strided_slice %18 {offsets = [8, 24], sizes = [8, 8], strides = [1, 1]} : vector<16x96xf32> to vector<8x8xf32>
    %43 = vector.extract_strided_slice %18 {offsets = [8, 56], sizes = [8, 8], strides = [1, 1]} : vector<16x96xf32> to vector<8x8xf32>
    %cst_18 = arith.constant dense<0.000000e+00> : vector<8x8xf32>
    %44 = tpu.matmul %42, %43, %cst_18 {dimension_numbers = #tpu.dot_dimension_numbers<[1], [1], [0], [0], [0, 0, 1, 0], [], []>} : vector<8x8xf32>, vector<8x8xf32>, vector<8x8xf32> -> vector<8x8xf32>
    %45 = tpu.concatenate %23, %26, %29, %32, %35, %38, %41, %44 in 0 : vector<8x8xf32>, vector<8x8xf32>, vector<8x8xf32>, vector<8x8xf32>, vector<8x8xf32>, vector<8x8xf32>, vector<8x8xf32>, vector<8x8xf32> -> vector<64x8xf32>
    %cst_19 = arith.constant dense<0xFF800000> : vector<64xf32>
    %46 = vector.multi_reduction <maximumf>, %45, %cst_19 [1] : vector<64x8xf32> to vector<64xf32>
    %47 = vector.shape_cast %46 : vector<64xf32> to vector<64x1xf32>
    %48 = vector.broadcast %47 : vector<64x1xf32> to vector<64x8xf32>
    %49 = arith.subf %45, %48 : vector<64x8xf32>
    %50 = math.exp %49 : vector<64x8xf32>
    %cst_20 = arith.constant dense<0.000000e+00> : vector<64xf32>
    %51 = vector.multi_reduction <add>, %50, %cst_20 [1] : vector<64x8xf32> to vector<64xf32>
    %52 = vector.shape_cast %51 : vector<64xf32> to vector<64x1xf32>
    %53 = vector.broadcast %52 : vector<64x1xf32> to vector<64x8xf32>
    %54 = arith.divf %50, %53 : vector<64x8xf32>
    %cst_21 = arith.constant 0.000000e+00 : f32
    %55 = vector.broadcast %cst_21 : f32 to vector<8x32xf32>
    %56 = vector.extract_strided_slice %54 {offsets = [0, 0], sizes = [8, 8], strides = [1, 1]} : vector<64x8xf32> to vector<8x8xf32>
    %57 = vector.extract_strided_slice %18 {offsets = [0, 64], sizes = [8, 8], strides = [1, 1]} : vector<16x96xf32> to vector<8x8xf32>
    %cst_22 = arith.constant dense<0.000000e+00> : vector<8x8xf32>
    %58 = tpu.matmul %56, %57, %cst_22 {dimension_numbers = #tpu.dot_dimension_numbers<[1], [0], [0], [1], [0, 0, 1, 1], [], []>} : vector<8x8xf32>, vector<8x8xf32>, vector<8x8xf32> -> vector<8x8xf32>
    %59 = vector.extract_strided_slice %19 {offsets = [0, 0], sizes = [8, 32], strides = [1, 1]} : vector<32x32xf32> to vector<8x32xf32>
    %cst_23 = arith.constant dense<0.000000e+00> : vector<8x32xf32>
    %60 = tpu.matmul %58, %59, %cst_23 {dimension_numbers = #tpu.dot_dimension_numbers<[1], [0], [0], [1], [0, 0, 1, 1], [], []>} : vector<8x8xf32>, vector<8x32xf32>, vector<8x32xf32> -> vector<8x32xf32>
    %61 = arith.addf %55, %60 : vector<8x32xf32>
    %62 = vector.extract_strided_slice %54 {offsets = [8, 0], sizes = [8, 8], strides = [1, 1]} : vector<64x8xf32> to vector<8x8xf32>
    %63 = vector.extract_strided_slice %18 {offsets = [0, 72], sizes = [8, 8], strides = [1, 1]} : vector<16x96xf32> to vector<8x8xf32>
    %cst_24 = arith.constant dense<0.000000e+00> : vector<8x8xf32>
    %64 = tpu.matmul %62, %63, %cst_24 {dimension_numbers = #tpu.dot_dimension_numbers<[1], [0], [0], [1], [0, 0, 1, 1], [], []>} : vector<8x8xf32>, vector<8x8xf32>, vector<8x8xf32> -> vector<8x8xf32>
    %65 = vector.extract_strided_slice %19 {offsets = [8, 0], sizes = [8, 32], strides = [1, 1]} : vector<32x32xf32> to vector<8x32xf32>
    %cst_25 = arith.constant dense<0.000000e+00> : vector<8x32xf32>
    %66 = tpu.matmul %64, %65, %cst_25 {dimension_numbers = #tpu.dot_dimension_numbers<[1], [0], [0], [1], [0, 0, 1, 1], [], []>} : vector<8x8xf32>, vector<8x32xf32>, vector<8x32xf32> -> vector<8x32xf32>
    %67 = arith.addf %61, %66 : vector<8x32xf32>
    %68 = vector.extract_strided_slice %54 {offsets = [16, 0], sizes = [8, 8], strides = [1, 1]} : vector<64x8xf32> to vector<8x8xf32>
    %69 = vector.extract_strided_slice %18 {offsets = [0, 80], sizes = [8, 8], strides = [1, 1]} : vector<16x96xf32> to vector<8x8xf32>
    %cst_26 = arith.constant dense<0.000000e+00> : vector<8x8xf32>
    %70 = tpu.matmul %68, %69, %cst_26 {dimension_numbers = #tpu.dot_dimension_numbers<[1], [0], [0], [1], [0, 0, 1, 1], [], []>} : vector<8x8xf32>, vector<8x8xf32>, vector<8x8xf32> -> vector<8x8xf32>
    %71 = vector.extract_strided_slice %19 {offsets = [16, 0], sizes = [8, 32], strides = [1, 1]} : vector<32x32xf32> to vector<8x32xf32>
    %cst_27 = arith.constant dense<0.000000e+00> : vector<8x32xf32>
    %72 = tpu.matmul %70, %71, %cst_27 {dimension_numbers = #tpu.dot_dimension_numbers<[1], [0], [0], [1], [0, 0, 1, 1], [], []>} : vector<8x8xf32>, vector<8x32xf32>, vector<8x32xf32> -> vector<8x32xf32>
    %73 = arith.addf %67, %72 : vector<8x32xf32>
    %74 = vector.extract_strided_slice %54 {offsets = [24, 0], sizes = [8, 8], strides = [1, 1]} : vector<64x8xf32> to vector<8x8xf32>
    %75 = vector.extract_strided_slice %18 {offsets = [0, 88], sizes = [8, 8], strides = [1, 1]} : vector<16x96xf32> to vector<8x8xf32>
    %cst_28 = arith.constant dense<0.000000e+00> : vector<8x8xf32>
    %76 = tpu.matmul %74, %75, %cst_28 {dimension_numbers = #tpu.dot_dimension_numbers<[1], [0], [0], [1], [0, 0, 1, 1], [], []>} : vector<8x8xf32>, vector<8x8xf32>, vector<8x8xf32> -> vector<8x8xf32>
    %77 = vector.extract_strided_slice %19 {offsets = [24, 0], sizes = [8, 32], strides = [1, 1]} : vector<32x32xf32> to vector<8x32xf32>
    %cst_29 = arith.constant dense<0.000000e+00> : vector<8x32xf32>
    %78 = tpu.matmul %76, %77, %cst_29 {dimension_numbers = #tpu.dot_dimension_numbers<[1], [0], [0], [1], [0, 0, 1, 1], [], []>} : vector<8x8xf32>, vector<8x32xf32>, vector<8x32xf32> -> vector<8x32xf32>
    %79 = arith.addf %73, %78 : vector<8x32xf32>
    %cst_30 = arith.constant 0.000000e+00 : f32
    %80 = vector.broadcast %cst_30 : f32 to vector<8x32xf32>
    %81 = vector.extract_strided_slice %54 {offsets = [32, 0], sizes = [8, 8], strides = [1, 1]} : vector<64x8xf32> to vector<8x8xf32>
    %82 = vector.extract_strided_slice %18 {offsets = [8, 64], sizes = [8, 8], strides = [1, 1]} : vector<16x96xf32> to vector<8x8xf32>
    %cst_31 = arith.constant dense<0.000000e+00> : vector<8x8xf32>
    %83 = tpu.matmul %81, %82, %cst_31 {dimension_numbers = #tpu.dot_dimension_numbers<[1], [0], [0], [1], [0, 0, 1, 1], [], []>} : vector<8x8xf32>, vector<8x8xf32>, vector<8x8xf32> -> vector<8x8xf32>
    %84 = vector.extract_strided_slice %19 {offsets = [0, 0], sizes = [8, 32], strides = [1, 1]} : vector<32x32xf32> to vector<8x32xf32>
    %cst_32 = arith.constant dense<0.000000e+00> : vector<8x32xf32>
    %85 = tpu.matmul %83, %84, %cst_32 {dimension_numbers = #tpu.dot_dimension_numbers<[1], [0], [0], [1], [0, 0, 1, 1], [], []>} : vector<8x8xf32>, vector<8x32xf32>, vector<8x32xf32> -> vector<8x32xf32>
    %86 = arith.addf %80, %85 : vector<8x32xf32>
    %87 = vector.extract_strided_slice %54 {offsets = [40, 0], sizes = [8, 8], strides = [1, 1]} : vector<64x8xf32> to vector<8x8xf32>
    %88 = vector.extract_strided_slice %18 {offsets = [8, 72], sizes = [8, 8], strides = [1, 1]} : vector<16x96xf32> to vector<8x8xf32>
    %cst_33 = arith.constant dense<0.000000e+00> : vector<8x8xf32>
    %89 = tpu.matmul %87, %88, %cst_33 {dimension_numbers = #tpu.dot_dimension_numbers<[1], [0], [0], [1], [0, 0, 1, 1], [], []>} : vector<8x8xf32>, vector<8x8xf32>, vector<8x8xf32> -> vector<8x8xf32>
    %90 = vector.extract_strided_slice %19 {offsets = [8, 0], sizes = [8, 32], strides = [1, 1]} : vector<32x32xf32> to vector<8x32xf32>
    %cst_34 = arith.constant dense<0.000000e+00> : vector<8x32xf32>
    %91 = tpu.matmul %89, %90, %cst_34 {dimension_numbers = #tpu.dot_dimension_numbers<[1], [0], [0], [1], [0, 0, 1, 1], [], []>} : vector<8x8xf32>, vector<8x32xf32>, vector<8x32xf32> -> vector<8x32xf32>
    %92 = arith.addf %86, %91 : vector<8x32xf32>
    %93 = vector.extract_strided_slice %54 {offsets = [48, 0], sizes = [8, 8], strides = [1, 1]} : vector<64x8xf32> to vector<8x8xf32>
    %94 = vector.extract_strided_slice %18 {offsets = [8, 80], sizes = [8, 8], strides = [1, 1]} : vector<16x96xf32> to vector<8x8xf32>
    %cst_35 = arith.constant dense<0.000000e+00> : vector<8x8xf32>
    %95 = tpu.matmul %93, %94, %cst_35 {dimension_numbers = #tpu.dot_dimension_numbers<[1], [0], [0], [1], [0, 0, 1, 1], [], []>} : vector<8x8xf32>, vector<8x8xf32>, vector<8x8xf32> -> vector<8x8xf32>
    %96 = vector.extract_strided_slice %19 {offsets = [16, 0], sizes = [8, 32], strides = [1, 1]} : vector<32x32xf32> to vector<8x32xf32>
    %cst_36 = arith.constant dense<0.000000e+00> : vector<8x32xf32>
    %97 = tpu.matmul %95, %96, %cst_36 {dimension_numbers = #tpu.dot_dimension_numbers<[1], [0], [0], [1], [0, 0, 1, 1], [], []>} : vector<8x8xf32>, vector<8x32xf32>, vector<8x32xf32> -> vector<8x32xf32>
    %98 = arith.addf %92, %97 : vector<8x32xf32>
    %99 = vector.extract_strided_slice %54 {offsets = [56, 0], sizes = [8, 8], strides = [1, 1]} : vector<64x8xf32> to vector<8x8xf32>
    %100 = vector.extract_strided_slice %18 {offsets = [8, 88], sizes = [8, 8], strides = [1, 1]} : vector<16x96xf32> to vector<8x8xf32>
    %cst_37 = arith.constant dense<0.000000e+00> : vector<8x8xf32>
    %101 = tpu.matmul %99, %100, %cst_37 {dimension_numbers = #tpu.dot_dimension_numbers<[1], [0], [0], [1], [0, 0, 1, 1], [], []>} : vector<8x8xf32>, vector<8x8xf32>, vector<8x8xf32> -> vector<8x8xf32>
    %102 = vector.extract_strided_slice %19 {offsets = [24, 0], sizes = [8, 32], strides = [1, 1]} : vector<32x32xf32> to vector<8x32xf32>
    %cst_38 = arith.constant dense<0.000000e+00> : vector<8x32xf32>
    %103 = tpu.matmul %101, %102, %cst_38 {dimension_numbers = #tpu.dot_dimension_numbers<[1], [0], [0], [1], [0, 0, 1, 1], [], []>} : vector<8x8xf32>, vector<8x32xf32>, vector<8x32xf32> -> vector<8x32xf32>
    %104 = arith.addf %98, %103 : vector<8x32xf32>
    %105 = tpu.concatenate %79, %104 in 0 : vector<8x32xf32>, vector<8x32xf32> -> vector<16x32xf32>
    %106 = vector.broadcast %20 : vector<1x32xf32> to vector<16x32xf32>
    %107 = arith.addf %105, %106 : vector<16x32xf32>
    %108 = arith.addf %12, %107 : vector<16x32xf32>
    %109 = vector.extract_strided_slice %8 {offsets = [4, 0], sizes = [1, 32], strides = [1, 1]} : vector<8x128xf32> to vector<1x32xf32>
    %110 = vector.extract_strided_slice %8 {offsets = [4, 32], sizes = [1, 32], strides = [1, 1]} : vector<8x128xf32> to vector<1x32xf32>
    %cst_39 = arith.constant dense<0.000000e+00> : vector<16xf32>
    %111 = vector.multi_reduction <add>, %108, %cst_39 [1] : vector<16x32xf32> to vector<16xf32>
    %112 = vector.shape_cast %111 : vector<16xf32> to vector<16x1xf32>
    %cst_40 = arith.constant 3.200000e+01 : f32
    %113 = vector.broadcast %cst_40 : f32 to vector<16x1xf32>
    %114 = arith.divf %112, %113 : vector<16x1xf32>
    %115 = vector.broadcast %114 : vector<16x1xf32> to vector<16x32xf32>
    %116 = arith.subf %108, %115 : vector<16x32xf32>
    %117 = arith.mulf %116, %116 : vector<16x32xf32>
    %cst_41 = arith.constant dense<0.000000e+00> : vector<16xf32>
    %118 = vector.multi_reduction <add>, %117, %cst_41 [1] : vector<16x32xf32> to vector<16xf32>
    %119 = vector.shape_cast %118 : vector<16xf32> to vector<16x1xf32>
    %cst_42 = arith.constant 3.200000e+01 : f32
    %120 = vector.broadcast %cst_42 : f32 to vector<16x1xf32>
    %121 = arith.divf %119, %120 : vector<16x1xf32>
    %122 = vector.broadcast %114 : vector<16x1xf32> to vector<16x32xf32>
    %123 = arith.subf %108, %122 : vector<16x32xf32>
    %cst_43 = arith.constant 9.99999974E-6 : f32
    %124 = vector.broadcast %cst_43 : f32 to vector<16x1xf32>
    %125 = arith.addf %121, %124 : vector<16x1xf32>
    %126 = math.rsqrt %125 : vector<16x1xf32>
    %127 = vector.broadcast %126 : vector<16x1xf32> to vector<16x32xf32>
    %128 = arith.mulf %123, %127 : vector<16x32xf32>
    %129 = vector.broadcast %109 : vector<1x32xf32> to vector<16x32xf32>
    %130 = arith.mulf %128, %129 : vector<16x32xf32>
    %131 = vector.broadcast %110 : vector<1x32xf32> to vector<16x32xf32>
    %132 = arith.addf %130, %131 : vector<16x32xf32>
    %133 = vector.extract_strided_slice %2 {offsets = [0, 128], sizes = [32, 32], strides = [1, 1]} : vector<32x384xf32> to vector<32x32xf32>
    %cst_44 = arith.constant dense<0.000000e+00> : vector<16x32xf32>
    %134 = tpu.matmul %132, %133, %cst_44 {dimension_numbers = #tpu.dot_dimension_numbers<[1], [0], [0], [1], [0, 0, 1, 1], [], []>} : vector<16x32xf32>, vector<32x32xf32>, vector<16x32xf32> -> vector<16x32xf32>
    %135 = vector.extract_strided_slice %8 {offsets = [1, 32], sizes = [1, 32], strides = [1, 1]} : vector<8x128xf32> to vector<1x32xf32>
    %136 = vector.broadcast %135 : vector<1x32xf32> to vector<16x32xf32>
    %137 = arith.addf %134, %136 : vector<16x32xf32>
    %138 = vector.extract_strided_slice %2 {offsets = [0, 160], sizes = [32, 64], strides = [1, 1]} : vector<32x384xf32> to vector<32x64xf32>
    %cst_45 = arith.constant dense<0.000000e+00> : vector<32x64xf32>
    %139 = tpu.matmul %13, %138, %cst_45 {dimension_numbers = #tpu.dot_dimension_numbers<[1], [0], [0], [1], [0, 0, 1, 1], [], []>} : vector<32x32xf32>, vector<32x64xf32>, vector<32x64xf32> -> vector<32x64xf32>
    %140 = vector.extract_strided_slice %8 {offsets = [2, 0], sizes = [1, 64], strides = [1, 1]} : vector<8x128xf32> to vector<1x64xf32>
    %141 = vector.broadcast %140 : vector<1x64xf32> to vector<32x64xf32>
    %142 = arith.addf %139, %141 : vector<32x64xf32>
    %143 = vector.extract_strided_slice %2 {offsets = [0, 224], sizes = [32, 32], strides = [1, 1]} : vector<32x384xf32> to vector<32x32xf32>
    %144 = vector.extract_strided_slice %8 {offsets = [1, 64], sizes = [1, 32], strides = [1, 1]} : vector<8x128xf32> to vector<1x32xf32>
    %145 = vector.extract_strided_slice %137 {offsets = [0, 0], sizes = [8, 8], strides = [1, 1]} : vector<16x32xf32> to vector<8x8xf32>
    %146 = vector.extract_strided_slice %142 {offsets = [0, 0], sizes = [16, 8], strides = [1, 1]} : vector<32x64xf32> to vector<16x8xf32>
    %cst_46 = arith.constant dense<0.000000e+00> : vector<8x16xf32>
    %147 = tpu.matmul %145, %146, %cst_46 {dimension_numbers = #tpu.dot_dimension_numbers<[1], [1], [0], [0], [0, 0, 1, 0], [], []>} : vector<8x8xf32>, vector<16x8xf32>, vector<8x16xf32> -> vector<8x16xf32>
    %148 = vector.extract_strided_slice %137 {offsets = [0, 8], sizes = [8, 8], strides = [1, 1]} : vector<16x32xf32> to vector<8x8xf32>
    %149 = vector.extract_strided_slice %142 {offsets = [0, 8], sizes = [16, 8], strides = [1, 1]} : vector<32x64xf32> to vector<16x8xf32>
    %cst_47 = arith.constant dense<0.000000e+00> : vector<8x16xf32>
    %150 = tpu.matmul %148, %149, %cst_47 {dimension_numbers = #tpu.dot_dimension_numbers<[1], [1], [0], [0], [0, 0, 1, 0], [], []>} : vector<8x8xf32>, vector<16x8xf32>, vector<8x16xf32> -> vector<8x16xf32>
    %151 = vector.extract_strided_slice %137 {offsets = [0, 16], sizes = [8, 8], strides = [1, 1]} : vector<16x32xf32> to vector<8x8xf32>
    %152 = vector.extract_strided_slice %142 {offsets = [0, 16], sizes = [16, 8], strides = [1, 1]} : vector<32x64xf32> to vector<16x8xf32>
    %cst_48 = arith.constant dense<0.000000e+00> : vector<8x16xf32>
    %153 = tpu.matmul %151, %152, %cst_48 {dimension_numbers = #tpu.dot_dimension_numbers<[1], [1], [0], [0], [0, 0, 1, 0], [], []>} : vector<8x8xf32>, vector<16x8xf32>, vector<8x16xf32> -> vector<8x16xf32>
    %154 = vector.extract_strided_slice %137 {offsets = [0, 24], sizes = [8, 8], strides = [1, 1]} : vector<16x32xf32> to vector<8x8xf32>
    %155 = vector.extract_strided_slice %142 {offsets = [0, 24], sizes = [16, 8], strides = [1, 1]} : vector<32x64xf32> to vector<16x8xf32>
    %cst_49 = arith.constant dense<0.000000e+00> : vector<8x16xf32>
    %156 = tpu.matmul %154, %155, %cst_49 {dimension_numbers = #tpu.dot_dimension_numbers<[1], [1], [0], [0], [0, 0, 1, 0], [], []>} : vector<8x8xf32>, vector<16x8xf32>, vector<8x16xf32> -> vector<8x16xf32>
    %157 = vector.extract_strided_slice %137 {offsets = [8, 0], sizes = [8, 8], strides = [1, 1]} : vector<16x32xf32> to vector<8x8xf32>
    %158 = vector.extract_strided_slice %142 {offsets = [16, 0], sizes = [16, 8], strides = [1, 1]} : vector<32x64xf32> to vector<16x8xf32>
    %cst_50 = arith.constant dense<0.000000e+00> : vector<8x16xf32>
    %159 = tpu.matmul %157, %158, %cst_50 {dimension_numbers = #tpu.dot_dimension_numbers<[1], [1], [0], [0], [0, 0, 1, 0], [], []>} : vector<8x8xf32>, vector<16x8xf32>, vector<8x16xf32> -> vector<8x16xf32>
    %160 = vector.extract_strided_slice %137 {offsets = [8, 8], sizes = [8, 8], strides = [1, 1]} : vector<16x32xf32> to vector<8x8xf32>
    %161 = vector.extract_strided_slice %142 {offsets = [16, 8], sizes = [16, 8], strides = [1, 1]} : vector<32x64xf32> to vector<16x8xf32>
    %cst_51 = arith.constant dense<0.000000e+00> : vector<8x16xf32>
    %162 = tpu.matmul %160, %161, %cst_51 {dimension_numbers = #tpu.dot_dimension_numbers<[1], [1], [0], [0], [0, 0, 1, 0], [], []>} : vector<8x8xf32>, vector<16x8xf32>, vector<8x16xf32> -> vector<8x16xf32>
    %163 = vector.extract_strided_slice %137 {offsets = [8, 16], sizes = [8, 8], strides = [1, 1]} : vector<16x32xf32> to vector<8x8xf32>
    %164 = vector.extract_strided_slice %142 {offsets = [16, 16], sizes = [16, 8], strides = [1, 1]} : vector<32x64xf32> to vector<16x8xf32>
    %cst_52 = arith.constant dense<0.000000e+00> : vector<8x16xf32>
    %165 = tpu.matmul %163, %164, %cst_52 {dimension_numbers = #tpu.dot_dimension_numbers<[1], [1], [0], [0], [0, 0, 1, 0], [], []>} : vector<8x8xf32>, vector<16x8xf32>, vector<8x16xf32> -> vector<8x16xf32>
    %166 = vector.extract_strided_slice %137 {offsets = [8, 24], sizes = [8, 8], strides = [1, 1]} : vector<16x32xf32> to vector<8x8xf32>
    %167 = vector.extract_strided_slice %142 {offsets = [16, 24], sizes = [16, 8], strides = [1, 1]} : vector<32x64xf32> to vector<16x8xf32>
    %cst_53 = arith.constant dense<0.000000e+00> : vector<8x16xf32>
    %168 = tpu.matmul %166, %167, %cst_53 {dimension_numbers = #tpu.dot_dimension_numbers<[1], [1], [0], [0], [0, 0, 1, 0], [], []>} : vector<8x8xf32>, vector<16x8xf32>, vector<8x16xf32> -> vector<8x16xf32>
    %169 = tpu.concatenate %147, %150, %153, %156, %159, %162, %165, %168 in 0 : vector<8x16xf32>, vector<8x16xf32>, vector<8x16xf32>, vector<8x16xf32>, vector<8x16xf32>, vector<8x16xf32>, vector<8x16xf32>, vector<8x16xf32> -> vector<64x16xf32>
    %cst_54 = arith.constant dense<0xFF800000> : vector<64xf32>
    %170 = vector.multi_reduction <maximumf>, %169, %cst_54 [1] : vector<64x16xf32> to vector<64xf32>
    %171 = vector.shape_cast %170 : vector<64xf32> to vector<64x1xf32>
    %172 = vector.broadcast %171 : vector<64x1xf32> to vector<64x16xf32>
    %173 = arith.subf %169, %172 : vector<64x16xf32>
    %174 = math.exp %173 : vector<64x16xf32>
    %cst_55 = arith.constant dense<0.000000e+00> : vector<64xf32>
    %175 = vector.multi_reduction <add>, %174, %cst_55 [1] : vector<64x16xf32> to vector<64xf32>
    %176 = vector.shape_cast %175 : vector<64xf32> to vector<64x1xf32>
    %177 = vector.broadcast %176 : vector<64x1xf32> to vector<64x16xf32>
    %178 = arith.divf %174, %177 : vector<64x16xf32>
    %cst_56 = arith.constant 0.000000e+00 : f32
    %179 = vector.broadcast %cst_56 : f32 to vector<8x32xf32>
    %180 = vector.extract_strided_slice %178 {offsets = [0, 0], sizes = [8, 16], strides = [1, 1]} : vector<64x16xf32> to vector<8x16xf32>
    %181 = vector.extract_strided_slice %142 {offsets = [0, 32], sizes = [16, 8], strides = [1, 1]} : vector<32x64xf32> to vector<16x8xf32>
    %cst_57 = arith.constant dense<0.000000e+00> : vector<8x8xf32>
    %182 = tpu.matmul %180, %181, %cst_57 {dimension_numbers = #tpu.dot_dimension_numbers<[1], [0], [0], [1], [0, 0, 1, 1], [], []>} : vector<8x16xf32>, vector<16x8xf32>, vector<8x8xf32> -> vector<8x8xf32>
    %183 = vector.extract_strided_slice %143 {offsets = [0, 0], sizes = [8, 32], strides = [1, 1]} : vector<32x32xf32> to vector<8x32xf32>
    %cst_58 = arith.constant dense<0.000000e+00> : vector<8x32xf32>
    %184 = tpu.matmul %182, %183, %cst_58 {dimension_numbers = #tpu.dot_dimension_numbers<[1], [0], [0], [1], [0, 0, 1, 1], [], []>} : vector<8x8xf32>, vector<8x32xf32>, vector<8x32xf32> -> vector<8x32xf32>
    %185 = arith.addf %179, %184 : vector<8x32xf32>
    %186 = vector.extract_strided_slice %178 {offsets = [8, 0], sizes = [8, 16], strides = [1, 1]} : vector<64x16xf32> to vector<8x16xf32>
    %187 = vector.extract_strided_slice %142 {offsets = [0, 40], sizes = [16, 8], strides = [1, 1]} : vector<32x64xf32> to vector<16x8xf32>
    %cst_59 = arith.constant dense<0.000000e+00> : vector<8x8xf32>
    %188 = tpu.matmul %186, %187, %cst_59 {dimension_numbers = #tpu.dot_dimension_numbers<[1], [0], [0], [1], [0, 0, 1, 1], [], []>} : vector<8x16xf32>, vector<16x8xf32>, vector<8x8xf32> -> vector<8x8xf32>
    %189 = vector.extract_strided_slice %143 {offsets = [8, 0], sizes = [8, 32], strides = [1, 1]} : vector<32x32xf32> to vector<8x32xf32>
    %cst_60 = arith.constant dense<0.000000e+00> : vector<8x32xf32>
    %190 = tpu.matmul %188, %189, %cst_60 {dimension_numbers = #tpu.dot_dimension_numbers<[1], [0], [0], [1], [0, 0, 1, 1], [], []>} : vector<8x8xf32>, vector<8x32xf32>, vector<8x32xf32> -> vector<8x32xf32>
    %191 = arith.addf %185, %190 : vector<8x32xf32>
    %192 = vector.extract_strided_slice %178 {offsets = [16, 0], sizes = [8, 16], strides = [1, 1]} : vector<64x16xf32> to vector<8x16xf32>
    %193 = vector.extract_strided_slice %142 {offsets = [0, 48], sizes = [16, 8], strides = [1, 1]} : vector<32x64xf32> to vector<16x8xf32>
    %cst_61 = arith.constant dense<0.000000e+00> : vector<8x8xf32>
    %194 = tpu.matmul %192, %193, %cst_61 {dimension_numbers = #tpu.dot_dimension_numbers<[1], [0], [0], [1], [0, 0, 1, 1], [], []>} : vector<8x16xf32>, vector<16x8xf32>, vector<8x8xf32> -> vector<8x8xf32>
    %195 = vector.extract_strided_slice %143 {offsets = [16, 0], sizes = [8, 32], strides = [1, 1]} : vector<32x32xf32> to vector<8x32xf32>
    %cst_62 = arith.constant dense<0.000000e+00> : vector<8x32xf32>
    %196 = tpu.matmul %194, %195, %cst_62 {dimension_numbers = #tpu.dot_dimension_numbers<[1], [0], [0], [1], [0, 0, 1, 1], [], []>} : vector<8x8xf32>, vector<8x32xf32>, vector<8x32xf32> -> vector<8x32xf32>
    %197 = arith.addf %191, %196 : vector<8x32xf32>
    %198 = vector.extract_strided_slice %178 {offsets = [24, 0], sizes = [8, 16], strides = [1, 1]} : vector<64x16xf32> to vector<8x16xf32>
    %199 = vector.extract_strided_slice %142 {offsets = [0, 56], sizes = [16, 8], strides = [1, 1]} : vector<32x64xf32> to vector<16x8xf32>
    %cst_63 = arith.constant dense<0.000000e+00> : vector<8x8xf32>
    %200 = tpu.matmul %198, %199, %cst_63 {dimension_numbers = #tpu.dot_dimension_numbers<[1], [0], [0], [1], [0, 0, 1, 1], [], []>} : vector<8x16xf32>, vector<16x8xf32>, vector<8x8xf32> -> vector<8x8xf32>
    %201 = vector.extract_strided_slice %143 {offsets = [24, 0], sizes = [8, 32], strides = [1, 1]} : vector<32x32xf32> to vector<8x32xf32>
    %cst_64 = arith.constant dense<0.000000e+00> : vector<8x32xf32>
    %202 = tpu.matmul %200, %201, %cst_64 {dimension_numbers = #tpu.dot_dimension_numbers<[1], [0], [0], [1], [0, 0, 1, 1], [], []>} : vector<8x8xf32>, vector<8x32xf32>, vector<8x32xf32> -> vector<8x32xf32>
    %203 = arith.addf %197, %202 : vector<8x32xf32>
    %cst_65 = arith.constant 0.000000e+00 : f32
    %204 = vector.broadcast %cst_65 : f32 to vector<8x32xf32>
    %205 = vector.extract_strided_slice %178 {offsets = [32, 0], sizes = [8, 16], strides = [1, 1]} : vector<64x16xf32> to vector<8x16xf32>
    %206 = vector.extract_strided_slice %142 {offsets = [16, 32], sizes = [16, 8], strides = [1, 1]} : vector<32x64xf32> to vector<16x8xf32>
    %cst_66 = arith.constant dense<0.000000e+00> : vector<8x8xf32>
    %207 = tpu.matmul %205, %206, %cst_66 {dimension_numbers = #tpu.dot_dimension_numbers<[1], [0], [0], [1], [0, 0, 1, 1], [], []>} : vector<8x16xf32>, vector<16x8xf32>, vector<8x8xf32> -> vector<8x8xf32>
    %208 = vector.extract_strided_slice %143 {offsets = [0, 0], sizes = [8, 32], strides = [1, 1]} : vector<32x32xf32> to vector<8x32xf32>
    %cst_67 = arith.constant dense<0.000000e+00> : vector<8x32xf32>
    %209 = tpu.matmul %207, %208, %cst_67 {dimension_numbers = #tpu.dot_dimension_numbers<[1], [0], [0], [1], [0, 0, 1, 1], [], []>} : vector<8x8xf32>, vector<8x32xf32>, vector<8x32xf32> -> vector<8x32xf32>
    %210 = arith.addf %204, %209 : vector<8x32xf32>
    %211 = vector.extract_strided_slice %178 {offsets = [40, 0], sizes = [8, 16], strides = [1, 1]} : vector<64x16xf32> to vector<8x16xf32>
    %212 = vector.extract_strided_slice %142 {offsets = [16, 40], sizes = [16, 8], strides = [1, 1]} : vector<32x64xf32> to vector<16x8xf32>
    %cst_68 = arith.constant dense<0.000000e+00> : vector<8x8xf32>
    %213 = tpu.matmul %211, %212, %cst_68 {dimension_numbers = #tpu.dot_dimension_numbers<[1], [0], [0], [1], [0, 0, 1, 1], [], []>} : vector<8x16xf32>, vector<16x8xf32>, vector<8x8xf32> -> vector<8x8xf32>
    %214 = vector.extract_strided_slice %143 {offsets = [8, 0], sizes = [8, 32], strides = [1, 1]} : vector<32x32xf32> to vector<8x32xf32>
    %cst_69 = arith.constant dense<0.000000e+00> : vector<8x32xf32>
    %215 = tpu.matmul %213, %214, %cst_69 {dimension_numbers = #tpu.dot_dimension_numbers<[1], [0], [0], [1], [0, 0, 1, 1], [], []>} : vector<8x8xf32>, vector<8x32xf32>, vector<8x32xf32> -> vector<8x32xf32>
    %216 = arith.addf %210, %215 : vector<8x32xf32>
    %217 = vector.extract_strided_slice %178 {offsets = [48, 0], sizes = [8, 16], strides = [1, 1]} : vector<64x16xf32> to vector<8x16xf32>
    %218 = vector.extract_strided_slice %142 {offsets = [16, 48], sizes = [16, 8], strides = [1, 1]} : vector<32x64xf32> to vector<16x8xf32>
    %cst_70 = arith.constant dense<0.000000e+00> : vector<8x8xf32>
    %219 = tpu.matmul %217, %218, %cst_70 {dimension_numbers = #tpu.dot_dimension_numbers<[1], [0], [0], [1], [0, 0, 1, 1], [], []>} : vector<8x16xf32>, vector<16x8xf32>, vector<8x8xf32> -> vector<8x8xf32>
    %220 = vector.extract_strided_slice %143 {offsets = [16, 0], sizes = [8, 32], strides = [1, 1]} : vector<32x32xf32> to vector<8x32xf32>
    %cst_71 = arith.constant dense<0.000000e+00> : vector<8x32xf32>
    %221 = tpu.matmul %219, %220, %cst_71 {dimension_numbers = #tpu.dot_dimension_numbers<[1], [0], [0], [1], [0, 0, 1, 1], [], []>} : vector<8x8xf32>, vector<8x32xf32>, vector<8x32xf32> -> vector<8x32xf32>
    %222 = arith.addf %216, %221 : vector<8x32xf32>
    %223 = vector.extract_strided_slice %178 {offsets = [56, 0], sizes = [8, 16], strides = [1, 1]} : vector<64x16xf32> to vector<8x16xf32>
    %224 = vector.extract_strided_slice %142 {offsets = [16, 56], sizes = [16, 8], strides = [1, 1]} : vector<32x64xf32> to vector<16x8xf32>
    %cst_72 = arith.constant dense<0.000000e+00> : vector<8x8xf32>
    %225 = tpu.matmul %223, %224, %cst_72 {dimension_numbers = #tpu.dot_dimension_numbers<[1], [0], [0], [1], [0, 0, 1, 1], [], []>} : vector<8x16xf32>, vector<16x8xf32>, vector<8x8xf32> -> vector<8x8xf32>
    %226 = vector.extract_strided_slice %143 {offsets = [24, 0], sizes = [8, 32], strides = [1, 1]} : vector<32x32xf32> to vector<8x32xf32>
    %cst_73 = arith.constant dense<0.000000e+00> : vector<8x32xf32>
    %227 = tpu.matmul %225, %226, %cst_73 {dimension_numbers = #tpu.dot_dimension_numbers<[1], [0], [0], [1], [0, 0, 1, 1], [], []>} : vector<8x8xf32>, vector<8x32xf32>, vector<8x32xf32> -> vector<8x32xf32>
    %228 = arith.addf %222, %227 : vector<8x32xf32>
    %229 = tpu.concatenate %203, %228 in 0 : vector<8x32xf32>, vector<8x32xf32> -> vector<16x32xf32>
    %230 = vector.broadcast %144 : vector<1x32xf32> to vector<16x32xf32>
    %231 = arith.addf %229, %230 : vector<16x32xf32>
    %232 = arith.addf %132, %231 : vector<16x32xf32>
    %233 = vector.extract_strided_slice %8 {offsets = [4, 64], sizes = [1, 32], strides = [1, 1]} : vector<8x128xf32> to vector<1x32xf32>
    %234 = vector.extract_strided_slice %8 {offsets = [4, 96], sizes = [1, 32], strides = [1, 1]} : vector<8x128xf32> to vector<1x32xf32>
    %cst_74 = arith.constant dense<0.000000e+00> : vector<16xf32>
    %235 = vector.multi_reduction <add>, %232, %cst_74 [1] : vector<16x32xf32> to vector<16xf32>
    %236 = vector.shape_cast %235 : vector<16xf32> to vector<16x1xf32>
    %cst_75 = arith.constant 3.200000e+01 : f32
    %237 = vector.broadcast %cst_75 : f32 to vector<16x1xf32>
    %238 = arith.divf %236, %237 : vector<16x1xf32>
    %239 = vector.broadcast %238 : vector<16x1xf32> to vector<16x32xf32>
    %240 = arith.subf %232, %239 : vector<16x32xf32>
    %241 = arith.mulf %240, %240 : vector<16x32xf32>
    %cst_76 = arith.constant dense<0.000000e+00> : vector<16xf32>
    %242 = vector.multi_reduction <add>, %241, %cst_76 [1] : vector<16x32xf32> to vector<16xf32>
    %243 = vector.shape_cast %242 : vector<16xf32> to vector<16x1xf32>
    %cst_77 = arith.constant 3.200000e+01 : f32
    %244 = vector.broadcast %cst_77 : f32 to vector<16x1xf32>
    %245 = arith.divf %243, %244 : vector<16x1xf32>
    %246 = vector.broadcast %238 : vector<16x1xf32> to vector<16x32xf32>
    %247 = arith.subf %232, %246 : vector<16x32xf32>
    %cst_78 = arith.constant 9.99999974E-6 : f32
    %248 = vector.broadcast %cst_78 : f32 to vector<16x1xf32>
    %249 = arith.addf %245, %248 : vector<16x1xf32>
    %250 = math.rsqrt %249 : vector<16x1xf32>
    %251 = vector.broadcast %250 : vector<16x1xf32> to vector<16x32xf32>
    %252 = arith.mulf %247, %251 : vector<16x32xf32>
    %253 = vector.broadcast %233 : vector<1x32xf32> to vector<16x32xf32>
    %254 = arith.mulf %252, %253 : vector<16x32xf32>
    %255 = vector.broadcast %234 : vector<1x32xf32> to vector<16x32xf32>
    %256 = arith.addf %254, %255 : vector<16x32xf32>
    %257 = vector.extract_strided_slice %2 {offsets = [0, 256], sizes = [32, 128], strides = [1, 1]} : vector<32x384xf32> to vector<32x128xf32>
    %cst_79 = arith.constant dense<0.000000e+00> : vector<16x128xf32>
    %258 = tpu.matmul %256, %257, %cst_79 {dimension_numbers = #tpu.dot_dimension_numbers<[1], [0], [0], [1], [0, 0, 1, 1], [], []>} : vector<16x32xf32>, vector<32x128xf32>, vector<16x128xf32> -> vector<16x128xf32>
    %259 = vector.extract_strided_slice %8 {offsets = [3, 0], sizes = [1, 128], strides = [1, 1]} : vector<8x128xf32> to vector<1x128xf32>
    %260 = vector.broadcast %259 : vector<1x128xf32> to vector<16x128xf32>
    %261 = arith.addf %258, %260 : vector<16x128xf32>
    %cst_80 = arith.constant 0.000000e+00 : f32
    %262 = vector.broadcast %cst_80 : f32 to vector<16x128xf32>
    %263 = arith.maximumf %261, %262 : vector<16x128xf32>
    %cst_81 = arith.constant dense<0.000000e+00> : vector<16x32xf32>
    %264 = tpu.matmul %263, %5, %cst_81 {dimension_numbers = #tpu.dot_dimension_numbers<[1], [0], [0], [1], [0, 0, 1, 1], [], []>} : vector<16x128xf32>, vector<128x32xf32>, vector<16x32xf32> -> vector<16x32xf32>
    %265 = vector.extract_strided_slice %8 {offsets = [1, 96], sizes = [1, 32], strides = [1, 1]} : vector<8x128xf32> to vector<1x32xf32>
    %266 = vector.broadcast %265 : vector<1x32xf32> to vector<16x32xf32>
    %267 = arith.addf %264, %266 : vector<16x32xf32>
    %268 = arith.addf %256, %267 : vector<16x32xf32>
    %269 = vector.extract_strided_slice %8 {offsets = [5, 0], sizes = [1, 32], strides = [1, 1]} : vector<8x128xf32> to vector<1x32xf32>
    %270 = vector.extract_strided_slice %8 {offsets = [5, 32], sizes = [1, 32], strides = [1, 1]} : vector<8x128xf32> to vector<1x32xf32>
    %cst_82 = arith.constant dense<0.000000e+00> : vector<16xf32>
    %271 = vector.multi_reduction <add>, %268, %cst_82 [1] : vector<16x32xf32> to vector<16xf32>
    %272 = vector.shape_cast %271 : vector<16xf32> to vector<16x1xf32>
    %cst_83 = arith.constant 3.200000e+01 : f32
    %273 = vector.broadcast %cst_83 : f32 to vector<16x1xf32>
    %274 = arith.divf %272, %273 : vector<16x1xf32>
    %275 = vector.broadcast %274 : vector<16x1xf32> to vector<16x32xf32>
    %276 = arith.subf %268, %275 : vector<16x32xf32>
    %277 = arith.mulf %276, %276 : vector<16x32xf32>
    %cst_84 = arith.constant dense<0.000000e+00> : vector<16xf32>
    %278 = vector.multi_reduction <add>, %277, %cst_84 [1] : vector<16x32xf32> to vector<16xf32>
    %279 = vector.shape_cast %278 : vector<16xf32> to vector<16x1xf32>
    %cst_85 = arith.constant 3.200000e+01 : f32
    %280 = vector.broadcast %cst_85 : f32 to vector<16x1xf32>
    %281 = arith.divf %279, %280 : vector<16x1xf32>
    %282 = vector.broadcast %274 : vector<16x1xf32> to vector<16x32xf32>
    %283 = arith.subf %268, %282 : vector<16x32xf32>
    %cst_86 = arith.constant 9.99999974E-6 : f32
    %284 = vector.broadcast %cst_86 : f32 to vector<16x1xf32>
    %285 = arith.addf %281, %284 : vector<16x1xf32>
    %286 = math.rsqrt %285 : vector<16x1xf32>
    %287 = vector.broadcast %286 : vector<16x1xf32> to vector<16x32xf32>
    %288 = arith.mulf %283, %287 : vector<16x32xf32>
    %289 = vector.broadcast %269 : vector<1x32xf32> to vector<16x32xf32>
    %290 = arith.mulf %288, %289 : vector<16x32xf32>
    %291 = vector.broadcast %270 : vector<1x32xf32> to vector<16x32xf32>
    %292 = arith.addf %290, %291 : vector<16x32xf32>
    %c0_87 = arith.constant 0 : index
    %c0_88 = arith.constant 0 : index
    %293 = vector.load %arg8[%c0_87, %c0_88] : memref<16x32xf32, #tpu.memory_space<vmem>>, vector<16x32xf32>
    tpu.vector_store %arg8[%c0_87, %c0_88], %292 {strides = array<i32>} : memref<16x32xf32, #tpu.memory_space<vmem>>, vector<16x32xf32>,
    %c1_i32 = arith.constant 1 : i32
    %294 = arith.cmpi eq, %arg1, %c1_i32 : i32
    %295 = arith.extui %294 : i1 to i32
    %c0_i32_89 = arith.constant 0 : i32
    %296 = arith.cmpi ne, %295, %c0_i32_89 : i32
    scf.if %296 {
      %c0_90 = arith.constant 0 : index
      %c0_91 = arith.constant 0 : index
      %297 = vector.load %arg7[%c0_90, %c0_91] : memref<16x32xf32, #tpu.memory_space<vmem>>, vector<16x32xf32>
      tpu.vector_store %arg7[%c0_90, %c0_91], %292 {strides = array<i32>} : memref<16x32xf32, #tpu.memory_space<vmem>>, vector<16x32xf32>,
    } else {
    }
    return
  }
  func.func @transform_0(%arg0: i32, %arg1: i32) -> (i32, i32) {
    %c0_i32 = arith.constant 0 : i32
    %c0_i32_0 = arith.constant 0 : i32
    return %arg0, %c0_i32 : i32, i32
  }
  func.func @transform_1(%arg0: i32, %arg1: i32) -> (i32, i32) {
    %c0_i32 = arith.constant 0 : i32
    %c0_i32_0 = arith.constant 0 : i32
    return %arg0, %c0_i32 : i32, i32
  }
  func.func @transform_2(%arg0: i32, %arg1: i32) -> (i32, i32, i32) {
    %c0_i32 = arith.constant 0 : i32
    %c0_i32_0 = arith.constant 0 : i32
    %c0_i32_1 = arith.constant 0 : i32
    %c0_i32_2 = arith.constant 0 : i32
    return %c0_i32, %c0_i32_0, %c0_i32_1 : i32, i32, i32
  }
  func.func @transform_3(%arg0: i32, %arg1: i32) -> (i32, i32, i32) {
    %c0_i32 = arith.constant 0 : i32
    %c0_i32_0 = arith.constant 0 : i32
    %c0_i32_1 = arith.constant 0 : i32
    %c0_i32_2 = arith.constant 0 : i32
    return %c0_i32, %c0_i32_0, %c0_i32_1 : i32, i32, i32
  }
  func.func @transform_4(%arg0: i32, %arg1: i32) -> (i32, i32, i32) {
    %c0_i32 = arith.constant 0 : i32
    %c0_i32_0 = arith.constant 0 : i32
    %c0_i32_1 = arith.constant 0 : i32
    %c0_i32_2 = arith.constant 0 : i32
    return %c0_i32, %c0_i32_0, %c0_i32_1 : i32, i32, i32
  }
  func.func @transform_5(%arg0: i32, %arg1: i32) -> (i32, i32) {
    %c0_i32 = arith.constant 0 : i32
    %c0_i32_0 = arith.constant 0 : i32
    return %arg0, %c0_i32 : i32, i32
  }
}

</mosaic_0001>

<llo_original>
// kernel: tpu_custom_call.1
$region0: #{tpu_custom_call.1}
  #allocation0 [shape = 'u32[]', space=smem, size = 0x4, offset = 0x4, fixed_abs, tag = 'smem constant byte address 0x4 - core index']
  #allocation1 [shape = 'u32[72,128]{1,0:T(1,128)}', space=vmem, size = 0x9000, scoped, tag = 'internal scratch']
  #allocation2 [shape = 'f32[16,32]{1,0:T(8,128)}', space=vmem, size = 0x2000, scoped, tag = 'scratch operand']
  %s0 = inlined_call_operand.vmem [shape: f32[16,32], index: 0, kind: input, shape index: {}]
  %s1 = inlined_call_operand.vmem [shape: f32[32,32], index: 1, kind: input, shape index: {}]
  %s2 = inlined_call_operand.vmem [shape: f32[2,32,384], index: 2, kind: input, shape index: {}]
  %s3 = inlined_call_operand.vmem [shape: f32[2,128,32], index: 3, kind: input, shape index: {}]
  %s4 = inlined_call_operand.vmem [shape: f32[2,8,128], index: 4, kind: input, shape index: {}]
  %s5 = inlined_call_operand.hbm [shape: f32[16,32], index: 5, kind: output, shape index: {}]
  %s6 = sld [smem:[#allocation0]]
  $region57: #{tpu_custom_call.1} parent=0
    _
  %s8 = ssub.s32 1, %s6
  %s9 = scalar_select 0, %s8, %s6
  $region1: #{tpu_custom_call.1} parent=0
    #allocation3 [shape = 'u8[8192]{0}', space=vmem, size = 0x2000, scoped, tag = 'output window, operand 0, single buffered']
    #allocation4 [shape = 's32[2]{0}', space=sflag, size = 0x8, scoped, tag = 'scoped memory for tpu_custom_call.1']
    %10 = vsyncpa [#allocation4], 0
    loop: start=0, step=1, limit=4
    $region2: #{tpu_custom_call.1} parent=1 // loop_pre_header
      _
    $region3: #{tpu_custom_call.1} parent=1 // loop_header
      %s12 = sphi 0, %s16
      %p13 = scmp.ge.s32.totalorder %s12, 4
      %s19 = sphi 0, %s31
      %s20 = sphi 0, %s27
      %s21 = sphi 0, %s19
      %s22 = sphi 0, %s20
      %s23 = sphi 0, %s21
      %s24 = sphi 0, %s22
      %s34 = sphi 0, %s36
      %s37 = sphi 0, %s34
      %s38 = sphi 0, %s37
      %s54 = sphi 0, %s38
      %s60 = sphi 0, %s62
      %s63 = sphi 0, %s60
      %s64 = sphi 0, %s63
      %s80 = sphi 0, %s64
      %s84 = sphi 0, %s84
      %s86 = sphi 0, %s84
      %s87 = sphi 0, %s86
      %s101 = sphi 0, %s87
      %s105 = sphi 0, %s105
      %s107 = sphi 0, %s105
      %s108 = sphi 0, %s107
      %s122 = sphi 0, %s108
      %s126 = sphi 0, %s126
      %s128 = sphi 0, %s126
      %s129 = sphi 0, %s128
      %s143 = sphi 0, %s129
      %s149 = sphi 0, %s151
      %s152 = sphi 0, %s149
      %s153 = sphi 0, %s152
      %s169 = sphi 0, %s153
    $region4: #{tpu_custom_call.1} parent=1 // loop_header_branch
      %15 = sbr.rel (%p13) target = $region8
    $region5: #{tpu_custom_call.1} parent=1 // loop_body
      %s17 = ssub.s32 %s12, 1
      %s18 = ssub.s32 %s12, 2
      %s25 = sadd.s32 1, %s20
      %p26 = scmp.ge.s32.totalorder %s25, 2
      %s27 = scalar_select %p26, 0, %s25
      %s28 = sadd.s32 1, %s19
      %s29 = scalar_select %p26, %s28, %s19
      %p30 = scmp.ge.s32.totalorder %s29, 1
      %s31 = scalar_select %p30, 0, %s29
      %s32 = ssub.s32 %s19, %s31
      %p33 = scmp.eq.s32.totalorder %s32, 0
      %s35 = sadd.s32 %s34, 1
      %s36 = scalar_select %p33, %s34, %s35
      %p39 = pneg %p33
      %p40 = scmp.eq.s32.totalorder %s12, 1
      %p41 = por %p39, %p40
      %p42 = scmp.ne.s32.totalorder %s34, %s37
      %p43 = scmp.eq.s32.totalorder %s12, 0
      %p44 = por %p42, %p43
      %p45 = scmp.ne.s32.totalorder %s34, %s37
      %p46 = scmp.eq.s32.totalorder %s17, 1
      %p47 = por %p45, %p46
      %p48 = scmp.ne.s32.totalorder %s37, %s38
      %p49 = scmp.eq.s32.totalorder %s17, 0
      %p50 = por %p48, %p49
      %p51 = scmp.ne.s32.totalorder %s37, %s38
      %p52 = scmp.eq.s32.totalorder %s18, 1
      %p53 = por %p51, %p52
      %p55 = scmp.ne.s32.totalorder %s38, %s54
      %p56 = scmp.eq.s32.totalorder %s18, 0
      %p57 = por %p55, %p56
      %s58 = ssub.s32 %s19, %s31
      %p59 = scmp.eq.s32.totalorder %s58, 0
      %s61 = sadd.s32 %s60, 1
      %s62 = scalar_select %p59, %s60, %s61
      %p65 = pneg %p59
      %p66 = scmp.eq.s32.totalorder %s12, 1
      %p67 = por %p65, %p66
      %p68 = scmp.ne.s32.totalorder %s60, %s63
      %p69 = scmp.eq.s32.totalorder %s12, 0
      %p70 = por %p68, %p69
      %p71 = scmp.ne.s32.totalorder %s60, %s63
      %p72 = scmp.eq.s32.totalorder %s17, 1
      %p73 = por %p71, %p72
      %p74 = scmp.ne.s32.totalorder %s63, %s64
      %p75 = scmp.eq.s32.totalorder %s17, 0
      %p76 = por %p74, %p75
      %p77 = scmp.ne.s32.totalorder %s63, %s64
      %p78 = scmp.eq.s32.totalorder %s18, 1
      %p79 = por %p77, %p78
      %p81 = scmp.ne.s32.totalorder %s64, %s80
      %p82 = scmp.eq.s32.totalorder %s18, 0
      %p83 = por %p81, %p82
      %s85 = sadd.s32 %s84, 1
      %p88 = scmp.eq.s32.totalorder %s12, 1
      %p89 = scmp.ne.s32.totalorder %s84, %s86
      %p90 = scmp.eq.s32.totalorder %s12, 0
      %p91 = por %p89, %p90
      %p92 = scmp.ne.s32.totalorder %s84, %s86
      %p93 = scmp.eq.s32.totalorder %s17, 1
      %p94 = por %p92, %p93
      %p95 = scmp.ne.s32.totalorder %s86, %s87
      %p96 = scmp.eq.s32.totalorder %s17, 0
      %p97 = por %p95, %p96
      %p98 = scmp.ne.s32.totalorder %s86, %s87
      %p99 = scmp.eq.s32.totalorder %s18, 1
      %p100 = por %p98, %p99
      %p102 = scmp.ne.s32.totalorder %s87, %s101
      %p103 = scmp.eq.s32.totalorder %s18, 0
      %p104 = por %p102, %p103
      %s106 = sadd.s32 %s105, 1
      %p109 = scmp.eq.s32.totalorder %s12, 1
      %p110 = scmp.ne.s32.totalorder %s105, %s107
      %p111 = scmp.eq.s32.totalorder %s12, 0
      %p112 = por %p110, %p111
      %p113 = scmp.ne.s32.totalorder %s105, %s107
      %p114 = scmp.eq.s32.totalorder %s17, 1
      %p115 = por %p113, %p114
      %p116 = scmp.ne.s32.totalorder %s107, %s108
      %p117 = scmp.eq.s32.totalorder %s17, 0
      %p118 = por %p116, %p117
      %p119 = scmp.ne.s32.totalorder %s107, %s108
      %p120 = scmp.eq.s32.totalorder %s18, 1
      %p121 = por %p119, %p120
      %p123 = scmp.ne.s32.totalorder %s108, %s122
      %p124 = scmp.eq.s32.totalorder %s18, 0
      %p125 = por %p123, %p124
      %s127 = sadd.s32 %s126, 1
      %p130 = scmp.eq.s32.totalorder %s12, 1
      %p131 = scmp.ne.s32.totalorder %s126, %s128
      %p132 = scmp.eq.s32.totalorder %s12, 0
      %p133 = por %p131, %p132
      %p134 = scmp.ne.s32.totalorder %s126, %s128
      %p135 = scmp.eq.s32.totalorder %s17, 1
      %p136 = por %p134, %p135
      %p137 = scmp.ne.s32.totalorder %s128, %s129
      %p138 = scmp.eq.s32.totalorder %s17, 0
      %p139 = por %p137, %p138
      %p140 = scmp.ne.s32.totalorder %s128, %s129
      %p141 = scmp.eq.s32.totalorder %s18, 1
      %p142 = por %p140, %p141
      %p144 = scmp.ne.s32.totalorder %s129, %s143
      %p145 = scmp.eq.s32.totalorder %s18, 0
      %p146 = por %p144, %p145
      %s147 = ssub.s32 %s19, %s31
      %p148 = scmp.eq.s32.totalorder %s147, 0
      %s150 = sadd.s32 %s149, 1
      %s151 = scalar_select %p148, %s149, %s150
      %p154 = pneg %p148
      %p155 = scmp.eq.s32.totalorder %s12, 1
      %p156 = por %p154, %p155
      %p157 = scmp.ne.s32.totalorder %s149, %s152
      %p158 = scmp.eq.s32.totalorder %s12, 0
      %p159 = por %p157, %p158
      %p160 = scmp.ne.s32.totalorder %s149, %s152
      %p161 = scmp.eq.s32.totalorder %s17, 1
      %p162 = por %p160, %p161
      %p163 = scmp.ne.s32.totalorder %s152, %s153
      %p164 = scmp.eq.s32.totalorder %s17, 0
      %p165 = por %p163, %p164
      %p166 = scmp.ne.s32.totalorder %s152, %s153
      %p167 = scmp.eq.s32.totalorder %s18, 1
      %p168 = por %p166, %p167
      %p170 = scmp.ne.s32.totalorder %s153, %s169
      %p171 = scmp.eq.s32.totalorder %s18, 0
      %p172 = por %p170, %p171
      %p173 = scmp.le.s32.totalorder 1, %s12
      %p174 = scmp.lt.s32.totalorder %s12, 3
      %p175 = pnand %p173, %p174
      %p176 = pneg %p175
      // Predicated region
      $region9: #{tpu_custom_call.1} parent=5 // pred_check
        _
      $region10: #{tpu_custom_call.1} parent=5 // pred_check_branch
        %178 = sbr.rel (%p175) target = $region12
      $region11: #{tpu_custom_call.1} parent=5 // pred_region
        %s179 = ssub.s32 %s12, 1
        // Predicated region
        $region13: #{tpu_custom_call.1} parent=11 // pred_check
          %p180 = pneg %p50
        $region14: #{tpu_custom_call.1} parent=11 // pred_check_branch
          %182 = sbr.rel (%p180) target = $region16
        $region15: #{tpu_custom_call.1} parent=11 // pred_region
          %s183 = smul.u32 2, %s21
          %p184 = scmp.lt.s32.totalorder %s183, 1
          %s185 = scalar_select %p184, %s183, 1
          %s186 = smul.addr %s185, 8
          %s187 = scalar_lea.vmem %s0, %s186
          %s188 = smul.u32 2, %s21
        $region16: #{tpu_custom_call.1} parent=11 // pred_fallthru
          _
        // Predicated region
        $region17: #{tpu_custom_call.1} parent=11 // pred_check
          %p189 = pneg %p76
        $region18: #{tpu_custom_call.1} parent=11 // pred_check_branch
          %191 = sbr.rel (%p189) target = $region20
        $region19: #{tpu_custom_call.1} parent=11 // pred_region
          %s192 = smul.u32 4, %s21
          %p193 = scmp.lt.s32.totalorder %s192, 3
          %s194 = scalar_select %p193, %s192, 3
          %s195 = smul.addr %s194, 8
          %s196 = scalar_lea.vmem %s1, %s195
          %s197 = smul.u32 4, %s21
        $region20: #{tpu_custom_call.1} parent=11 // pred_fallthru
          _
        // Predicated region
        $region21: #{tpu_custom_call.1} parent=11 // pred_check
          %p198 = pneg %p97
        $region22: #{tpu_custom_call.1} parent=11 // pred_check_branch
          %200 = sbr.rel (%p198) target = $region24
        $region23: #{tpu_custom_call.1} parent=11 // pred_region
          _
        $region24: #{tpu_custom_call.1} parent=11 // pred_fallthru
          _
        // Predicated region
        $region25: #{tpu_custom_call.1} parent=11 // pred_check
          %p201 = pneg %p118
        $region26: #{tpu_custom_call.1} parent=11 // pred_check_branch
          %203 = sbr.rel (%p201) target = $region28
        $region27: #{tpu_custom_call.1} parent=11 // pred_region
          _
        $region28: #{tpu_custom_call.1} parent=11 // pred_fallthru
          _
        // Predicated region
        $region29: #{tpu_custom_call.1} parent=11 // pred_check
          %p204 = pneg %p139
        $region30: #{tpu_custom_call.1} parent=11 // pred_check_branch
          %206 = sbr.rel (%p204) target = $region32
        $region31: #{tpu_custom_call.1} parent=11 // pred_region
          _
        $region32: #{tpu_custom_call.1} parent=11 // pred_fallthru
          _
      $region12: #{tpu_custom_call.1} parent=5 // pred_fallthru
        _
      %p207 = scmp.lt.s32.totalorder %s12, 2
      // Predicated region
      $region33: #{tpu_custom_call.1} parent=5 // pred_check
        %p208 = pneg %p207
      $region34: #{tpu_custom_call.1} parent=5 // pred_check_branch
        %210 = sbr.rel (%p208) target = $region36
      $region35: #{tpu_custom_call.1} parent=5 // pred_region
        _
      $region36: #{tpu_custom_call.1} parent=5 // pred_fallthru
        _
      %p211 = scmp.le.s32.totalorder 1, %s12
      %p212 = scmp.lt.s32.totalorder %s12, 3
      %p213 = pnand %p211, %p212
      %p214 = pneg %p213
      // Predicated region
      $region37: #{tpu_custom_call.1} parent=5 // pred_check
        _
      $region38: #{tpu_custom_call.1} parent=5 // pred_check_branch
        %216 = sbr.rel (%p213) target = $region40
      $region39: #{tpu_custom_call.1} parent=5 // pred_region
        %s217 = ssub.s32 %s12, 1
        %s218 = smul.u32 2, %s21
        %p219 = scmp.lt.s32.totalorder %s218, 1
        %s220 = scalar_select %p219, %s218, 1
        %s221 = smul.addr %s220, 8
        %s222 = scalar_lea.vmem %s0, %s221
        %p223 = pneg %p50
        %p224 = pneg %p47
        %s225 = smul.u32 4, %s21
        %p226 = scmp.lt.s32.totalorder %s225, 3
        %s227 = scalar_select %p226, %s225, 3
        %s228 = smul.addr %s227, 8
        %s229 = scalar_lea.vmem %s1, %s228
        %p230 = pneg %p76
        %p231 = pneg %p73
        %p232 = pneg %p97
        %p233 = pneg %p94
        %p234 = pneg %p118
        %p235 = pneg %p115
        %p236 = pneg %p139
        %p237 = pneg %p136
        %p238 = pneg %p165
        %p239 = pneg %p162
        %s240 = smul.u32 2, %s21
        %p241 = scmp.lt.s32.totalorder %s240, 1
        %s242 = scalar_select %p241, %s240, 1
        %s243 = smul.addr %s242, 8
        %s244 = scalar_lea.vmem %s0, %s243
        %s245 = smul.u32 2, %s21
        %s246 = smul.u32 4, %s21
        %p247 = scmp.lt.s32.totalorder %s246, 3
        %s248 = scalar_select %p247, %s246, 3
        %s249 = smul.addr %s248, 8
        %s250 = scalar_lea.vmem %s1, %s249
        %s251 = smul.u32 4, %s21
        %s252 = smul.u32 2, %s21
        %s253 = smul.u32 %s22, 12
        %s254 = smul.addr %s253, 8
        %s255 = scalar_lea.vmem %s2, %s254
        %v256 = vld [vmem:[%s255] sm:$0xff]
        %v257 = vld [vmem:[%s255 + $0x8] sm:$0xff]
        %v258 = vld [vmem:[%s255 + $0x10] sm:$0xff]
        %v259 = vld [vmem:[%s255 + $0x18] sm:$0xff]
        %v260 = vld [vmem:[%s255 + $0x20] sm:$0xff]
        %v261 = vld [vmem:[%s255 + $0x28] sm:$0xff]
        %v262 = vld [vmem:[%s255 + $0x30] sm:$0xff]
        %v263 = vld [vmem:[%s255 + $0x38] sm:$0xff]
        %v264 = vld [vmem:[%s255 + $0x40] sm:$0xff]
        %v265 = vld [vmem:[%s255 + $0x48] sm:$0xff]
        %v266 = vld [vmem:[%s255 + $0x50] sm:$0xff]
        %v267 = vld [vmem:[%s255 + $0x58] sm:$0xff]
        %s268 = smul.u32 %s22, 128
        %s269 = scalar_lea.vmem %s3, %s268
        %v270 = vld [vmem:[%s269] sm:$0xff]
        %v271 = vld [vmem:[%s269 + $0x8] sm:$0xff]
        %v272 = vld [vmem:[%s269 + $0x10] sm:$0xff]
        %v273 = vld [vmem:[%s269 + $0x18] sm:$0xff]
        %v274 = vld [vmem:[%s269 + $0x20] sm:$0xff]
        %v275 = vld [vmem:[%s269 + $0x28] sm:$0xff]
        %v276 = vld [vmem:[%s269 + $0x30] sm:$0xff]
        %v277 = vld [vmem:[%s269 + $0x38] sm:$0xff]
        %v278 = vld [vmem:[%s269 + $0x40] sm:$0xff]
        %v279 = vld [vmem:[%s269 + $0x48] sm:$0xff]
        %v280 = vld [vmem:[%s269 + $0x50] sm:$0xff]
        %v281 = vld [vmem:[%s269 + $0x58] sm:$0xff]
        %v282 = vld [vmem:[%s269 + $0x60] sm:$0xff]
        %v283 = vld [vmem:[%s269 + $0x68] sm:$0xff]
        %v284 = vld [vmem:[%s269 + $0x70] sm:$0xff]
        %v285 = vld [vmem:[%s269 + $0x78] sm:$0xff]
        %s286 = smul.u32 %s22, 8
        %s287 = scalar_lea.vmem %s4, %s286
        %v288 = vld [vmem:[%s287] sm:$0xff]
        %v289 = vld [vmem:[%s244] sm:$0xff]
        %v290 = vld [vmem:[%s244 + $0x8] sm:$0xff]
        %p291 = scmp.eq.s32.totalorder %s22, 0
        %v292 = vld [vmem:[#allocation2] sm:$0xff]
        %v293 = vld [vmem:[#allocation2 + $0x8] sm:$0xff]
        %s294 = scalar_select %p291, 1, 0
        %v295 = vstv %s294
        %vm296 = vcmp.eq.s32.totalorder %v295, 1
        %v297 = vsel %vm296, %v289, %v292
        %v298 = vsel %vm296, %v290, %v293
        %v299 = vld [vmem:[%s250] sm:$0xff]
        %v300 = vld [vmem:[%s250 + $0x8] sm:$0xff]
        %v301 = vld [vmem:[%s250 + $0x10] sm:$0xff]
        %v302 = vld [vmem:[%s250 + $0x18] sm:$0xff]
        %v303 = vperm.slane %v288, 0
        %vm304 = vcmask 261120
        %v306 = vsel %vm304, %v297, 0
        %v309 = vsel %vm304, %v298, 0
        %311 = vmatpush.msra.mxu0 0.0
        %312 = vmatpush.msra.mxu0 0.0
        %313 = vmatpush.msra.mxu0 0.0
        %314 = vmatpush.msra.mxu0 0.0
        %315 = vmatpush.msra.mxu0 0.0
        %316 = vmatpush.msra.mxu0 0.0
        %317 = vmatpush.msra.mxu0 0.0
        %318 = vmatpush.msra.mxu0 0.0
        %319 = vmatpush.msra.mxu0 0.0
        %320 = vmatpush.msra.mxu0 0.0
        %321 = vmatpush.msra.mxu0 0.0
        %322 = vmatpush.msra.mxu0 0.0
        %323 = vmatpush.msra.mxu0 %v265
        %324 = vmatpush.msra.mxu0 %v262
        %325 = vmatpush.msra.mxu0 %v259
        %326 = vmatpush.msra.mxu0 %v256
        %327 = vmatmul.f32.gmra.mxu0 %v306
        %v328 = vpop.f32.mrf.mxu0
        %v329 = vadd.f32 %v303, %v328
        %330 = vmatmul.f32.gmra.mxu0 %v309
        %v331 = vpop.f32.mrf.mxu0
        %v332 = vadd.f32 %v303, %v331
        %333 = vdwg.mxu0
        %335 = vrot.lane.b32.xlu0 %v329, 96
        %v336 = vpop.permute.xlu0 %335
        %vm337 = vcmask 64512
        %v338 = vsel %vm337, %v329, 0
        %v340 = vsel %vm337, %v336, 0
        %342 = vmatpush.xpose.msra.mxu0 0.0
        %343 = vmatpush.xpose.msra.mxu0 0.0
        %344 = vmatpush.xpose.msra.mxu0 0.0
        %345 = vmatpush.xpose.msra.mxu0 0.0
        %346 = vmatpush.xpose.msra.mxu0 0.0
        %347 = vmatpush.xpose.msra.mxu0 0.0
        %348 = vmatpush.xpose.msra.mxu0 0.0
        %349 = vmatpush.xpose.msra.mxu0 0.0
        %350 = vmatpush.xpose.msra.mxu0 0.0
        %351 = vmatpush.xpose.msra.mxu0 0.0
        %352 = vmatpush.xpose.msra.mxu0 0.0
        %353 = vmatpush.xpose.msra.mxu0 0.0
        %354 = vmatpush.xpose.msra.mxu0 0.0
        %355 = vmatpush.xpose.msra.mxu0 0.0
        %356 = vmatpush.xpose.msra.mxu0 0.0
        %357 = vmatpush.xpose.msra.mxu0 %v340
        %358 = vmatmul.f32.gmra.mxu0 %v338
        %v359 = vpop.f32.mrf.mxu0
        %v360 = vadd.f32 0.0, %v359
        %361 = vdwg.mxu0
        %362 = vrot.lane.b32.xlu0 %v329, 120
        %v363 = vpop.permute.xlu0 %362
        %364 = vrot.lane.b32.xlu0 %v329, 88
        %v365 = vpop.permute.xlu0 %364
        %v366 = vsel %vm337, %v363, 0
        %v368 = vsel %vm337, %v365, 0
        %370 = vmatpush.xpose.msra.mxu0 0.0
        %371 = vmatpush.xpose.msra.mxu0 0.0
        %372 = vmatpush.xpose.msra.mxu0 0.0
        %373 = vmatpush.xpose.msra.mxu0 0.0
        %374 = vmatpush.xpose.msra.mxu0 0.0
        %375 = vmatpush.xpose.msra.mxu0 0.0
        %376 = vmatpush.xpose.msra.mxu0 0.0
        %377 = vmatpush.xpose.msra.mxu0 0.0
        %378 = vmatpush.xpose.msra.mxu0 0.0
        %379 = vmatpush.xpose.msra.mxu0 0.0
        %380 = vmatpush.xpose.msra.mxu0 0.0
        %381 = vmatpush.xpose.msra.mxu0 0.0
        %382 = vmatpush.xpose.msra.mxu0 0.0
        %383 = vmatpush.xpose.msra.mxu0 0.0
        %384 = vmatpush.xpose.msra.mxu0 0.0
        %385 = vmatpush.xpose.msra.mxu0 %v368
        %386 = vmatmul.f32.gmra.mxu0 %v366
        %v387 = vpop.f32.mrf.mxu0
        %v388 = vadd.f32 0.0, %v387
        %389 = vdwg.mxu0
        %390 = vrot.lane.b32.xlu0 %v329, 112
        %v391 = vpop.permute.xlu0 %390
        %392 = vrot.lane.b32.xlu0 %v329, 80
        %v393 = vpop.permute.xlu0 %392
        %v394 = vsel %vm337, %v391, 0
        %v396 = vsel %vm337, %v393, 0
        %398 = vmatpush.xpose.msra.mxu0 0.0
        %399 = vmatpush.xpose.msra.mxu0 0.0
        %400 = vmatpush.xpose.msra.mxu0 0.0
        %401 = vmatpush.xpose.msra.mxu0 0.0
        %402 = vmatpush.xpose.msra.mxu0 0.0
        %403 = vmatpush.xpose.msra.mxu0 0.0
        %404 = vmatpush.xpose.msra.mxu0 0.0
        %405 = vmatpush.xpose.msra.mxu0 0.0
        %406 = vmatpush.xpose.msra.mxu0 0.0
        %407 = vmatpush.xpose.msra.mxu0 0.0
        %408 = vmatpush.xpose.msra.mxu0 0.0
        %409 = vmatpush.xpose.msra.mxu0 0.0
        %410 = vmatpush.xpose.msra.mxu0 0.0
        %411 = vmatpush.xpose.msra.mxu0 0.0
        %412 = vmatpush.xpose.msra.mxu0 0.0
        %413 = vmatpush.xpose.msra.mxu0 %v396
        %414 = vmatmul.f32.gmra.mxu0 %v394
        %v415 = vpop.f32.mrf.mxu0
        %v416 = vadd.f32 0.0, %v415
        %417 = vdwg.mxu0
        %418 = vrot.lane.b32.xlu0 %v329, 104
        %v419 = vpop.permute.xlu0 %418
        %420 = vrot.lane.b32.xlu0 %v329, 72
        %v421 = vpop.permute.xlu0 %420
        %v422 = vsel %vm337, %v419, 0
        %v424 = vsel %vm337, %v421, 0
        %426 = vmatpush.xpose.msra.mxu0 0.0
        %427 = vmatpush.xpose.msra.mxu0 0.0
        %428 = vmatpush.xpose.msra.mxu0 0.0
        %429 = vmatpush.xpose.msra.mxu0 0.0
        %430 = vmatpush.xpose.msra.mxu0 0.0
        %431 = vmatpush.xpose.msra.mxu0 0.0
        %432 = vmatpush.xpose.msra.mxu0 0.0
        %433 = vmatpush.xpose.msra.mxu0 0.0
        %434 = vmatpush.xpose.msra.mxu0 0.0
        %435 = vmatpush.xpose.msra.mxu0 0.0
        %436 = vmatpush.xpose.msra.mxu0 0.0
        %437 = vmatpush.xpose.msra.mxu0 0.0
        %438 = vmatpush.xpose.msra.mxu0 0.0
        %439 = vmatpush.xpose.msra.mxu0 0.0
        %440 = vmatpush.xpose.msra.mxu0 0.0
        %441 = vmatpush.xpose.msra.mxu0 %v424
        %442 = vmatmul.f32.gmra.mxu0 %v422
        %v443 = vpop.f32.mrf.mxu0
        %v444 = vadd.f32 0.0, %v443
        %445 = vdwg.mxu0
        %447 = vrot.lane.b32.xlu0 %v332, 96
        %v448 = vpop.permute.xlu0 %447
        %v449 = vsel %vm337, %v332, 0
        %v451 = vsel %vm337, %v448, 0
        %453 = vmatpush.xpose.msra.mxu0 0.0
        %454 = vmatpush.xpose.msra.mxu0 0.0
        %455 = vmatpush.xpose.msra.mxu0 0.0
        %456 = vmatpush.xpose.msra.mxu0 0.0
        %457 = vmatpush.xpose.msra.mxu0 0.0
        %458 = vmatpush.xpose.msra.mxu0 0.0
        %459 = vmatpush.xpose.msra.mxu0 0.0
        %460 = vmatpush.xpose.msra.mxu0 0.0
        %461 = vmatpush.xpose.msra.mxu0 0.0
        %462 = vmatpush.xpose.msra.mxu0 0.0
        %463 = vmatpush.xpose.msra.mxu0 0.0
        %464 = vmatpush.xpose.msra.mxu0 0.0
        %465 = vmatpush.xpose.msra.mxu0 0.0
        %466 = vmatpush.xpose.msra.mxu0 0.0
        %467 = vmatpush.xpose.msra.mxu0 0.0
        %468 = vmatpush.xpose.msra.mxu0 %v451
        %469 = vmatmul.f32.gmra.mxu0 %v449
        %v470 = vpop.f32.mrf.mxu0
        %v471 = vadd.f32 0.0, %v470
        %472 = vdwg.mxu0
        %473 = vrot.lane.b32.xlu0 %v332, 120
        %v474 = vpop.permute.xlu0 %473
        %475 = vrot.lane.b32.xlu0 %v332, 88
        %v476 = vpop.permute.xlu0 %475
        %v477 = vsel %vm337, %v474, 0
        %v479 = vsel %vm337, %v476, 0
        %481 = vmatpush.xpose.msra.mxu0 0.0
        %482 = vmatpush.xpose.msra.mxu0 0.0
        %483 = vmatpush.xpose.msra.mxu0 0.0
        %484 = vmatpush.xpose.msra.mxu0 0.0
        %485 = vmatpush.xpose.msra.mxu0 0.0
        %486 = vmatpush.xpose.msra.mxu0 0.0
        %487 = vmatpush.xpose.msra.mxu0 0.0
        %488 = vmatpush.xpose.msra.mxu0 0.0
        %489 = vmatpush.xpose.msra.mxu0 0.0
        %490 = vmatpush.xpose.msra.mxu0 0.0
        %491 = vmatpush.xpose.msra.mxu0 0.0
        %492 = vmatpush.xpose.msra.mxu0 0.0
        %493 = vmatpush.xpose.msra.mxu0 0.0
        %494 = vmatpush.xpose.msra.mxu0 0.0
        %495 = vmatpush.xpose.msra.mxu0 0.0
        %496 = vmatpush.xpose.msra.mxu0 %v479
        %497 = vmatmul.f32.gmra.mxu0 %v477
        %v498 = vpop.f32.mrf.mxu0
        %v499 = vadd.f32 0.0, %v498
        %500 = vdwg.mxu0
        %501 = vrot.lane.b32.xlu0 %v332, 112
        %v502 = vpop.permute.xlu0 %501
        %503 = vrot.lane.b32.xlu0 %v332, 80
        %v504 = vpop.permute.xlu0 %503
        %v505 = vsel %vm337, %v502, 0
        %v507 = vsel %vm337, %v504, 0
        %509 = vmatpush.xpose.msra.mxu0 0.0
        %510 = vmatpush.xpose.msra.mxu0 0.0
        %511 = vmatpush.xpose.msra.mxu0 0.0
        %512 = vmatpush.xpose.msra.mxu0 0.0
        %513 = vmatpush.xpose.msra.mxu0 0.0
        %514 = vmatpush.xpose.msra.mxu0 0.0
        %515 = vmatpush.xpose.msra.mxu0 0.0
        %516 = vmatpush.xpose.msra.mxu0 0.0
        %517 = vmatpush.xpose.msra.mxu0 0.0
        %518 = vmatpush.xpose.msra.mxu0 0.0
        %519 = vmatpush.xpose.msra.mxu0 0.0
        %520 = vmatpush.xpose.msra.mxu0 0.0
        %521 = vmatpush.xpose.msra.mxu0 0.0
        %522 = vmatpush.xpose.msra.mxu0 0.0
        %523 = vmatpush.xpose.msra.mxu0 0.0
        %524 = vmatpush.xpose.msra.mxu0 %v507
        %525 = vmatmul.f32.gmra.mxu0 %v505
        %v526 = vpop.f32.mrf.mxu0
        %v527 = vadd.f32 0.0, %v526
        %528 = vdwg.mxu0
        %529 = vrot.lane.b32.xlu0 %v332, 104
        %v530 = vpop.permute.xlu0 %529
        %531 = vrot.lane.b32.xlu0 %v332, 72
        %v532 = vpop.permute.xlu0 %531
        %v533 = vsel %vm337, %v530, 0
        %v535 = vsel %vm337, %v532, 0
        %537 = vmatpush.xpose.msra.mxu0 0.0
        %538 = vmatpush.xpose.msra.mxu0 0.0
        %539 = vmatpush.xpose.msra.mxu0 0.0
        %540 = vmatpush.xpose.msra.mxu0 0.0
        %541 = vmatpush.xpose.msra.mxu0 0.0
        %542 = vmatpush.xpose.msra.mxu0 0.0
        %543 = vmatpush.xpose.msra.mxu0 0.0
        %544 = vmatpush.xpose.msra.mxu0 0.0
        %545 = vmatpush.xpose.msra.mxu0 0.0
        %546 = vmatpush.xpose.msra.mxu0 0.0
        %547 = vmatpush.xpose.msra.mxu0 0.0
        %548 = vmatpush.xpose.msra.mxu0 0.0
        %549 = vmatpush.xpose.msra.mxu0 0.0
        %550 = vmatpush.xpose.msra.mxu0 0.0
        %551 = vmatpush.xpose.msra.mxu0 0.0
        %552 = vmatpush.xpose.msra.mxu0 %v535
        %553 = vmatmul.f32.gmra.mxu0 %v533
        %v554 = vpop.f32.mrf.mxu0
        %v555 = vadd.f32 0.0, %v554
        %556 = vdwg.mxu0
        %v557 = vsel %vm337, %v360, -inf
        %558 = vmax.xlane.f32.xlu0 %v557
        %v559 = vpop.xlane.xlu0 %558
        %v560 = vsel %vm337, %v388, -inf
        %561 = vmax.xlane.f32.xlu0 %v560
        %v562 = vpop.xlane.xlu0 %561
        %v563 = vsel %vm337, %v416, -inf
        %564 = vmax.xlane.f32.xlu0 %v563
        %v565 = vpop.xlane.xlu0 %564
        %v566 = vsel %vm337, %v444, -inf
        %567 = vmax.xlane.f32.xlu0 %v566
        %v568 = vpop.xlane.xlu0 %567
        %v569 = vsel %vm337, %v471, -inf
        %570 = vmax.xlane.f32.xlu0 %v569
        %v571 = vpop.xlane.xlu0 %570
        %v572 = vsel %vm337, %v499, -inf
        %573 = vmax.xlane.f32.xlu0 %v572
        %v574 = vpop.xlane.xlu0 %573
        %v575 = vsel %vm337, %v527, -inf
        %576 = vmax.xlane.f32.xlu0 %v575
        %v577 = vpop.xlane.xlu0 %576
        %v578 = vsel %vm337, %v555, -inf
        %579 = vmax.xlane.f32.xlu0 %v578
        %v580 = vpop.xlane.xlu0 %579
        %v581 = vsub.f32 %v360, %v559
        %v582 = vsub.f32 %v388, %v562
        %v583 = vsub.f32 %v416, %v565
        %v584 = vsub.f32 %v444, %v568
        %v585 = vsub.f32 %v471, %v571
        %v586 = vsub.f32 %v499, %v574
        %v587 = vsub.f32 %v527, %v577
        %v588 = vsub.f32 %v555, %v580
        %v589 = vmul.f32 %v581, 1.442695
        %v590 = vpow.pop %v589
        %v591 = vmul.f32 %v582, 1.442695
        %v592 = vpow.pop %v591
        %v593 = vmul.f32 %v583, 1.442695
        %v594 = vpow.pop %v593
        %v595 = vmul.f32 %v584, 1.442695
        %v596 = vpow.pop %v595
        %v597 = vmul.f32 %v585, 1.442695
        %v598 = vpow.pop %v597
        %v599 = vmul.f32 %v586, 1.442695
        %v600 = vpow.pop %v599
        %v601 = vmul.f32 %v587, 1.442695
        %v602 = vpow.pop %v601
        %v603 = vmul.f32 %v588, 1.442695
        %v604 = vpow.pop %v603
        %v605 = vsel %vm337, %v590, 0.0
        %606 = vadd.xlane.f32.xlu0 %v605
        %v607 = vpop.xlane.xlu0 %606
        %v608 = vsel %vm337, %v592, 0.0
        %609 = vadd.xlane.f32.xlu0 %v608
        %v610 = vpop.xlane.xlu0 %609
        %v611 = vsel %vm337, %v594, 0.0
        %612 = vadd.xlane.f32.xlu0 %v611
        %v613 = vpop.xlane.xlu0 %612
        %v614 = vsel %vm337, %v596, 0.0
        %615 = vadd.xlane.f32.xlu0 %v614
        %v616 = vpop.xlane.xlu0 %615
        %v617 = vsel %vm337, %v598, 0.0
        %618 = vadd.xlane.f32.xlu0 %v617
        %v619 = vpop.xlane.xlu0 %618
        %v620 = vsel %vm337, %v600, 0.0
        %621 = vadd.xlane.f32.xlu0 %v620
        %v622 = vpop.xlane.xlu0 %621
        %v623 = vsel %vm337, %v602, 0.0
        %624 = vadd.xlane.f32.xlu0 %v623
        %v625 = vpop.xlane.xlu0 %624
        %v626 = vsel %vm337, %v604, 0.0
        %627 = vadd.xlane.f32.xlu0 %v626
        %v628 = vpop.xlane.xlu0 %627
        %v629 = vrcp.pop %v607
        %v630 = vmul.f32 %v607, %v629
        %v631 = vsub.f32 1.0, %v630
        %v632 = vmul.f32 %v629, %v631
        %v633 = vadd.f32 %v629, %v632
        %vm634 = vweird.f32 %v607
        %vm635 = vweird.f32 %v629
        %vm636 = vmor %vm634, %vm635
        %v637 = vsel %vm636, %v629, %v633
        %v638 = vand.u32 2147483647, %v607
        %vm639 = vcmp.eq.f32.partialorder %v638, 8.507059e+37
        %v640 = vand.u32 %v607, 2147483648
        %v641 = vor.u32 1.1754944e-38, %v640
        %v642 = vsel %vm639, %v641, %v637
        %v643 = vmul.f32 %v590, %v642
        %v644 = vrcp.pop %v610
        %v645 = vmul.f32 %v610, %v644
        %v646 = vsub.f32 1.0, %v645
        %v647 = vmul.f32 %v644, %v646
        %v648 = vadd.f32 %v644, %v647
        %vm649 = vweird.f32 %v610
        %vm650 = vweird.f32 %v644
        %vm651 = vmor %vm649, %vm650
        %v652 = vsel %vm651, %v644, %v648
        %v653 = vand.u32 2147483647, %v610
        %vm654 = vcmp.eq.f32.partialorder %v653, 8.507059e+37
        %v655 = vand.u32 %v610, 2147483648
        %v656 = vor.u32 1.1754944e-38, %v655
        %v657 = vsel %vm654, %v656, %v652
        %v658 = vmul.f32 %v592, %v657
        %v659 = vrcp.pop %v613
        %v660 = vmul.f32 %v613, %v659
        %v661 = vsub.f32 1.0, %v660
        %v662 = vmul.f32 %v659, %v661
        %v663 = vadd.f32 %v659, %v662
        %vm664 = vweird.f32 %v613
        %vm665 = vweird.f32 %v659
        %vm666 = vmor %vm664, %vm665
        %v667 = vsel %vm666, %v659, %v663
        %v668 = vand.u32 2147483647, %v613
        %vm669 = vcmp.eq.f32.partialorder %v668, 8.507059e+37
        %v670 = vand.u32 %v613, 2147483648
        %v671 = vor.u32 1.1754944e-38, %v670
        %v672 = vsel %vm669, %v671, %v667
        %v673 = vmul.f32 %v594, %v672
        %v674 = vrcp.pop %v616
        %v675 = vmul.f32 %v616, %v674
        %v676 = vsub.f32 1.0, %v675
        %v677 = vmul.f32 %v674, %v676
        %v678 = vadd.f32 %v674, %v677
        %vm679 = vweird.f32 %v616
        %vm680 = vweird.f32 %v674
        %vm681 = vmor %vm679, %vm680
        %v682 = vsel %vm681, %v674, %v678
        %v683 = vand.u32 2147483647, %v616
        %vm684 = vcmp.eq.f32.partialorder %v683, 8.507059e+37
        %v685 = vand.u32 %v616, 2147483648
        %v686 = vor.u32 1.1754944e-38, %v685
        %v687 = vsel %vm684, %v686, %v682
        %v688 = vmul.f32 %v596, %v687
        %v689 = vrcp.pop %v619
        %v690 = vmul.f32 %v619, %v689
        %v691 = vsub.f32 1.0, %v690
        %v692 = vmul.f32 %v689, %v691
        %v693 = vadd.f32 %v689, %v692
        %vm694 = vweird.f32 %v619
        %vm695 = vweird.f32 %v689
        %vm696 = vmor %vm694, %vm695
        %v697 = vsel %vm696, %v689, %v693
        %v698 = vand.u32 2147483647, %v619
        %vm699 = vcmp.eq.f32.partialorder %v698, 8.507059e+37
        %v700 = vand.u32 %v619, 2147483648
        %v701 = vor.u32 1.1754944e-38, %v700
        %v702 = vsel %vm699, %v701, %v697
        %v703 = vmul.f32 %v598, %v702
        %v704 = vrcp.pop %v622
        %v705 = vmul.f32 %v622, %v704
        %v706 = vsub.f32 1.0, %v705
        %v707 = vmul.f32 %v704, %v706
        %v708 = vadd.f32 %v704, %v707
        %vm709 = vweird.f32 %v622
        %vm710 = vweird.f32 %v704
        %vm711 = vmor %vm709, %vm710
        %v712 = vsel %vm711, %v704, %v708
        %v713 = vand.u32 2147483647, %v622
        %vm714 = vcmp.eq.f32.partialorder %v713, 8.507059e+37
        %v715 = vand.u32 %v622, 2147483648
        %v716 = vor.u32 1.1754944e-38, %v715
        %v717 = vsel %vm714, %v716, %v712
        %v718 = vmul.f32 %v600, %v717
        %v719 = vrcp.pop %v625
        %v720 = vmul.f32 %v625, %v719
        %v721 = vsub.f32 1.0, %v720
        %v722 = vmul.f32 %v719, %v721
        %v723 = vadd.f32 %v719, %v722
        %vm724 = vweird.f32 %v625
        %vm725 = vweird.f32 %v719
        %vm726 = vmor %vm724, %vm725
        %v727 = vsel %vm726, %v719, %v723
        %v728 = vand.u32 2147483647, %v625
        %vm729 = vcmp.eq.f32.partialorder %v728, 8.507059e+37
        %v730 = vand.u32 %v625, 2147483648
        %v731 = vor.u32 1.1754944e-38, %v730
        %v732 = vsel %vm729, %v731, %v727
        %v733 = vmul.f32 %v602, %v732
        %v734 = vrcp.pop %v628
        %v735 = vmul.f32 %v628, %v734
        %v736 = vsub.f32 1.0, %v735
        %v737 = vmul.f32 %v734, %v736
        %v738 = vadd.f32 %v734, %v737
        %vm739 = vweird.f32 %v628
        %vm740 = vweird.f32 %v734
        %vm741 = vmor %vm739, %vm740
        %v742 = vsel %vm741, %v734, %v738
        %v743 = vand.u32 2147483647, %v628
        %vm744 = vcmp.eq.f32.partialorder %v743, 8.507059e+37
        %v745 = vand.u32 %v628, 2147483648
        %v746 = vor.u32 1.1754944e-38, %v745
        %v747 = vsel %vm744, %v746, %v742
        %v748 = vmul.f32 %v604, %v747
        %749 = vrot.lane.b32.xlu0 %v329, 64
        %v750 = vpop.permute.xlu0 %749
        %v753 = vsel %vm337, %v643, 0
        %755 = vmatpush.msra.mxu0 0.0
        %756 = vmatpush.msra.mxu0 0.0
        %757 = vmatpush.msra.mxu0 0.0
        %758 = vmatpush.msra.mxu0 0.0
        %759 = vmatpush.msra.mxu0 0.0
        %760 = vmatpush.msra.mxu0 0.0
        %761 = vmatpush.msra.mxu0 0.0
        %762 = vmatpush.msra.mxu0 0.0
        %763 = vmatpush.msra.mxu0 0.0
        %764 = vmatpush.msra.mxu0 0.0
        %765 = vmatpush.msra.mxu0 0.0
        %766 = vmatpush.msra.mxu0 0.0
        %767 = vmatpush.msra.mxu0 0.0
        %768 = vmatpush.msra.mxu0 0.0
        %769 = vmatpush.msra.mxu0 0.0
        %770 = vmatpush.msra.mxu0 %v750
        %771 = vmatmul.f32.gmra.mxu0 %v753
        %v772 = vpop.f32.mrf.mxu0
        %v773 = vadd.f32 0.0, %v772
        %774 = vdwg.mxu0
        %775 = vrot.lane.b32.xlu0 %v329, 56
        %v776 = vpop.permute.xlu0 %775
        %v779 = vsel %vm337, %v658, 0
        %781 = vmatpush.msra.mxu0 0.0
        %782 = vmatpush.msra.mxu0 0.0
        %783 = vmatpush.msra.mxu0 0.0
        %784 = vmatpush.msra.mxu0 0.0
        %785 = vmatpush.msra.mxu0 0.0
        %786 = vmatpush.msra.mxu0 0.0
        %787 = vmatpush.msra.mxu0 0.0
        %788 = vmatpush.msra.mxu0 0.0
        %789 = vmatpush.msra.mxu0 0.0
        %790 = vmatpush.msra.mxu0 0.0
        %791 = vmatpush.msra.mxu0 0.0
        %792 = vmatpush.msra.mxu0 0.0
        %793 = vmatpush.msra.mxu0 0.0
        %794 = vmatpush.msra.mxu0 0.0
        %795 = vmatpush.msra.mxu0 0.0
        %796 = vmatpush.msra.mxu0 %v776
        %797 = vmatmul.f32.gmra.mxu0 %v779
        %v798 = vpop.f32.mrf.mxu0
        %v799 = vadd.f32 0.0, %v798
        %800 = vdwg.mxu0
        %802 = vrot.lane.b32.xlu0 %v259, 32
        %v803 = vpop.permute.xlu0 %802
        %v806 = vsel %vm337, %v799, 0
        %808 = vmatpush.msra.mxu0 0.0
        %809 = vmatpush.msra.mxu0 0.0
        %810 = vmatpush.msra.mxu0 0.0
        %811 = vmatpush.msra.mxu0 0.0
        %812 = vmatpush.msra.mxu0 0.0
        %813 = vmatpush.msra.mxu0 0.0
        %814 = vmatpush.msra.mxu0 0.0
        %815 = vmatpush.msra.mxu0 0.0
        %816 = vmatpush.msra.mxu0 0.0
        %817 = vmatpush.msra.mxu0 0.0
        %818 = vmatpush.msra.mxu0 0.0
        %819 = vmatpush.msra.mxu0 0.0
        %820 = vmatpush.msra.mxu0 0.0
        %821 = vmatpush.msra.mxu0 0.0
        %822 = vmatpush.msra.mxu0 0.0
        %823 = vmatpush.msra.mxu0 %v803
        %824 = vmatmul.f32.gmra.mxu0 %v806
        %v825 = vpop.f32.mrf.mxu0
        %v826 = vadd.f32 0.0, %v825
        %827 = vdwg.mxu0
        %829 = vrot.lane.b32.xlu0 %v256, 32
        %v830 = vpop.permute.xlu0 %829
        %v833 = vsel %vm337, %v773, 0
        %835 = vmatpush.msra.mxu0 0.0
        %836 = vmatpush.msra.mxu0 0.0
        %837 = vmatpush.msra.mxu0 0.0
        %838 = vmatpush.msra.mxu0 0.0
        %839 = vmatpush.msra.mxu0 0.0
        %840 = vmatpush.msra.mxu0 0.0
        %841 = vmatpush.msra.mxu0 0.0
        %842 = vmatpush.msra.mxu0 0.0
        %843 = vmatpush.msra.mxu0 0.0
        %844 = vmatpush.msra.mxu0 0.0
        %845 = vmatpush.msra.mxu0 0.0
        %846 = vmatpush.msra.mxu0 0.0
        %847 = vmatpush.msra.mxu0 0.0
        %848 = vmatpush.msra.mxu0 0.0
        %849 = vmatpush.msra.mxu0 0.0
        %850 = vmatpush.msra.mxu0 %v830
        %851 = vmatmul.f32.gmra.mxu0 %v833
        %v852 = vpop.f32.mrf.mxu0
        %v853 = vadd.f32 %v826, %v852
        %854 = vdwg.mxu0
        %855 = vrot.lane.b32.xlu0 %v329, 48
        %v856 = vpop.permute.xlu0 %855
        %v859 = vsel %vm337, %v673, 0
        %861 = vmatpush.msra.mxu0 0.0
        %862 = vmatpush.msra.mxu0 0.0
        %863 = vmatpush.msra.mxu0 0.0
        %864 = vmatpush.msra.mxu0 0.0
        %865 = vmatpush.msra.mxu0 0.0
        %866 = vmatpush.msra.mxu0 0.0
        %867 = vmatpush.msra.mxu0 0.0
        %868 = vmatpush.msra.mxu0 0.0
        %869 = vmatpush.msra.mxu0 0.0
        %870 = vmatpush.msra.mxu0 0.0
        %871 = vmatpush.msra.mxu0 0.0
        %872 = vmatpush.msra.mxu0 0.0
        %873 = vmatpush.msra.mxu0 0.0
        %874 = vmatpush.msra.mxu0 0.0
        %875 = vmatpush.msra.mxu0 0.0
        %876 = vmatpush.msra.mxu0 %v856
        %877 = vmatmul.f32.gmra.mxu0 %v859
        %v878 = vpop.f32.mrf.mxu0
        %v879 = vadd.f32 0.0, %v878
        %880 = vdwg.mxu0
        %882 = vrot.lane.b32.xlu0 %v262, 32
        %v883 = vpop.permute.xlu0 %882
        %v886 = vsel %vm337, %v879, 0
        %888 = vmatpush.msra.mxu0 0.0
        %889 = vmatpush.msra.mxu0 0.0
        %890 = vmatpush.msra.mxu0 0.0
        %891 = vmatpush.msra.mxu0 0.0
        %892 = vmatpush.msra.mxu0 0.0
        %893 = vmatpush.msra.mxu0 0.0
        %894 = vmatpush.msra.mxu0 0.0
        %895 = vmatpush.msra.mxu0 0.0
        %896 = vmatpush.msra.mxu0 0.0
        %897 = vmatpush.msra.mxu0 0.0
        %898 = vmatpush.msra.mxu0 0.0
        %899 = vmatpush.msra.mxu0 0.0
        %900 = vmatpush.msra.mxu0 0.0
        %901 = vmatpush.msra.mxu0 0.0
        %902 = vmatpush.msra.mxu0 0.0
        %903 = vmatpush.msra.mxu0 %v883
        %904 = vmatmul.f32.gmra.mxu0 %v886
        %v905 = vpop.f32.mrf.mxu0
        %v906 = vadd.f32 0.0, %v905
        %907 = vdwg.mxu0
        %v908 = vadd.f32 %v853, %v906
        %909 = vrot.lane.b32.xlu0 %v329, 40
        %v910 = vpop.permute.xlu0 %909
        %v913 = vsel %vm337, %v688, 0
        %915 = vmatpush.msra.mxu0 0.0
        %916 = vmatpush.msra.mxu0 0.0
        %917 = vmatpush.msra.mxu0 0.0
        %918 = vmatpush.msra.mxu0 0.0
        %919 = vmatpush.msra.mxu0 0.0
        %920 = vmatpush.msra.mxu0 0.0
        %921 = vmatpush.msra.mxu0 0.0
        %922 = vmatpush.msra.mxu0 0.0
        %923 = vmatpush.msra.mxu0 0.0
        %924 = vmatpush.msra.mxu0 0.0
        %925 = vmatpush.msra.mxu0 0.0
        %926 = vmatpush.msra.mxu0 0.0
        %927 = vmatpush.msra.mxu0 0.0
        %928 = vmatpush.msra.mxu0 0.0
        %929 = vmatpush.msra.mxu0 0.0
        %930 = vmatpush.msra.mxu0 %v910
        %931 = vmatmul.f32.gmra.mxu0 %v913
        %v932 = vpop.f32.mrf.mxu0
        %v933 = vadd.f32 0.0, %v932
        %934 = vdwg.mxu0
        %936 = vrot.lane.b32.xlu0 %v265, 32
        %v937 = vpop.permute.xlu0 %936
        %v940 = vsel %vm337, %v933, 0
        %942 = vmatpush.msra.mxu0 0.0
        %943 = vmatpush.msra.mxu0 0.0
        %944 = vmatpush.msra.mxu0 0.0
        %945 = vmatpush.msra.mxu0 0.0
        %946 = vmatpush.msra.mxu0 0.0
        %947 = vmatpush.msra.mxu0 0.0
        %948 = vmatpush.msra.mxu0 0.0
        %949 = vmatpush.msra.mxu0 0.0
        %950 = vmatpush.msra.mxu0 0.0
        %951 = vmatpush.msra.mxu0 0.0
        %952 = vmatpush.msra.mxu0 0.0
        %953 = vmatpush.msra.mxu0 0.0
        %954 = vmatpush.msra.mxu0 0.0
        %955 = vmatpush.msra.mxu0 0.0
        %956 = vmatpush.msra.mxu0 0.0
        %957 = vmatpush.msra.mxu0 %v937
        %958 = vmatmul.f32.gmra.mxu0 %v940
        %v959 = vpop.f32.mrf.mxu0
        %v960 = vadd.f32 0.0, %v959
        %961 = vdwg.mxu0
        %v962 = vadd.f32 %v908, %v960
        %963 = vrot.lane.b32.xlu0 %v332, 64
        %v964 = vpop.permute.xlu0 %963
        %v967 = vsel %vm337, %v703, 0
        %969 = vmatpush.msra.mxu0 0.0
        %970 = vmatpush.msra.mxu0 0.0
        %971 = vmatpush.msra.mxu0 0.0
        %972 = vmatpush.msra.mxu0 0.0
        %973 = vmatpush.msra.mxu0 0.0
        %974 = vmatpush.msra.mxu0 0.0
        %975 = vmatpush.msra.mxu0 0.0
        %976 = vmatpush.msra.mxu0 0.0
        %977 = vmatpush.msra.mxu0 0.0
        %978 = vmatpush.msra.mxu0 0.0
        %979 = vmatpush.msra.mxu0 0.0
        %980 = vmatpush.msra.mxu0 0.0
        %981 = vmatpush.msra.mxu0 0.0
        %982 = vmatpush.msra.mxu0 0.0
        %983 = vmatpush.msra.mxu0 0.0
        %984 = vmatpush.msra.mxu0 %v964
        %985 = vmatmul.f32.gmra.mxu0 %v967
        %v986 = vpop.f32.mrf.mxu0
        %v987 = vadd.f32 0.0, %v986
        %988 = vdwg.mxu0
        %989 = vrot.lane.b32.xlu0 %v332, 56
        %v990 = vpop.permute.xlu0 %989
        %v993 = vsel %vm337, %v718, 0
        %995 = vmatpush.msra.mxu0 0.0
        %996 = vmatpush.msra.mxu0 0.0
        %997 = vmatpush.msra.mxu0 0.0
        %998 = vmatpush.msra.mxu0 0.0
        %999 = vmatpush.msra.mxu0 0.0
        %1000 = vmatpush.msra.mxu0 0.0
        %1001 = vmatpush.msra.mxu0 0.0
        %1002 = vmatpush.msra.mxu0 0.0
        %1003 = vmatpush.msra.mxu0 0.0
        %1004 = vmatpush.msra.mxu0 0.0
        %1005 = vmatpush.msra.mxu0 0.0
        %1006 = vmatpush.msra.mxu0 0.0
        %1007 = vmatpush.msra.mxu0 0.0
        %1008 = vmatpush.msra.mxu0 0.0
        %1009 = vmatpush.msra.mxu0 0.0
        %1010 = vmatpush.msra.mxu0 %v990
        %1011 = vmatmul.f32.gmra.mxu0 %v993
        %v1012 = vpop.f32.mrf.mxu0
        %v1013 = vadd.f32 0.0, %v1012
        %1014 = vdwg.mxu0
        %v1016 = vsel %vm337, %v1013, 0
        %1018 = vmatpush.msra.mxu0 0.0
        %1019 = vmatpush.msra.mxu0 0.0
        %1020 = vmatpush.msra.mxu0 0.0
        %1021 = vmatpush.msra.mxu0 0.0
        %1022 = vmatpush.msra.mxu0 0.0
        %1023 = vmatpush.msra.mxu0 0.0
        %1024 = vmatpush.msra.mxu0 0.0
        %1025 = vmatpush.msra.mxu0 0.0
        %1026 = vmatpush.msra.mxu0 0.0
        %1027 = vmatpush.msra.mxu0 0.0
        %1028 = vmatpush.msra.mxu0 0.0
        %1029 = vmatpush.msra.mxu0 0.0
        %1030 = vmatpush.msra.mxu0 0.0
        %1031 = vmatpush.msra.mxu0 0.0
        %1032 = vmatpush.msra.mxu0 0.0
        %1033 = vmatpush.msra.mxu0 %v803
        %1034 = vmatmul.f32.gmra.mxu0 %v1016
        %v1035 = vpop.f32.mrf.mxu0
        %v1036 = vadd.f32 0.0, %v1035
        %1037 = vdwg.mxu0
        %v1039 = vsel %vm337, %v987, 0
        %1041 = vmatpush.msra.mxu0 0.0
        %1042 = vmatpush.msra.mxu0 0.0
        %1043 = vmatpush.msra.mxu0 0.0
        %1044 = vmatpush.msra.mxu0 0.0
        %1045 = vmatpush.msra.mxu0 0.0
        %1046 = vmatpush.msra.mxu0 0.0
        %1047 = vmatpush.msra.mxu0 0.0
        %1048 = vmatpush.msra.mxu0 0.0
        %1049 = vmatpush.msra.mxu0 0.0
        %1050 = vmatpush.msra.mxu0 0.0
        %1051 = vmatpush.msra.mxu0 0.0
        %1052 = vmatpush.msra.mxu0 0.0
        %1053 = vmatpush.msra.mxu0 0.0
        %1054 = vmatpush.msra.mxu0 0.0
        %1055 = vmatpush.msra.mxu0 0.0
        %1056 = vmatpush.msra.mxu0 %v830
        %1057 = vmatmul.f32.gmra.mxu0 %v1039
        %v1058 = vpop.f32.mrf.mxu0
        %v1059 = vadd.f32 %v1036, %v1058
        %1060 = vdwg.mxu0
        %1061 = vrot.lane.b32.xlu0 %v332, 48
        %v1062 = vpop.permute.xlu0 %1061
        %v1065 = vsel %vm337, %v733, 0
        %1067 = vmatpush.msra.mxu0 0.0
        %1068 = vmatpush.msra.mxu0 0.0
        %1069 = vmatpush.msra.mxu0 0.0
        %1070 = vmatpush.msra.mxu0 0.0
        %1071 = vmatpush.msra.mxu0 0.0
        %1072 = vmatpush.msra.mxu0 0.0
        %1073 = vmatpush.msra.mxu0 0.0
        %1074 = vmatpush.msra.mxu0 0.0
        %1075 = vmatpush.msra.mxu0 0.0
        %1076 = vmatpush.msra.mxu0 0.0
        %1077 = vmatpush.msra.mxu0 0.0
        %1078 = vmatpush.msra.mxu0 0.0
        %1079 = vmatpush.msra.mxu0 0.0
        %1080 = vmatpush.msra.mxu0 0.0
        %1081 = vmatpush.msra.mxu0 0.0
        %1082 = vmatpush.msra.mxu0 %v1062
        %1083 = vmatmul.f32.gmra.mxu0 %v1065
        %v1084 = vpop.f32.mrf.mxu0
        %v1085 = vadd.f32 0.0, %v1084
        %1086 = vdwg.mxu0
        %v1088 = vsel %vm337, %v1085, 0
        %1090 = vmatpush.msra.mxu0 0.0
        %1091 = vmatpush.msra.mxu0 0.0
        %1092 = vmatpush.msra.mxu0 0.0
        %1093 = vmatpush.msra.mxu0 0.0
        %1094 = vmatpush.msra.mxu0 0.0
        %1095 = vmatpush.msra.mxu0 0.0
        %1096 = vmatpush.msra.mxu0 0.0
        %1097 = vmatpush.msra.mxu0 0.0
        %1098 = vmatpush.msra.mxu0 0.0
        %1099 = vmatpush.msra.mxu0 0.0
        %1100 = vmatpush.msra.mxu0 0.0
        %1101 = vmatpush.msra.mxu0 0.0
        %1102 = vmatpush.msra.mxu0 0.0
        %1103 = vmatpush.msra.mxu0 0.0
        %1104 = vmatpush.msra.mxu0 0.0
        %1105 = vmatpush.msra.mxu0 %v883
        %1106 = vmatmul.f32.gmra.mxu0 %v1088
        %v1107 = vpop.f32.mrf.mxu0
        %v1108 = vadd.f32 0.0, %v1107
        %1109 = vdwg.mxu0
        %v1110 = vadd.f32 %v1059, %v1108
        %1111 = vrot.lane.b32.xlu0 %v332, 40
        %v1112 = vpop.permute.xlu0 %1111
        %v1115 = vsel %vm337, %v748, 0
        %1117 = vmatpush.msra.mxu0 0.0
        %1118 = vmatpush.msra.mxu0 0.0
        %1119 = vmatpush.msra.mxu0 0.0
        %1120 = vmatpush.msra.mxu0 0.0
        %1121 = vmatpush.msra.mxu0 0.0
        %1122 = vmatpush.msra.mxu0 0.0
        %1123 = vmatpush.msra.mxu0 0.0
        %1124 = vmatpush.msra.mxu0 0.0
        %1125 = vmatpush.msra.mxu0 0.0
        %1126 = vmatpush.msra.mxu0 0.0
        %1127 = vmatpush.msra.mxu0 0.0
        %1128 = vmatpush.msra.mxu0 0.0
        %1129 = vmatpush.msra.mxu0 0.0
        %1130 = vmatpush.msra.mxu0 0.0
        %1131 = vmatpush.msra.mxu0 0.0
        %1132 = vmatpush.msra.mxu0 %v1112
        %1133 = vmatmul.f32.gmra.mxu0 %v1115
        %v1134 = vpop.f32.mrf.mxu0
        %v1135 = vadd.f32 0.0, %v1134
        %1136 = vdwg.mxu0
        %v1138 = vsel %vm337, %v1135, 0
        %1140 = vmatpush.msra.mxu0 0.0
        %1141 = vmatpush.msra.mxu0 0.0
        %1142 = vmatpush.msra.mxu0 0.0
        %1143 = vmatpush.msra.mxu0 0.0
        %1144 = vmatpush.msra.mxu0 0.0
        %1145 = vmatpush.msra.mxu0 0.0
        %1146 = vmatpush.msra.mxu0 0.0
        %1147 = vmatpush.msra.mxu0 0.0
        %1148 = vmatpush.msra.mxu0 0.0
        %1149 = vmatpush.msra.mxu0 0.0
        %1150 = vmatpush.msra.mxu0 0.0
        %1151 = vmatpush.msra.mxu0 0.0
        %1152 = vmatpush.msra.mxu0 0.0
        %1153 = vmatpush.msra.mxu0 0.0
        %1154 = vmatpush.msra.mxu0 0.0
        %1155 = vmatpush.msra.mxu0 %v937
        %1156 = vmatmul.f32.gmra.mxu0 %v1138
        %v1157 = vpop.f32.mrf.mxu0
        %v1158 = vadd.f32 0.0, %v1157
        %1159 = vdwg.mxu0
        %v1160 = vadd.f32 %v1110, %v1158
        %v1161 = vperm.slane %v288, 1
        %v1162 = vadd.f32 %v962, %v1161
        %v1163 = vadd.f32 %v1160, %v1161
        %v1164 = vadd.f32 %v297, %v1162
        %v1165 = vadd.f32 %v298, %v1163
        %v1166 = vsel %vm304, %v1164, 0.0
        %1167 = vadd.xlane.f32.xlu0 %v1166
        %v1168 = vpop.xlane.xlu0 %1167
        %v1169 = vsel %vm304, %v1165, 0.0
        %1170 = vadd.xlane.f32.xlu0 %v1169
        %v1171 = vpop.xlane.xlu0 %1170
        %v1172 = vrcp.pop 32.0
        %v1173 = vmul.f32 32.0, %v1172
        %v1174 = vsub.f32 1.0, %v1173
        %v1175 = vmul.f32 %v1172, %v1174
        %v1176 = vadd.f32 %v1172, %v1175
        %vm1177 = vweird.f32 %v1172
        %v1178 = vsel %vm1177, %v1172, %v1176
        %v1179 = vmul.f32 %v1168, %v1178
        %v1180 = vmul.f32 %v1171, %v1178
        %v1181 = vsub.f32 %v1164, %v1179
        %v1182 = vsub.f32 %v1165, %v1180
        %v1183 = vmul.f32 %v1181, %v1181
        %v1184 = vmul.f32 %v1182, %v1182
        %v1185 = vsel %vm304, %v1183, 0.0
        %1186 = vadd.xlane.f32.xlu0 %v1185
        %v1187 = vpop.xlane.xlu0 %1186
        %v1188 = vsel %vm304, %v1184, 0.0
        %1189 = vadd.xlane.f32.xlu0 %v1188
        %v1190 = vpop.xlane.xlu0 %1189
        %v1191 = vmul.f32 %v1187, %v1178
        %v1192 = vmul.f32 %v1190, %v1178
        %v1193 = vadd.f32 %v1191, 1e-05
        %v1194 = vadd.f32 %v1192, 1e-05
        %v1195 = vrsqrt.pop %v1193
        %v1196 = vmul.f32 %v1195, %v1193
        %v1197 = vmul.f32 %v1196, %v1195
        %v1198 = vmul.f32 0.5, %v1197
        %v1199 = vsub.f32 1.5, %v1198
        %v1200 = vmul.f32 %v1195, %v1199
        %vm1201 = vweird.f32 %v1193
        %vm1202 = vweird.f32 %v1195
        %vm1203 = vmor %vm1201, %vm1202
        %v1204 = vsel %vm1203, %v1195, %v1200
        %v1205 = vrsqrt.pop %v1194
        %v1206 = vmul.f32 %v1205, %v1194
        %v1207 = vmul.f32 %v1206, %v1205
        %v1208 = vmul.f32 0.5, %v1207
        %v1209 = vsub.f32 1.5, %v1208
        %v1210 = vmul.f32 %v1205, %v1209
        %vm1211 = vweird.f32 %v1194
        %vm1212 = vweird.f32 %v1205
        %vm1213 = vmor %vm1211, %vm1212
        %v1214 = vsel %vm1213, %v1205, %v1210
        %v1215 = vmul.f32 %v1181, %v1204
        %v1216 = vmul.f32 %v1182, %v1214
        %v1217 = vperm.slane %v288, 4
        %v1218 = vmul.f32 %v1215, %v1217
        %v1219 = vmul.f32 %v1216, %v1217
        %1221 = vrot.lane.b32.xlu0 %v1217, 96
        %v1222 = vpop.permute.xlu0 %1221
        %v1224 = vadd.f32 %v1218, %v1222
        %v1225 = vadd.f32 %v1219, %v1222
        %1227 = vrot.lane.b32.xlu0 %v1161, 96
        %v1228 = vpop.permute.xlu0 %1227
        %v1231 = vsel %vm304, %v1224, 0
        %v1234 = vsel %vm304, %v1225, 0
        %1236 = vmatpush.msra.mxu0 0.0
        %1237 = vmatpush.msra.mxu0 0.0
        %1238 = vmatpush.msra.mxu0 0.0
        %1239 = vmatpush.msra.mxu0 0.0
        %1240 = vmatpush.msra.mxu0 0.0
        %1241 = vmatpush.msra.mxu0 0.0
        %1242 = vmatpush.msra.mxu0 0.0
        %1243 = vmatpush.msra.mxu0 0.0
        %1244 = vmatpush.msra.mxu0 0.0
        %1245 = vmatpush.msra.mxu0 0.0
        %1246 = vmatpush.msra.mxu0 0.0
        %1247 = vmatpush.msra.mxu0 0.0
        %1248 = vmatpush.msra.mxu0 %v266
        %1249 = vmatpush.msra.mxu0 %v263
        %1250 = vmatpush.msra.mxu0 %v260
        %1251 = vmatpush.msra.mxu0 %v257
        %1252 = vmatmul.f32.gmra.mxu0 %v1231
        %v1253 = vpop.f32.mrf.mxu0
        %v1254 = vadd.f32 %v1228, %v1253
        %1255 = vmatmul.f32.gmra.mxu0 %v1234
        %v1256 = vpop.f32.mrf.mxu0
        %v1257 = vadd.f32 %v1228, %v1256
        %1258 = vdwg.mxu0
        %v1259 = vperm.slane %v288, 2
        %1264 = vrot.lane.b32.xlu0 %v257, 96
        %v1265 = vpop.permute.xlu0 %1264
        %1266 = vrot.lane.b32.xlu0 %v260, 96
        %v1267 = vpop.permute.xlu0 %1266
        %1268 = vrot.lane.b32.xlu0 %v263, 96
        %v1269 = vpop.permute.xlu0 %1268
        %1270 = vrot.lane.b32.xlu0 %v266, 96
        %v1271 = vpop.permute.xlu0 %1270
        %v1277 = vsel %vm304, %v299, 0
        %v1280 = vsel %vm304, %v300, 0
        %v1283 = vsel %vm304, %v301, 0
        %v1286 = vsel %vm304, %v302, 0
        %1288 = vmatpush.msra.mxu0 0.0
        %1289 = vmatpush.msra.mxu0 0.0
        %1290 = vmatpush.msra.mxu0 0.0
        %1291 = vmatpush.msra.mxu0 0.0
        %1292 = vmatpush.msra.mxu0 0.0
        %1293 = vmatpush.msra.mxu0 0.0
        %1294 = vmatpush.msra.mxu0 0.0
        %1295 = vmatpush.msra.mxu0 0.0
        %1296 = vmatpush.msra.mxu0 0.0
        %1297 = vmatpush.msra.mxu0 0.0
        %1298 = vmatpush.msra.mxu0 0.0
        %1299 = vmatpush.msra.mxu0 0.0
        %1300 = vmatpush.msra.mxu0 %v1271
        %1301 = vmatpush.msra.mxu0 %v1269
        %1302 = vmatpush.msra.mxu0 %v1267
        %1303 = vmatpush.msra.mxu0 %v1265
        %1304 = vmatmul.f32.gmra.mxu0 %v1277
        %v1305 = vpop.f32.mrf.mxu0
        %v1306 = vadd.f32 %v1259, %v1305
        %1307 = vmatmul.f32.gmra.mxu0 %v1280
        %v1308 = vpop.f32.mrf.mxu0
        %v1309 = vadd.f32 %v1259, %v1308
        %1310 = vmatmul.f32.gmra.mxu0 %v1283
        %v1311 = vpop.f32.mrf.mxu0
        %v1312 = vadd.f32 %v1259, %v1311
        %1313 = vmatmul.f32.gmra.mxu0 %v1286
        %v1314 = vpop.f32.mrf.mxu0
        %v1315 = vadd.f32 %v1259, %v1314
        %1316 = vdwg.mxu0
        %v1318 = vsel %vm337, %v1254, 0
        %v1321 = vsel %vm337, %v1306, 0
        %v1324 = vsel %vm337, %v1309, 0
        %1326 = vmatpush.xpose.msra.mxu0 0.0
        %1327 = vmatpush.xpose.msra.mxu0 0.0
        %1328 = vmatpush.xpose.msra.mxu0 0.0
        %1329 = vmatpush.xpose.msra.mxu0 0.0
        %1330 = vmatpush.xpose.msra.mxu0 0.0
        %1331 = vmatpush.xpose.msra.mxu0 0.0
        %1332 = vmatpush.xpose.msra.mxu0 0.0
        %1333 = vmatpush.xpose.msra.mxu0 0.0
        %1334 = vmatpush.xpose.msra.mxu0 0.0
        %1335 = vmatpush.xpose.msra.mxu0 0.0
        %1336 = vmatpush.xpose.msra.mxu0 0.0
        %1337 = vmatpush.xpose.msra.mxu0 0.0
        %1338 = vmatpush.xpose.msra.mxu0 0.0
        %1339 = vmatpush.xpose.msra.mxu0 0.0
        %1340 = vmatpush.xpose.msra.mxu0 %v1324
        %1341 = vmatpush.xpose.msra.mxu0 %v1321
        %1342 = vmatmul.f32.gmra.mxu0 %v1318
        %v1343 = vpop.f32.mrf.mxu0
        %v1344 = vadd.f32 0.0, %v1343
        %1345 = vdwg.mxu0
        %1346 = vrot.lane.b32.xlu0 %v1254, 120
        %v1347 = vpop.permute.xlu0 %1346
        %1348 = vrot.lane.b32.xlu0 %v1306, 120
        %v1349 = vpop.permute.xlu0 %1348
        %1350 = vrot.lane.b32.xlu0 %v1309, 120
        %v1351 = vpop.permute.xlu0 %1350
        %v1352 = vsel %vm337, %v1347, 0
        %v1354 = vsel %vm337, %v1349, 0
        %v1356 = vsel %vm337, %v1351, 0
        %1358 = vmatpush.xpose.msra.mxu0 0.0
        %1359 = vmatpush.xpose.msra.mxu0 0.0
        %1360 = vmatpush.xpose.msra.mxu0 0.0
        %1361 = vmatpush.xpose.msra.mxu0 0.0
        %1362 = vmatpush.xpose.msra.mxu0 0.0
        %1363 = vmatpush.xpose.msra.mxu0 0.0
        %1364 = vmatpush.xpose.msra.mxu0 0.0
        %1365 = vmatpush.xpose.msra.mxu0 0.0
        %1366 = vmatpush.xpose.msra.mxu0 0.0
        %1367 = vmatpush.xpose.msra.mxu0 0.0
        %1368 = vmatpush.xpose.msra.mxu0 0.0
        %1369 = vmatpush.xpose.msra.mxu0 0.0
        %1370 = vmatpush.xpose.msra.mxu0 0.0
        %1371 = vmatpush.xpose.msra.mxu0 0.0
        %1372 = vmatpush.xpose.msra.mxu0 %v1356
        %1373 = vmatpush.xpose.msra.mxu0 %v1354
        %1374 = vmatmul.f32.gmra.mxu0 %v1352
        %v1375 = vpop.f32.mrf.mxu0
        %v1376 = vadd.f32 0.0, %v1375
        %1377 = vdwg.mxu0
        %1378 = vrot.lane.b32.xlu0 %v1254, 112
        %v1379 = vpop.permute.xlu0 %1378
        %1380 = vrot.lane.b32.xlu0 %v1306, 112
        %v1381 = vpop.permute.xlu0 %1380
        %1382 = vrot.lane.b32.xlu0 %v1309, 112
        %v1383 = vpop.permute.xlu0 %1382
        %v1384 = vsel %vm337, %v1379, 0
        %v1386 = vsel %vm337, %v1381, 0
        %v1388 = vsel %vm337, %v1383, 0
        %1390 = vmatpush.xpose.msra.mxu0 0.0
        %1391 = vmatpush.xpose.msra.mxu0 0.0
        %1392 = vmatpush.xpose.msra.mxu0 0.0
        %1393 = vmatpush.xpose.msra.mxu0 0.0
        %1394 = vmatpush.xpose.msra.mxu0 0.0
        %1395 = vmatpush.xpose.msra.mxu0 0.0
        %1396 = vmatpush.xpose.msra.mxu0 0.0
        %1397 = vmatpush.xpose.msra.mxu0 0.0
        %1398 = vmatpush.xpose.msra.mxu0 0.0
        %1399 = vmatpush.xpose.msra.mxu0 0.0
        %1400 = vmatpush.xpose.msra.mxu0 0.0
        %1401 = vmatpush.xpose.msra.mxu0 0.0
        %1402 = vmatpush.xpose.msra.mxu0 0.0
        %1403 = vmatpush.xpose.msra.mxu0 0.0
        %1404 = vmatpush.xpose.msra.mxu0 %v1388
        %1405 = vmatpush.xpose.msra.mxu0 %v1386
        %1406 = vmatmul.f32.gmra.mxu0 %v1384
        %v1407 = vpop.f32.mrf.mxu0
        %v1408 = vadd.f32 0.0, %v1407
        %1409 = vdwg.mxu0
        %1410 = vrot.lane.b32.xlu0 %v1254, 104
        %v1411 = vpop.permute.xlu0 %1410
        %1412 = vrot.lane.b32.xlu0 %v1306, 104
        %v1413 = vpop.permute.xlu0 %1412
        %1414 = vrot.lane.b32.xlu0 %v1309, 104
        %v1415 = vpop.permute.xlu0 %1414
        %v1416 = vsel %vm337, %v1411, 0
        %v1418 = vsel %vm337, %v1413, 0
        %v1420 = vsel %vm337, %v1415, 0
        %1422 = vmatpush.xpose.msra.mxu0 0.0
        %1423 = vmatpush.xpose.msra.mxu0 0.0
        %1424 = vmatpush.xpose.msra.mxu0 0.0
        %1425 = vmatpush.xpose.msra.mxu0 0.0
        %1426 = vmatpush.xpose.msra.mxu0 0.0
        %1427 = vmatpush.xpose.msra.mxu0 0.0
        %1428 = vmatpush.xpose.msra.mxu0 0.0
        %1429 = vmatpush.xpose.msra.mxu0 0.0
        %1430 = vmatpush.xpose.msra.mxu0 0.0
        %1431 = vmatpush.xpose.msra.mxu0 0.0
        %1432 = vmatpush.xpose.msra.mxu0 0.0
        %1433 = vmatpush.xpose.msra.mxu0 0.0
        %1434 = vmatpush.xpose.msra.mxu0 0.0
        %1435 = vmatpush.xpose.msra.mxu0 0.0
        %1436 = vmatpush.xpose.msra.mxu0 %v1420
        %1437 = vmatpush.xpose.msra.mxu0 %v1418
        %1438 = vmatmul.f32.gmra.mxu0 %v1416
        %v1439 = vpop.f32.mrf.mxu0
        %v1440 = vadd.f32 0.0, %v1439
        %1441 = vdwg.mxu0
        %v1443 = vsel %vm337, %v1257, 0
        %v1446 = vsel %vm337, %v1312, 0
        %v1449 = vsel %vm337, %v1315, 0
        %1451 = vmatpush.xpose.msra.mxu0 0.0
        %1452 = vmatpush.xpose.msra.mxu0 0.0
        %1453 = vmatpush.xpose.msra.mxu0 0.0
        %1454 = vmatpush.xpose.msra.mxu0 0.0
        %1455 = vmatpush.xpose.msra.mxu0 0.0
        %1456 = vmatpush.xpose.msra.mxu0 0.0
        %1457 = vmatpush.xpose.msra.mxu0 0.0
        %1458 = vmatpush.xpose.msra.mxu0 0.0
        %1459 = vmatpush.xpose.msra.mxu0 0.0
        %1460 = vmatpush.xpose.msra.mxu0 0.0
        %1461 = vmatpush.xpose.msra.mxu0 0.0
        %1462 = vmatpush.xpose.msra.mxu0 0.0
        %1463 = vmatpush.xpose.msra.mxu0 0.0
        %1464 = vmatpush.xpose.msra.mxu0 0.0
        %1465 = vmatpush.xpose.msra.mxu0 %v1449
        %1466 = vmatpush.xpose.msra.mxu0 %v1446
        %1467 = vmatmul.f32.gmra.mxu0 %v1443
        %v1468 = vpop.f32.mrf.mxu0
        %v1469 = vadd.f32 0.0, %v1468
        %1470 = vdwg.mxu0
        %1471 = vrot.lane.b32.xlu0 %v1257, 120
        %v1472 = vpop.permute.xlu0 %1471
        %1473 = vrot.lane.b32.xlu0 %v1312, 120
        %v1474 = vpop.permute.xlu0 %1473
        %1475 = vrot.lane.b32.xlu0 %v1315, 120
        %v1476 = vpop.permute.xlu0 %1475
        %v1477 = vsel %vm337, %v1472, 0
        %v1479 = vsel %vm337, %v1474, 0
        %v1481 = vsel %vm337, %v1476, 0
        %1483 = vmatpush.xpose.msra.mxu0 0.0
        %1484 = vmatpush.xpose.msra.mxu0 0.0
        %1485 = vmatpush.xpose.msra.mxu0 0.0
        %1486 = vmatpush.xpose.msra.mxu0 0.0
        %1487 = vmatpush.xpose.msra.mxu0 0.0
        %1488 = vmatpush.xpose.msra.mxu0 0.0
        %1489 = vmatpush.xpose.msra.mxu0 0.0
        %1490 = vmatpush.xpose.msra.mxu0 0.0
        %1491 = vmatpush.xpose.msra.mxu0 0.0
        %1492 = vmatpush.xpose.msra.mxu0 0.0
        %1493 = vmatpush.xpose.msra.mxu0 0.0
        %1494 = vmatpush.xpose.msra.mxu0 0.0
        %1495 = vmatpush.xpose.msra.mxu0 0.0
        %1496 = vmatpush.xpose.msra.mxu0 0.0
        %1497 = vmatpush.xpose.msra.mxu0 %v1481
        %1498 = vmatpush.xpose.msra.mxu0 %v1479
        %1499 = vmatmul.f32.gmra.mxu0 %v1477
        %v1500 = vpop.f32.mrf.mxu0
        %v1501 = vadd.f32 0.0, %v1500
        %1502 = vdwg.mxu0
        %1503 = vrot.lane.b32.xlu0 %v1257, 112
        %v1504 = vpop.permute.xlu0 %1503
        %1505 = vrot.lane.b32.xlu0 %v1312, 112
        %v1506 = vpop.permute.xlu0 %1505
        %1507 = vrot.lane.b32.xlu0 %v1315, 112
        %v1508 = vpop.permute.xlu0 %1507
        %v1509 = vsel %vm337, %v1504, 0
        %v1511 = vsel %vm337, %v1506, 0
        %v1513 = vsel %vm337, %v1508, 0
        %1515 = vmatpush.xpose.msra.mxu0 0.0
        %1516 = vmatpush.xpose.msra.mxu0 0.0
        %1517 = vmatpush.xpose.msra.mxu0 0.0
        %1518 = vmatpush.xpose.msra.mxu0 0.0
        %1519 = vmatpush.xpose.msra.mxu0 0.0
        %1520 = vmatpush.xpose.msra.mxu0 0.0
        %1521 = vmatpush.xpose.msra.mxu0 0.0
        %1522 = vmatpush.xpose.msra.mxu0 0.0
        %1523 = vmatpush.xpose.msra.mxu0 0.0
        %1524 = vmatpush.xpose.msra.mxu0 0.0
        %1525 = vmatpush.xpose.msra.mxu0 0.0
        %1526 = vmatpush.xpose.msra.mxu0 0.0
        %1527 = vmatpush.xpose.msra.mxu0 0.0
        %1528 = vmatpush.xpose.msra.mxu0 0.0
        %1529 = vmatpush.xpose.msra.mxu0 %v1513
        %1530 = vmatpush.xpose.msra.mxu0 %v1511
        %1531 = vmatmul.f32.gmra.mxu0 %v1509
        %v1532 = vpop.f32.mrf.mxu0
        %v1533 = vadd.f32 0.0, %v1532
        %1534 = vdwg.mxu0
        %1535 = vrot.lane.b32.xlu0 %v1257, 104
        %v1536 = vpop.permute.xlu0 %1535
        %1537 = vrot.lane.b32.xlu0 %v1312, 104
        %v1538 = vpop.permute.xlu0 %1537
        %1539 = vrot.lane.b32.xlu0 %v1315, 104
        %v1540 = vpop.permute.xlu0 %1539
        %v1541 = vsel %vm337, %v1536, 0
        %v1543 = vsel %vm337, %v1538, 0
        %v1545 = vsel %vm337, %v1540, 0
        %1547 = vmatpush.xpose.msra.mxu0 0.0
        %1548 = vmatpush.xpose.msra.mxu0 0.0
        %1549 = vmatpush.xpose.msra.mxu0 0.0
        %1550 = vmatpush.xpose.msra.mxu0 0.0
        %1551 = vmatpush.xpose.msra.mxu0 0.0
        %1552 = vmatpush.xpose.msra.mxu0 0.0
        %1553 = vmatpush.xpose.msra.mxu0 0.0
        %1554 = vmatpush.xpose.msra.mxu0 0.0
        %1555 = vmatpush.xpose.msra.mxu0 0.0
        %1556 = vmatpush.xpose.msra.mxu0 0.0
        %1557 = vmatpush.xpose.msra.mxu0 0.0
        %1558 = vmatpush.xpose.msra.mxu0 0.0
        %1559 = vmatpush.xpose.msra.mxu0 0.0
        %1560 = vmatpush.xpose.msra.mxu0 0.0
        %1561 = vmatpush.xpose.msra.mxu0 %v1545
        %1562 = vmatpush.xpose.msra.mxu0 %v1543
        %1563 = vmatmul.f32.gmra.mxu0 %v1541
        %v1564 = vpop.f32.mrf.mxu0
        %v1565 = vadd.f32 0.0, %v1564
        %1566 = vdwg.mxu0
        %vm1567 = vcmask 130048
        %v1568 = vsel %vm1567, %v1344, -inf
        %1569 = vmax.xlane.f32.xlu0 %v1568
        %v1570 = vpop.xlane.xlu0 %1569
        %v1571 = vsel %vm1567, %v1376, -inf
        %1572 = vmax.xlane.f32.xlu0 %v1571
        %v1573 = vpop.xlane.xlu0 %1572
        %v1574 = vsel %vm1567, %v1408, -inf
        %1575 = vmax.xlane.f32.xlu0 %v1574
        %v1576 = vpop.xlane.xlu0 %1575
        %v1577 = vsel %vm1567, %v1440, -inf
        %1578 = vmax.xlane.f32.xlu0 %v1577
        %v1579 = vpop.xlane.xlu0 %1578
        %v1580 = vsel %vm1567, %v1469, -inf
        %1581 = vmax.xlane.f32.xlu0 %v1580
        %v1582 = vpop.xlane.xlu0 %1581
        %v1583 = vsel %vm1567, %v1501, -inf
        %1584 = vmax.xlane.f32.xlu0 %v1583
        %v1585 = vpop.xlane.xlu0 %1584
        %v1586 = vsel %vm1567, %v1533, -inf
        %1587 = vmax.xlane.f32.xlu0 %v1586
        %v1588 = vpop.xlane.xlu0 %1587
        %v1589 = vsel %vm1567, %v1565, -inf
        %1590 = vmax.xlane.f32.xlu0 %v1589
        %v1591 = vpop.xlane.xlu0 %1590
        %v1592 = vsub.f32 %v1344, %v1570
        %v1593 = vsub.f32 %v1376, %v1573
        %v1594 = vsub.f32 %v1408, %v1576
        %v1595 = vsub.f32 %v1440, %v1579
        %v1596 = vsub.f32 %v1469, %v1582
        %v1597 = vsub.f32 %v1501, %v1585
        %v1598 = vsub.f32 %v1533, %v1588
        %v1599 = vsub.f32 %v1565, %v1591
        %v1600 = vmul.f32 %v1592, 1.442695
        %v1601 = vpow.pop %v1600
        %v1602 = vmul.f32 %v1593, 1.442695
        %v1603 = vpow.pop %v1602
        %v1604 = vmul.f32 %v1594, 1.442695
        %v1605 = vpow.pop %v1604
        %v1606 = vmul.f32 %v1595, 1.442695
        %v1607 = vpow.pop %v1606
        %v1608 = vmul.f32 %v1596, 1.442695
        %v1609 = vpow.pop %v1608
        %v1610 = vmul.f32 %v1597, 1.442695
        %v1611 = vpow.pop %v1610
        %v1612 = vmul.f32 %v1598, 1.442695
        %v1613 = vpow.pop %v1612
        %v1614 = vmul.f32 %v1599, 1.442695
        %v1615 = vpow.pop %v1614
        %v1616 = vsel %vm1567, %v1601, 0.0
        %1617 = vadd.xlane.f32.xlu0 %v1616
        %v1618 = vpop.xlane.xlu0 %1617
        %v1619 = vsel %vm1567, %v1603, 0.0
        %1620 = vadd.xlane.f32.xlu0 %v1619
        %v1621 = vpop.xlane.xlu0 %1620
        %v1622 = vsel %vm1567, %v1605, 0.0
        %1623 = vadd.xlane.f32.xlu0 %v1622
        %v1624 = vpop.xlane.xlu0 %1623
        %v1625 = vsel %vm1567, %v1607, 0.0
        %1626 = vadd.xlane.f32.xlu0 %v1625
        %v1627 = vpop.xlane.xlu0 %1626
        %v1628 = vsel %vm1567, %v1609, 0.0
        %1629 = vadd.xlane.f32.xlu0 %v1628
        %v1630 = vpop.xlane.xlu0 %1629
        %v1631 = vsel %vm1567, %v1611, 0.0
        %1632 = vadd.xlane.f32.xlu0 %v1631
        %v1633 = vpop.xlane.xlu0 %1632
        %v1634 = vsel %vm1567, %v1613, 0.0
        %1635 = vadd.xlane.f32.xlu0 %v1634
        %v1636 = vpop.xlane.xlu0 %1635
        %v1637 = vsel %vm1567, %v1615, 0.0
        %1638 = vadd.xlane.f32.xlu0 %v1637
        %v1639 = vpop.xlane.xlu0 %1638
        %v1640 = vrcp.pop %v1618
        %v1641 = vmul.f32 %v1618, %v1640
        %v1642 = vsub.f32 1.0, %v1641
        %v1643 = vmul.f32 %v1640, %v1642
        %v1644 = vadd.f32 %v1640, %v1643
        %vm1645 = vweird.f32 %v1618
        %vm1646 = vweird.f32 %v1640
        %vm1647 = vmor %vm1645, %vm1646
        %v1648 = vsel %vm1647, %v1640, %v1644
        %v1649 = vand.u32 2147483647, %v1618
        %vm1650 = vcmp.eq.f32.partialorder %v1649, 8.507059e+37
        %v1651 = vand.u32 %v1618, 2147483648
        %v1652 = vor.u32 1.1754944e-38, %v1651
        %v1653 = vsel %vm1650, %v1652, %v1648
        %v1654 = vmul.f32 %v1601, %v1653
        %v1655 = vrcp.pop %v1621
        %v1656 = vmul.f32 %v1621, %v1655
        %v1657 = vsub.f32 1.0, %v1656
        %v1658 = vmul.f32 %v1655, %v1657
        %v1659 = vadd.f32 %v1655, %v1658
        %vm1660 = vweird.f32 %v1621
        %vm1661 = vweird.f32 %v1655
        %vm1662 = vmor %vm1660, %vm1661
        %v1663 = vsel %vm1662, %v1655, %v1659
        %v1664 = vand.u32 2147483647, %v1621
        %vm1665 = vcmp.eq.f32.partialorder %v1664, 8.507059e+37
        %v1666 = vand.u32 %v1621, 2147483648
        %v1667 = vor.u32 1.1754944e-38, %v1666
        %v1668 = vsel %vm1665, %v1667, %v1663
        %v1669 = vmul.f32 %v1603, %v1668
        %v1670 = vrcp.pop %v1624
        %v1671 = vmul.f32 %v1624, %v1670
        %v1672 = vsub.f32 1.0, %v1671
        %v1673 = vmul.f32 %v1670, %v1672
        %v1674 = vadd.f32 %v1670, %v1673
        %vm1675 = vweird.f32 %v1624
        %vm1676 = vweird.f32 %v1670
        %vm1677 = vmor %vm1675, %vm1676
        %v1678 = vsel %vm1677, %v1670, %v1674
        %v1679 = vand.u32 2147483647, %v1624
        %vm1680 = vcmp.eq.f32.partialorder %v1679, 8.507059e+37
        %v1681 = vand.u32 %v1624, 2147483648
        %v1682 = vor.u32 1.1754944e-38, %v1681
        %v1683 = vsel %vm1680, %v1682, %v1678
        %v1684 = vmul.f32 %v1605, %v1683
        %v1685 = vrcp.pop %v1627
        %v1686 = vmul.f32 %v1627, %v1685
        %v1687 = vsub.f32 1.0, %v1686
        %v1688 = vmul.f32 %v1685, %v1687
        %v1689 = vadd.f32 %v1685, %v1688
        %vm1690 = vweird.f32 %v1627
        %vm1691 = vweird.f32 %v1685
        %vm1692 = vmor %vm1690, %vm1691
        %v1693 = vsel %vm1692, %v1685, %v1689
        %v1694 = vand.u32 2147483647, %v1627
        %vm1695 = vcmp.eq.f32.partialorder %v1694, 8.507059e+37
        %v1696 = vand.u32 %v1627, 2147483648
        %v1697 = vor.u32 1.1754944e-38, %v1696
        %v1698 = vsel %vm1695, %v1697, %v1693
        %v1699 = vmul.f32 %v1607, %v1698
        %v1700 = vrcp.pop %v1630
        %v1701 = vmul.f32 %v1630, %v1700
        %v1702 = vsub.f32 1.0, %v1701
        %v1703 = vmul.f32 %v1700, %v1702
        %v1704 = vadd.f32 %v1700, %v1703
        %vm1705 = vweird.f32 %v1630
        %vm1706 = vweird.f32 %v1700
        %vm1707 = vmor %vm1705, %vm1706
        %v1708 = vsel %vm1707, %v1700, %v1704
        %v1709 = vand.u32 2147483647, %v1630
        %vm1710 = vcmp.eq.f32.partialorder %v1709, 8.507059e+37
        %v1711 = vand.u32 %v1630, 2147483648
        %v1712 = vor.u32 1.1754944e-38, %v1711
        %v1713 = vsel %vm1710, %v1712, %v1708
        %v1714 = vmul.f32 %v1609, %v1713
        %v1715 = vrcp.pop %v1633
        %v1716 = vmul.f32 %v1633, %v1715
        %v1717 = vsub.f32 1.0, %v1716
        %v1718 = vmul.f32 %v1715, %v1717
        %v1719 = vadd.f32 %v1715, %v1718
        %vm1720 = vweird.f32 %v1633
        %vm1721 = vweird.f32 %v1715
        %vm1722 = vmor %vm1720, %vm1721
        %v1723 = vsel %vm1722, %v1715, %v1719
        %v1724 = vand.u32 2147483647, %v1633
        %vm1725 = vcmp.eq.f32.partialorder %v1724, 8.507059e+37
        %v1726 = vand.u32 %v1633, 2147483648
        %v1727 = vor.u32 1.1754944e-38, %v1726
        %v1728 = vsel %vm1725, %v1727, %v1723
        %v1729 = vmul.f32 %v1611, %v1728
        %v1730 = vrcp.pop %v1636
        %v1731 = vmul.f32 %v1636, %v1730
        %v1732 = vsub.f32 1.0, %v1731
        %v1733 = vmul.f32 %v1730, %v1732
        %v1734 = vadd.f32 %v1730, %v1733
        %vm1735 = vweird.f32 %v1636
        %vm1736 = vweird.f32 %v1730
        %vm1737 = vmor %vm1735, %vm1736
        %v1738 = vsel %vm1737, %v1730, %v1734
        %v1739 = vand.u32 2147483647, %v1636
        %vm1740 = vcmp.eq.f32.partialorder %v1739, 8.507059e+37
        %v1741 = vand.u32 %v1636, 2147483648
        %v1742 = vor.u32 1.1754944e-38, %v1741
        %v1743 = vsel %vm1740, %v1742, %v1738
        %v1744 = vmul.f32 %v1613, %v1743
        %v1745 = vrcp.pop %v1639
        %v1746 = vmul.f32 %v1639, %v1745
        %v1747 = vsub.f32 1.0, %v1746
        %v1748 = vmul.f32 %v1745, %v1747
        %v1749 = vadd.f32 %v1745, %v1748
        %vm1750 = vweird.f32 %v1639
        %vm1751 = vweird.f32 %v1745
        %vm1752 = vmor %vm1750, %vm1751
        %v1753 = vsel %vm1752, %v1745, %v1749
        %v1754 = vand.u32 2147483647, %v1639
        %vm1755 = vcmp.eq.f32.partialorder %v1754, 8.507059e+37
        %v1756 = vand.u32 %v1639, 2147483648
        %v1757 = vor.u32 1.1754944e-38, %v1756
        %v1758 = vsel %vm1755, %v1757, %v1753
        %v1759 = vmul.f32 %v1615, %v1758
        %1760 = vrot.lane.b32.xlu0 %v1306, 96
        %v1761 = vpop.permute.xlu0 %1760
        %1762 = vrot.lane.b32.xlu0 %v1309, 96
        %v1763 = vpop.permute.xlu0 %1762
        %v1767 = vsel %vm1567, %v1654, 0
        %1769 = vmatpush.msra.mxu0 0.0
        %1770 = vmatpush.msra.mxu0 0.0
        %1771 = vmatpush.msra.mxu0 0.0
        %1772 = vmatpush.msra.mxu0 0.0
        %1773 = vmatpush.msra.mxu0 0.0
        %1774 = vmatpush.msra.mxu0 0.0
        %1775 = vmatpush.msra.mxu0 0.0
        %1776 = vmatpush.msra.mxu0 0.0
        %1777 = vmatpush.msra.mxu0 0.0
        %1778 = vmatpush.msra.mxu0 0.0
        %1779 = vmatpush.msra.mxu0 0.0
        %1780 = vmatpush.msra.mxu0 0.0
        %1781 = vmatpush.msra.mxu0 0.0
        %1782 = vmatpush.msra.mxu0 0.0
        %1783 = vmatpush.msra.mxu0 %v1763
        %1784 = vmatpush.msra.mxu0 %v1761
        %1785 = vmatmul.f32.gmra.mxu0 %v1767
        %v1786 = vpop.f32.mrf.mxu0
        %v1787 = vadd.f32 0.0, %v1786
        %1788 = vdwg.mxu0
        %1789 = vrot.lane.b32.xlu0 %v1306, 88
        %v1790 = vpop.permute.xlu0 %1789
        %1791 = vrot.lane.b32.xlu0 %v1309, 88
        %v1792 = vpop.permute.xlu0 %1791
        %v1796 = vsel %vm1567, %v1669, 0
        %1798 = vmatpush.msra.mxu0 0.0
        %1799 = vmatpush.msra.mxu0 0.0
        %1800 = vmatpush.msra.mxu0 0.0
        %1801 = vmatpush.msra.mxu0 0.0
        %1802 = vmatpush.msra.mxu0 0.0
        %1803 = vmatpush.msra.mxu0 0.0
        %1804 = vmatpush.msra.mxu0 0.0
        %1805 = vmatpush.msra.mxu0 0.0
        %1806 = vmatpush.msra.mxu0 0.0
        %1807 = vmatpush.msra.mxu0 0.0
        %1808 = vmatpush.msra.mxu0 0.0
        %1809 = vmatpush.msra.mxu0 0.0
        %1810 = vmatpush.msra.mxu0 0.0
        %1811 = vmatpush.msra.mxu0 0.0
        %1812 = vmatpush.msra.mxu0 %v1792
        %1813 = vmatpush.msra.mxu0 %v1790
        %1814 = vmatmul.f32.gmra.mxu0 %v1796
        %v1815 = vpop.f32.mrf.mxu0
        %v1816 = vadd.f32 0.0, %v1815
        %1817 = vdwg.mxu0
        %1818 = vrot.lane.b32.xlu0 %v260, 32
        %v1819 = vpop.permute.xlu0 %1818
        %v1822 = vsel %vm337, %v1816, 0
        %1824 = vmatpush.msra.mxu0 0.0
        %1825 = vmatpush.msra.mxu0 0.0
        %1826 = vmatpush.msra.mxu0 0.0
        %1827 = vmatpush.msra.mxu0 0.0
        %1828 = vmatpush.msra.mxu0 0.0
        %1829 = vmatpush.msra.mxu0 0.0
        %1830 = vmatpush.msra.mxu0 0.0
        %1831 = vmatpush.msra.mxu0 0.0
        %1832 = vmatpush.msra.mxu0 0.0
        %1833 = vmatpush.msra.mxu0 0.0
        %1834 = vmatpush.msra.mxu0 0.0
        %1835 = vmatpush.msra.mxu0 0.0
        %1836 = vmatpush.msra.mxu0 0.0
        %1837 = vmatpush.msra.mxu0 0.0
        %1838 = vmatpush.msra.mxu0 0.0
        %1839 = vmatpush.msra.mxu0 %v1819
        %1840 = vmatmul.f32.gmra.mxu0 %v1822
        %v1841 = vpop.f32.mrf.mxu0
        %v1842 = vadd.f32 0.0, %v1841
        %1843 = vdwg.mxu0
        %1844 = vrot.lane.b32.xlu0 %v257, 32
        %v1845 = vpop.permute.xlu0 %1844
        %v1848 = vsel %vm337, %v1787, 0
        %1850 = vmatpush.msra.mxu0 0.0
        %1851 = vmatpush.msra.mxu0 0.0
        %1852 = vmatpush.msra.mxu0 0.0
        %1853 = vmatpush.msra.mxu0 0.0
        %1854 = vmatpush.msra.mxu0 0.0
        %1855 = vmatpush.msra.mxu0 0.0
        %1856 = vmatpush.msra.mxu0 0.0
        %1857 = vmatpush.msra.mxu0 0.0
        %1858 = vmatpush.msra.mxu0 0.0
        %1859 = vmatpush.msra.mxu0 0.0
        %1860 = vmatpush.msra.mxu0 0.0
        %1861 = vmatpush.msra.mxu0 0.0
        %1862 = vmatpush.msra.mxu0 0.0
        %1863 = vmatpush.msra.mxu0 0.0
        %1864 = vmatpush.msra.mxu0 0.0
        %1865 = vmatpush.msra.mxu0 %v1845
        %1866 = vmatmul.f32.gmra.mxu0 %v1848
        %v1867 = vpop.f32.mrf.mxu0
        %v1868 = vadd.f32 %v1842, %v1867
        %1869 = vdwg.mxu0
        %1870 = vrot.lane.b32.xlu0 %v1306, 80
        %v1871 = vpop.permute.xlu0 %1870
        %1872 = vrot.lane.b32.xlu0 %v1309, 80
        %v1873 = vpop.permute.xlu0 %1872
        %v1877 = vsel %vm1567, %v1684, 0
        %1879 = vmatpush.msra.mxu0 0.0
        %1880 = vmatpush.msra.mxu0 0.0
        %1881 = vmatpush.msra.mxu0 0.0
        %1882 = vmatpush.msra.mxu0 0.0
        %1883 = vmatpush.msra.mxu0 0.0
        %1884 = vmatpush.msra.mxu0 0.0
        %1885 = vmatpush.msra.mxu0 0.0
        %1886 = vmatpush.msra.mxu0 0.0
        %1887 = vmatpush.msra.mxu0 0.0
        %1888 = vmatpush.msra.mxu0 0.0
        %1889 = vmatpush.msra.mxu0 0.0
        %1890 = vmatpush.msra.mxu0 0.0
        %1891 = vmatpush.msra.mxu0 0.0
        %1892 = vmatpush.msra.mxu0 0.0
        %1893 = vmatpush.msra.mxu0 %v1873
        %1894 = vmatpush.msra.mxu0 %v1871
        %1895 = vmatmul.f32.gmra.mxu0 %v1877
        %v1896 = vpop.f32.mrf.mxu0
        %v1897 = vadd.f32 0.0, %v1896
        %1898 = vdwg.mxu0
        %1899 = vrot.lane.b32.xlu0 %v263, 32
        %v1900 = vpop.permute.xlu0 %1899
        %v1903 = vsel %vm337, %v1897, 0
        %1905 = vmatpush.msra.mxu0 0.0
        %1906 = vmatpush.msra.mxu0 0.0
        %1907 = vmatpush.msra.mxu0 0.0
        %1908 = vmatpush.msra.mxu0 0.0
        %1909 = vmatpush.msra.mxu0 0.0
        %1910 = vmatpush.msra.mxu0 0.0
        %1911 = vmatpush.msra.mxu0 0.0
        %1912 = vmatpush.msra.mxu0 0.0
        %1913 = vmatpush.msra.mxu0 0.0
        %1914 = vmatpush.msra.mxu0 0.0
        %1915 = vmatpush.msra.mxu0 0.0
        %1916 = vmatpush.msra.mxu0 0.0
        %1917 = vmatpush.msra.mxu0 0.0
        %1918 = vmatpush.msra.mxu0 0.0
        %1919 = vmatpush.msra.mxu0 0.0
        %1920 = vmatpush.msra.mxu0 %v1900
        %1921 = vmatmul.f32.gmra.mxu0 %v1903
        %v1922 = vpop.f32.mrf.mxu0
        %v1923 = vadd.f32 0.0, %v1922
        %1924 = vdwg.mxu0
        %v1925 = vadd.f32 %v1868, %v1923
        %1926 = vrot.lane.b32.xlu0 %v1306, 72
        %v1927 = vpop.permute.xlu0 %1926
        %1928 = vrot.lane.b32.xlu0 %v1309, 72
        %v1929 = vpop.permute.xlu0 %1928
        %v1933 = vsel %vm1567, %v1699, 0
        %1935 = vmatpush.msra.mxu0 0.0
        %1936 = vmatpush.msra.mxu0 0.0
        %1937 = vmatpush.msra.mxu0 0.0
        %1938 = vmatpush.msra.mxu0 0.0
        %1939 = vmatpush.msra.mxu0 0.0
        %1940 = vmatpush.msra.mxu0 0.0
        %1941 = vmatpush.msra.mxu0 0.0
        %1942 = vmatpush.msra.mxu0 0.0
        %1943 = vmatpush.msra.mxu0 0.0
        %1944 = vmatpush.msra.mxu0 0.0
        %1945 = vmatpush.msra.mxu0 0.0
        %1946 = vmatpush.msra.mxu0 0.0
        %1947 = vmatpush.msra.mxu0 0.0
        %1948 = vmatpush.msra.mxu0 0.0
        %1949 = vmatpush.msra.mxu0 %v1929
        %1950 = vmatpush.msra.mxu0 %v1927
        %1951 = vmatmul.f32.gmra.mxu0 %v1933
        %v1952 = vpop.f32.mrf.mxu0
        %v1953 = vadd.f32 0.0, %v1952
        %1954 = vdwg.mxu0
        %1955 = vrot.lane.b32.xlu0 %v266, 32
        %v1956 = vpop.permute.xlu0 %1955
        %v1959 = vsel %vm337, %v1953, 0
        %1961 = vmatpush.msra.mxu0 0.0
        %1962 = vmatpush.msra.mxu0 0.0
        %1963 = vmatpush.msra.mxu0 0.0
        %1964 = vmatpush.msra.mxu0 0.0
        %1965 = vmatpush.msra.mxu0 0.0
        %1966 = vmatpush.msra.mxu0 0.0
        %1967 = vmatpush.msra.mxu0 0.0
        %1968 = vmatpush.msra.mxu0 0.0
        %1969 = vmatpush.msra.mxu0 0.0
        %1970 = vmatpush.msra.mxu0 0.0
        %1971 = vmatpush.msra.mxu0 0.0
        %1972 = vmatpush.msra.mxu0 0.0
        %1973 = vmatpush.msra.mxu0 0.0
        %1974 = vmatpush.msra.mxu0 0.0
        %1975 = vmatpush.msra.mxu0 0.0
        %1976 = vmatpush.msra.mxu0 %v1956
        %1977 = vmatmul.f32.gmra.mxu0 %v1959
        %v1978 = vpop.f32.mrf.mxu0
        %v1979 = vadd.f32 0.0, %v1978
        %1980 = vdwg.mxu0
        %v1981 = vadd.f32 %v1925, %v1979
        %1982 = vrot.lane.b32.xlu0 %v1312, 96
        %v1983 = vpop.permute.xlu0 %1982
        %1984 = vrot.lane.b32.xlu0 %v1315, 96
        %v1985 = vpop.permute.xlu0 %1984
        %v1989 = vsel %vm1567, %v1714, 0
        %1991 = vmatpush.msra.mxu0 0.0
        %1992 = vmatpush.msra.mxu0 0.0
        %1993 = vmatpush.msra.mxu0 0.0
        %1994 = vmatpush.msra.mxu0 0.0
        %1995 = vmatpush.msra.mxu0 0.0
        %1996 = vmatpush.msra.mxu0 0.0
        %1997 = vmatpush.msra.mxu0 0.0
        %1998 = vmatpush.msra.mxu0 0.0
        %1999 = vmatpush.msra.mxu0 0.0
        %2000 = vmatpush.msra.mxu0 0.0
        %2001 = vmatpush.msra.mxu0 0.0
        %2002 = vmatpush.msra.mxu0 0.0
        %2003 = vmatpush.msra.mxu0 0.0
        %2004 = vmatpush.msra.mxu0 0.0
        %2005 = vmatpush.msra.mxu0 %v1985
        %2006 = vmatpush.msra.mxu0 %v1983
        %2007 = vmatmul.f32.gmra.mxu0 %v1989
        %v2008 = vpop.f32.mrf.mxu0
        %v2009 = vadd.f32 0.0, %v2008
        %2010 = vdwg.mxu0
        %2011 = vrot.lane.b32.xlu0 %v1312, 88
        %v2012 = vpop.permute.xlu0 %2011
        %2013 = vrot.lane.b32.xlu0 %v1315, 88
        %v2014 = vpop.permute.xlu0 %2013
        %v2018 = vsel %vm1567, %v1729, 0
        %2020 = vmatpush.msra.mxu0 0.0
        %2021 = vmatpush.msra.mxu0 0.0
        %2022 = vmatpush.msra.mxu0 0.0
        %2023 = vmatpush.msra.mxu0 0.0
        %2024 = vmatpush.msra.mxu0 0.0
        %2025 = vmatpush.msra.mxu0 0.0
        %2026 = vmatpush.msra.mxu0 0.0
        %2027 = vmatpush.msra.mxu0 0.0
        %2028 = vmatpush.msra.mxu0 0.0
        %2029 = vmatpush.msra.mxu0 0.0
        %2030 = vmatpush.msra.mxu0 0.0
        %2031 = vmatpush.msra.mxu0 0.0
        %2032 = vmatpush.msra.mxu0 0.0
        %2033 = vmatpush.msra.mxu0 0.0
        %2034 = vmatpush.msra.mxu0 %v2014
        %2035 = vmatpush.msra.mxu0 %v2012
        %2036 = vmatmul.f32.gmra.mxu0 %v2018
        %v2037 = vpop.f32.mrf.mxu0
        %v2038 = vadd.f32 0.0, %v2037
        %2039 = vdwg.mxu0
        %v2041 = vsel %vm337, %v2038, 0
        %2043 = vmatpush.msra.mxu0 0.0
        %2044 = vmatpush.msra.mxu0 0.0
        %2045 = vmatpush.msra.mxu0 0.0
        %2046 = vmatpush.msra.mxu0 0.0
        %2047 = vmatpush.msra.mxu0 0.0
        %2048 = vmatpush.msra.mxu0 0.0
        %2049 = vmatpush.msra.mxu0 0.0
        %2050 = vmatpush.msra.mxu0 0.0
        %2051 = vmatpush.msra.mxu0 0.0
        %2052 = vmatpush.msra.mxu0 0.0
        %2053 = vmatpush.msra.mxu0 0.0
        %2054 = vmatpush.msra.mxu0 0.0
        %2055 = vmatpush.msra.mxu0 0.0
        %2056 = vmatpush.msra.mxu0 0.0
        %2057 = vmatpush.msra.mxu0 0.0
        %2058 = vmatpush.msra.mxu0 %v1819
        %2059 = vmatmul.f32.gmra.mxu0 %v2041
        %v2060 = vpop.f32.mrf.mxu0
        %v2061 = vadd.f32 0.0, %v2060
        %2062 = vdwg.mxu0
        %v2064 = vsel %vm337, %v2009, 0
        %2066 = vmatpush.msra.mxu0 0.0
        %2067 = vmatpush.msra.mxu0 0.0
        %2068 = vmatpush.msra.mxu0 0.0
        %2069 = vmatpush.msra.mxu0 0.0
        %2070 = vmatpush.msra.mxu0 0.0
        %2071 = vmatpush.msra.mxu0 0.0
        %2072 = vmatpush.msra.mxu0 0.0
        %2073 = vmatpush.msra.mxu0 0.0
        %2074 = vmatpush.msra.mxu0 0.0
        %2075 = vmatpush.msra.mxu0 0.0
        %2076 = vmatpush.msra.mxu0 0.0
        %2077 = vmatpush.msra.mxu0 0.0
        %2078 = vmatpush.msra.mxu0 0.0
        %2079 = vmatpush.msra.mxu0 0.0
        %2080 = vmatpush.msra.mxu0 0.0
        %2081 = vmatpush.msra.mxu0 %v1845
        %2082 = vmatmul.f32.gmra.mxu0 %v2064
        %v2083 = vpop.f32.mrf.mxu0
        %v2084 = vadd.f32 %v2061, %v2083
        %2085 = vdwg.mxu0
        %2086 = vrot.lane.b32.xlu0 %v1312, 80
        %v2087 = vpop.permute.xlu0 %2086
        %2088 = vrot.lane.b32.xlu0 %v1315, 80
        %v2089 = vpop.permute.xlu0 %2088
        %v2093 = vsel %vm1567, %v1744, 0
        %2095 = vmatpush.msra.mxu0 0.0
        %2096 = vmatpush.msra.mxu0 0.0
        %2097 = vmatpush.msra.mxu0 0.0
        %2098 = vmatpush.msra.mxu0 0.0
        %2099 = vmatpush.msra.mxu0 0.0
        %2100 = vmatpush.msra.mxu0 0.0
        %2101 = vmatpush.msra.mxu0 0.0
        %2102 = vmatpush.msra.mxu0 0.0
        %2103 = vmatpush.msra.mxu0 0.0
        %2104 = vmatpush.msra.mxu0 0.0
        %2105 = vmatpush.msra.mxu0 0.0
        %2106 = vmatpush.msra.mxu0 0.0
        %2107 = vmatpush.msra.mxu0 0.0
        %2108 = vmatpush.msra.mxu0 0.0
        %2109 = vmatpush.msra.mxu0 %v2089
        %2110 = vmatpush.msra.mxu0 %v2087
        %2111 = vmatmul.f32.gmra.mxu0 %v2093
        %v2112 = vpop.f32.mrf.mxu0
        %v2113 = vadd.f32 0.0, %v2112
        %2114 = vdwg.mxu0
        %v2116 = vsel %vm337, %v2113, 0
        %2118 = vmatpush.msra.mxu0 0.0
        %2119 = vmatpush.msra.mxu0 0.0
        %2120 = vmatpush.msra.mxu0 0.0
        %2121 = vmatpush.msra.mxu0 0.0
        %2122 = vmatpush.msra.mxu0 0.0
        %2123 = vmatpush.msra.mxu0 0.0
        %2124 = vmatpush.msra.mxu0 0.0
        %2125 = vmatpush.msra.mxu0 0.0
        %2126 = vmatpush.msra.mxu0 0.0
        %2127 = vmatpush.msra.mxu0 0.0
        %2128 = vmatpush.msra.mxu0 0.0
        %2129 = vmatpush.msra.mxu0 0.0
        %2130 = vmatpush.msra.mxu0 0.0
        %2131 = vmatpush.msra.mxu0 0.0
        %2132 = vmatpush.msra.mxu0 0.0
        %2133 = vmatpush.msra.mxu0 %v1900
        %2134 = vmatmul.f32.gmra.mxu0 %v2116
        %v2135 = vpop.f32.mrf.mxu0
        %v2136 = vadd.f32 0.0, %v2135
        %2137 = vdwg.mxu0
        %v2138 = vadd.f32 %v2084, %v2136
        %2139 = vrot.lane.b32.xlu0 %v1312, 72
        %v2140 = vpop.permute.xlu0 %2139
        %2141 = vrot.lane.b32.xlu0 %v1315, 72
        %v2142 = vpop.permute.xlu0 %2141
        %v2146 = vsel %vm1567, %v1759, 0
        %2148 = vmatpush.msra.mxu0 0.0
        %2149 = vmatpush.msra.mxu0 0.0
        %2150 = vmatpush.msra.mxu0 0.0
        %2151 = vmatpush.msra.mxu0 0.0
        %2152 = vmatpush.msra.mxu0 0.0
        %2153 = vmatpush.msra.mxu0 0.0
        %2154 = vmatpush.msra.mxu0 0.0
        %2155 = vmatpush.msra.mxu0 0.0
        %2156 = vmatpush.msra.mxu0 0.0
        %2157 = vmatpush.msra.mxu0 0.0
        %2158 = vmatpush.msra.mxu0 0.0
        %2159 = vmatpush.msra.mxu0 0.0
        %2160 = vmatpush.msra.mxu0 0.0
        %2161 = vmatpush.msra.mxu0 0.0
        %2162 = vmatpush.msra.mxu0 %v2142
        %2163 = vmatpush.msra.mxu0 %v2140
        %2164 = vmatmul.f32.gmra.mxu0 %v2146
        %v2165 = vpop.f32.mrf.mxu0
        %v2166 = vadd.f32 0.0, %v2165
        %2167 = vdwg.mxu0
        %v2169 = vsel %vm337, %v2166, 0
        %2171 = vmatpush.msra.mxu0 0.0
        %2172 = vmatpush.msra.mxu0 0.0
        %2173 = vmatpush.msra.mxu0 0.0
        %2174 = vmatpush.msra.mxu0 0.0
        %2175 = vmatpush.msra.mxu0 0.0
        %2176 = vmatpush.msra.mxu0 0.0
        %2177 = vmatpush.msra.mxu0 0.0
        %2178 = vmatpush.msra.mxu0 0.0
        %2179 = vmatpush.msra.mxu0 0.0
        %2180 = vmatpush.msra.mxu0 0.0
        %2181 = vmatpush.msra.mxu0 0.0
        %2182 = vmatpush.msra.mxu0 0.0
        %2183 = vmatpush.msra.mxu0 0.0
        %2184 = vmatpush.msra.mxu0 0.0
        %2185 = vmatpush.msra.mxu0 0.0
        %2186 = vmatpush.msra.mxu0 %v1956
        %2187 = vmatmul.f32.gmra.mxu0 %v2169
        %v2188 = vpop.f32.mrf.mxu0
        %v2189 = vadd.f32 0.0, %v2188
        %2190 = vdwg.mxu0
        %v2191 = vadd.f32 %v2138, %v2189
        %2192 = vrot.lane.b32.xlu0 %v1161, 64
        %v2193 = vpop.permute.xlu0 %2192
        %v2195 = vadd.f32 %v1981, %v2193
        %v2196 = vadd.f32 %v2191, %v2193
        %v2197 = vadd.f32 %v1224, %v2195
        %v2198 = vadd.f32 %v1225, %v2196
        %v2199 = vsel %vm304, %v2197, 0.0
        %2200 = vadd.xlane.f32.xlu0 %v2199
        %v2201 = vpop.xlane.xlu0 %2200
        %v2202 = vsel %vm304, %v2198, 0.0
        %2203 = vadd.xlane.f32.xlu0 %v2202
        %v2204 = vpop.xlane.xlu0 %2203
        %v2205 = vmul.f32 %v2201, %v1178
        %v2206 = vmul.f32 %v2204, %v1178
        %v2207 = vsub.f32 %v2197, %v2205
        %v2208 = vsub.f32 %v2198, %v2206
        %v2209 = vmul.f32 %v2207, %v2207
        %v2210 = vmul.f32 %v2208, %v2208
        %v2211 = vsel %vm304, %v2209, 0.0
        %2212 = vadd.xlane.f32.xlu0 %v2211
        %v2213 = vpop.xlane.xlu0 %2212
        %v2214 = vsel %vm304, %v2210, 0.0
        %2215 = vadd.xlane.f32.xlu0 %v2214
        %v2216 = vpop.xlane.xlu0 %2215
        %v2217 = vmul.f32 %v2213, %v1178
        %v2218 = vmul.f32 %v2216, %v1178
        %v2219 = vadd.f32 %v2217, 1e-05
        %v2220 = vadd.f32 %v2218, 1e-05
        %v2221 = vrsqrt.pop %v2219
        %v2222 = vmul.f32 %v2221, %v2219
        %v2223 = vmul.f32 %v2222, %v2221
        %v2224 = vmul.f32 0.5, %v2223
        %v2225 = vsub.f32 1.5, %v2224
        %v2226 = vmul.f32 %v2221, %v2225
        %vm2227 = vweird.f32 %v2219
        %vm2228 = vweird.f32 %v2221
        %vm2229 = vmor %vm2227, %vm2228
        %v2230 = vsel %vm2229, %v2221, %v2226
        %v2231 = vrsqrt.pop %v2220
        %v2232 = vmul.f32 %v2231, %v2220
        %v2233 = vmul.f32 %v2232, %v2231
        %v2234 = vmul.f32 0.5, %v2233
        %v2235 = vsub.f32 1.5, %v2234
        %v2236 = vmul.f32 %v2231, %v2235
        %vm2237 = vweird.f32 %v2220
        %vm2238 = vweird.f32 %v2231
        %vm2239 = vmor %vm2237, %vm2238
        %v2240 = vsel %vm2239, %v2231, %v2236
        %v2241 = vmul.f32 %v2207, %v2230
        %v2242 = vmul.f32 %v2208, %v2240
        %2243 = vrot.lane.b32.xlu0 %v1217, 64
        %v2244 = vpop.permute.xlu0 %2243
        %v2246 = vmul.f32 %v2241, %v2244
        %v2247 = vmul.f32 %v2242, %v2244
        %2248 = vrot.lane.b32.xlu0 %v1217, 32
        %v2249 = vpop.permute.xlu0 %2248
        %v2251 = vadd.f32 %v2246, %v2249
        %v2252 = vadd.f32 %v2247, %v2249
        %v2253 = vperm.slane %v288, 3
        %v2255 = vsel %vm304, %v2251, 0
        %v2258 = vsel %vm304, %v2252, 0
        %2260 = vmatpush.msra.mxu0 0.0
        %2261 = vmatpush.msra.mxu0 0.0
        %2262 = vmatpush.msra.mxu0 0.0
        %2263 = vmatpush.msra.mxu0 0.0
        %2264 = vmatpush.msra.mxu0 0.0
        %2265 = vmatpush.msra.mxu0 0.0
        %2266 = vmatpush.msra.mxu0 0.0
        %2267 = vmatpush.msra.mxu0 0.0
        %2268 = vmatpush.msra.mxu0 0.0
        %2269 = vmatpush.msra.mxu0 0.0
        %2270 = vmatpush.msra.mxu0 0.0
        %2271 = vmatpush.msra.mxu0 0.0
        %2272 = vmatpush.msra.mxu0 %v267
        %2273 = vmatpush.msra.mxu0 %v264
        %2274 = vmatpush.msra.mxu0 %v261
        %2275 = vmatpush.msra.mxu0 %v258
        %2276 = vmatmul.f32.gmra.mxu0 %v2255
        %v2277 = vpop.f32.mrf.mxu0
        %v2278 = vadd.f32 %v2253, %v2277
        %2279 = vmatmul.f32.gmra.mxu0 %v2258
        %v2280 = vpop.f32.mrf.mxu0
        %v2281 = vadd.f32 %v2253, %v2280
        %2282 = vdwg.mxu0
        %v2283 = vmax.f32 %v2278, 0.0
        %v2284 = vmax.f32 %v2281, 0.0
        %2285 = vrot.lane.b32.xlu0 %v1161, 32
        %v2286 = vpop.permute.xlu0 %2285
        %2288 = vmatpush.msra.mxu0 %v285
        %2289 = vmatpush.msra.mxu0 %v284
        %2290 = vmatpush.msra.mxu0 %v283
        %2291 = vmatpush.msra.mxu0 %v282
        %2292 = vmatpush.msra.mxu0 %v281
        %2293 = vmatpush.msra.mxu0 %v280
        %2294 = vmatpush.msra.mxu0 %v279
        %2295 = vmatpush.msra.mxu0 %v278
        %2296 = vmatpush.msra.mxu0 %v277
        %2297 = vmatpush.msra.mxu0 %v276
        %2298 = vmatpush.msra.mxu0 %v275
        %2299 = vmatpush.msra.mxu0 %v274
        %2300 = vmatpush.msra.mxu0 %v273
        %2301 = vmatpush.msra.mxu0 %v272
        %2302 = vmatpush.msra.mxu0 %v271
        %2303 = vmatpush.msra.mxu0 %v270
        %2304 = vmatmul.f32.gmra.mxu0 %v2283
        %v2305 = vpop.f32.mrf.mxu0
        %v2306 = vadd.f32 %v2286, %v2305
        %2307 = vmatmul.f32.gmra.mxu0 %v2284
        %v2308 = vpop.f32.mrf.mxu0
        %v2309 = vadd.f32 %v2286, %v2308
        %2310 = vdwg.mxu0
        %v2311 = vadd.f32 %v2251, %v2306
        %v2312 = vadd.f32 %v2252, %v2309
        %v2313 = vsel %vm304, %v2311, 0.0
        %2314 = vadd.xlane.f32.xlu0 %v2313
        %v2315 = vpop.xlane.xlu0 %2314
        %v2316 = vsel %vm304, %v2312, 0.0
        %2317 = vadd.xlane.f32.xlu0 %v2316
        %v2318 = vpop.xlane.xlu0 %2317
        %v2319 = vmul.f32 %v2315, %v1178
        %v2320 = vmul.f32 %v2318, %v1178
        %v2321 = vsub.f32 %v2311, %v2319
        %v2322 = vsub.f32 %v2312, %v2320
        %v2323 = vmul.f32 %v2321, %v2321
        %v2324 = vmul.f32 %v2322, %v2322
        %v2325 = vsel %vm304, %v2323, 0.0
        %2326 = vadd.xlane.f32.xlu0 %v2325
        %v2327 = vpop.xlane.xlu0 %2326
        %v2328 = vsel %vm304, %v2324, 0.0
        %2329 = vadd.xlane.f32.xlu0 %v2328
        %v2330 = vpop.xlane.xlu0 %2329
        %v2331 = vmul.f32 %v2327, %v1178
        %v2332 = vmul.f32 %v2330, %v1178
        %v2333 = vadd.f32 %v2331, 1e-05
        %v2334 = vadd.f32 %v2332, 1e-05
        %v2335 = vrsqrt.pop %v2333
        %v2336 = vmul.f32 %v2335, %v2333
        %v2337 = vmul.f32 %v2336, %v2335
        %v2338 = vmul.f32 0.5, %v2337
        %v2339 = vsub.f32 1.5, %v2338
        %v2340 = vmul.f32 %v2335, %v2339
        %vm2341 = vweird.f32 %v2333
        %vm2342 = vweird.f32 %v2335
        %vm2343 = vmor %vm2341, %vm2342
        %v2344 = vsel %vm2343, %v2335, %v2340
        %v2345 = vrsqrt.pop %v2334
        %v2346 = vmul.f32 %v2345, %v2334
        %v2347 = vmul.f32 %v2346, %v2345
        %v2348 = vmul.f32 0.5, %v2347
        %v2349 = vsub.f32 1.5, %v2348
        %v2350 = vmul.f32 %v2345, %v2349
        %vm2351 = vweird.f32 %v2334
        %vm2352 = vweird.f32 %v2345
        %vm2353 = vmor %vm2351, %vm2352
        %v2354 = vsel %vm2353, %v2345, %v2350
        %v2355 = vmul.f32 %v2321, %v2344
        %v2356 = vmul.f32 %v2322, %v2354
        %v2357 = vperm.slane %v288, 5
        %v2358 = vmul.f32 %v2355, %v2357
        %v2359 = vmul.f32 %v2356, %v2357
        %2361 = vrot.lane.b32.xlu0 %v2357, 96
        %v2362 = vpop.permute.xlu0 %2361
        %v2364 = vadd.f32 %v2358, %v2362
        %v2365 = vadd.f32 %v2359, %v2362
        %2366 = vst.msk [vmem:[#allocation2] sm:$0xff] %vm304, %v2364
        %2367 = vst.msk [vmem:[#allocation2 + $0x8] sm:$0xff] %vm304, %v2365
        %p2368 = scmp.eq.s32.totalorder %s22, 1
        // Predicated region
        $region41: #{tpu_custom_call.1} parent=39 // pred_check
          %p2369 = pneg %p2368
        $region42: #{tpu_custom_call.1} parent=39 // pred_check_branch
          %2371 = sbr.rel (%p2369) target = $region44
        $region43: #{tpu_custom_call.1} parent=39 // pred_region
          %2372 = vst.msk [vmem:[#allocation3] sm:$0xff] %vm304, %v2364
          %2373 = vst.msk [vmem:[#allocation3 + $0x8] sm:$0xff] %vm304, %v2365
        $region44: #{tpu_custom_call.1} parent=39 // pred_fallthru
          _
        // Predicated region
        $region45: #{tpu_custom_call.1} parent=39 // pred_check
          %p2374 = pneg %p162
        $region46: #{tpu_custom_call.1} parent=39 // pred_check_branch
          %2376 = sbr.rel (%p2374) target = $region48
        $region47: #{tpu_custom_call.1} parent=39 // pred_region
          %s2377 = smul.u32 2, %s21
          %2379 = vsyncadd [#allocation4], 0
          %s2380 = smul.addr %s2377, 8
          %s2381 = scalar_lea.hbm %s5, %s2380
          %s2382 = sshll.u32 [#allocation3], 4
          %s2383 = int_to_ptr.vmem [resolvable:$true] %s2382
          %s2384 = sshll.u32 %s2381, 4
          %s2385 = int_to_ptr.hbm [resolvable:$true] %s2384
          %2390 = dma.vmem_to_hbm [thread:$0]  %s2383, 256, %s2385, [#allocation4], 128, 128, 8
        $region48: #{tpu_custom_call.1} parent=39 // pred_fallthru
          _
        // Predicated region
        $region49: #{tpu_custom_call.1} parent=39 // pred_check
          %p2391 = pneg %p162
        $region50: #{tpu_custom_call.1} parent=39 // pred_check_branch
          %2393 = sbr.rel (%p2391) target = $region52
        $region51: #{tpu_custom_call.1} parent=39 // pred_region
          %2395 = dma.done [#allocation4], 256
        $region52: #{tpu_custom_call.1} parent=39 // pred_fallthru
          _
      $region40: #{tpu_custom_call.1} parent=5 // pred_fallthru
        _
      %p2396 = scmp.le.s32.totalorder 2, %s12
      // Predicated region
      $region53: #{tpu_custom_call.1} parent=5 // pred_check
        %p2397 = pneg %p2396
      $region54: #{tpu_custom_call.1} parent=5 // pred_check_branch
        %2399 = sbr.rel (%p2397) target = $region56
      $region55: #{tpu_custom_call.1} parent=5 // pred_region
        %s2400 = ssub.s32 %s12, 2
      $region56: #{tpu_custom_call.1} parent=5 // pred_fallthru
        _
    $region6: #{tpu_custom_call.1} parent=1 // loop_footer
      %s16 = sadd.s32 1, %s12
    $region7: #{tpu_custom_call.1} parent=1 // loop_footer_branch
      %11 = sbr.rel target = $region3
    $region8: #{tpu_custom_call.1} parent=1 // loop_exit
      _
    %2401 = vsyncpa [#allocation4], 1
    %s2402 = scalar_lea.sflag [#allocation4], 1
    %2403 = vsyncpa %s2402, 1

</llo_original>
